<compile_context>
chip_gen: v7x
topology: tpu7x:2x2x1
jax: 0.10.0
libtpu: 0.0.40
codegen_flags: <defaults>
</compile_context>

<pallas_src>
import functools

import jax
import jax.numpy as jnp
from jax.experimental import pallas as pl
from jax.experimental.pallas import tpu as pltpu

TM_TARGET = 1024                 # per-tile row target (v5e/v6e friendly, v7x safe)
VMEM_LIMIT = 48 * 1024 * 1024    # < 64 MiB physical on v7x, ample headroom elsewhere
EPS = 1e-5
SLOPE = 0.2


def _round_up(x, m):
    return (x + m - 1) // m * m


def _choose_m_tile(m, target=TM_TARGET):
    """Return (tile_m, padded_m): tm % 8 == 0, padded_m % tm == 0, minimal padding."""
    mp8 = _round_up(max(m, 8), 8)
    if mp8 <= target:
        return mp8, mp8                       # single tile -> fused BN path
    ntiles = -(-m // target)
    tm = _round_up(-(-mp8 // ntiles), 8)
    return tm, tm * ntiles


# --------------------------------------------------------------------------- #
# Pallas kernels
# --------------------------------------------------------------------------- #
def _kernel_matmul_bias_act(p_ref, w_ref, b_ref, o_ref, *, slope):
    """y = patches @ W + b, optional LeakyReLU. bf16 in, f32 acc, out dtype of o_ref."""
    y = jnp.dot(p_ref[...], w_ref[...], preferred_element_type=jnp.float32)
    y = y + b_ref[...]
    if slope is not None:
        y = jnp.maximum(y, slope * y)
    o_ref[...] = y.astype(o_ref.dtype)


def _kernel_conv_bn_lrelu_fused(p_ref, w_ref, g_ref, b_ref, o_ref, *, inv_m, eps, slope):
    """Single-tile fused: conv matmul + batch-stat BN + LeakyReLU (one HBM writeback).

    Zero-padded patch rows / weight columns contribute nothing to the sums;
    the divisor is the real (unpadded) M via `inv_m`.
    """
    y = jnp.dot(p_ref[...], w_ref[...], preferred_element_type=jnp.float32)
    mean = jnp.sum(y, axis=0, keepdims=True) * inv_m
    var = jnp.maximum(jnp.sum(y * y, axis=0, keepdims=True) * inv_m - mean * mean, 0.0)
    scale = jax.lax.rsqrt(var + eps) * g_ref[...]
    yn = (y - mean) * scale + b_ref[...]
    o_ref[...] = jnp.maximum(yn, slope * yn).astype(o_ref.dtype)


def _kernel_matmul_stats(p_ref, w_ref, y_ref, s_ref):
    """Two-pass BN, pass A: conv matmul (bf16 out) + per-tile column sum / sumsq.

    Stats are a per-tile (8, Coutp) output block (rows 0/1 used), so the M grid
    axis stays "parallel" (megacore-friendly on v7x); the tiny cross-tile
    reduction happens in XLA.
    """
    y = jnp.dot(p_ref[...], w_ref[...], preferred_element_type=jnp.float32)
    y_ref[...] = y.astype(y_ref.dtype)
    col_sum = jnp.sum(y, axis=0, keepdims=True)
    col_sq = jnp.sum(y * y, axis=0, keepdims=True)
    s_ref[...] = jnp.concatenate(
        [col_sum, col_sq, jnp.zeros((6, col_sum.shape[1]), jnp.float32)], axis=0
    )


def _kernel_affine_lrelu(y_ref, sc_ref, sh_ref, o_ref, *, slope):
    """Two-pass BN, pass B: y * scale + shift, LeakyReLU. bf16 in/out."""
    y = y_ref[...].astype(jnp.float32) * sc_ref[...] + sh_ref[...]
    o_ref[...] = jnp.maximum(y, slope * y).astype(o_ref.dtype)


# --------------------------------------------------------------------------- #
# pallas_call wrappers
# --------------------------------------------------------------------------- #
def _cost_matmul(mp, k, coutp, extra_flops=0, transcendentals=0):
    return pl.CostEstimate(
        flops=int(2 * mp * k * coutp + extra_flops),
        transcendentals=int(transcendentals),
        bytes_accessed=int(mp * k * 2 + k * coutp * 2 + mp * coutp * 2),
    )


def _matmul_bias_act(patches, w_mat, bias, slope, tm, out_dtype):
    mp, k = patches.shape
    coutp = w_mat.shape[1]
    kern = functools.partial(_kernel_matmul_bias_act, slope=slope)
    return pl.pallas_call(
        kern,
        out_shape=jax.ShapeDtypeStruct((mp, coutp), out_dtype),
        grid=(mp // tm,),
        in_specs=[
            pl.BlockSpec((tm, k), lambda i: (i, 0)),
            pl.BlockSpec((k, coutp), lambda i: (0, 0)),
            pl.BlockSpec((1, coutp), lambda i: (0, 0)),
        ],
        out_specs=pl.BlockSpec((tm, coutp), lambda i: (i, 0)),
        compiler_params=pltpu.CompilerParams(
            dimension_semantics=("parallel",), vmem_limit_bytes=VMEM_LIMIT),
        cost_estimate=_cost_matmul(mp, k, coutp, extra_flops=3 * mp * coutp),
    )(patches, w_mat, bias)


def _conv_bn_lrelu_fused(patches, w_mat, gamma, beta, real_m):
    mp, k = patches.shape
    coutp = w_mat.shape[1]
    kern = functools.partial(
        _kernel_conv_bn_lrelu_fused, inv_m=1.0 / float(real_m), eps=EPS, slope=SLOPE)
    return pl.pallas_call(
        kern,
        out_shape=jax.ShapeDtypeStruct((mp, coutp), jnp.bfloat16),
        grid=(1,),
        in_specs=[
            pl.BlockSpec((mp, k), lambda i: (0, 0)),
            pl.BlockSpec((k, coutp), lambda i: (0, 0)),
            pl.BlockSpec((1, coutp), lambda i: (0, 0)),
            pl.BlockSpec((1, coutp), lambda i: (0, 0)),
        ],
        out_specs=pl.BlockSpec((mp, coutp), lambda i: (0, 0)),
        compiler_params=pltpu.CompilerParams(vmem_limit_bytes=VMEM_LIMIT),
        cost_estimate=_cost_matmul(
            mp, k, coutp, extra_flops=10 * mp * coutp, transcendentals=coutp),
    )(patches, w_mat, gamma, beta)


def _matmul_with_stats(patches, w_mat, tm):
    mp, k = patches.shape
    coutp = w_mat.shape[1]
    ntiles = mp // tm
    return pl.pallas_call(
        _kernel_matmul_stats,
        out_shape=(
            jax.ShapeDtypeStruct((mp, coutp), jnp.bfloat16),
            jax.ShapeDtypeStruct((ntiles * 8, coutp), jnp.float32),
        ),
        grid=(ntiles,),
        in_specs=[
            pl.BlockSpec((tm, k), lambda i: (i, 0)),
            pl.BlockSpec((k, coutp), lambda i: (0, 0)),
        ],
        out_specs=(
            pl.BlockSpec((tm, coutp), lambda i: (i, 0)),
            pl.BlockSpec((8, coutp), lambda i: (i, 0)),   # per-tile stats -> parallel OK
        ),
        compiler_params=pltpu.CompilerParams(
            dimension_semantics=("parallel",), vmem_limit_bytes=VMEM_LIMIT),
        cost_estimate=_cost_matmul(mp, k, coutp, extra_flops=4 * mp * coutp),
    )(patches, w_mat)


def _affine_lrelu(y, scale, shift, tm):
    mp, coutp = y.shape
    kern = functools.partial(_kernel_affine_lrelu, slope=SLOPE)
    return pl.pallas_call(
        kern,
        out_shape=jax.ShapeDtypeStruct((mp, coutp), jnp.bfloat16),
        grid=(mp // tm,),
        in_specs=[
            pl.BlockSpec((tm, coutp), lambda i: (i, 0)),
            pl.BlockSpec((1, coutp), lambda i: (0, 0)),
            pl.BlockSpec((1, coutp), lambda i: (0, 0)),
        ],
        out_specs=pl.BlockSpec((tm, coutp), lambda i: (i, 0)),
        compiler_params=pltpu.CompilerParams(
            dimension_semantics=("parallel",), vmem_limit_bytes=VMEM_LIMIT),
        cost_estimate=pl.CostEstimate(
            flops=int(4 * mp * coutp), transcendentals=0,
            bytes_accessed=int(mp * coutp * 2 * 2 + 2 * coutp * 4)),
    )(y, scale, shift)


# --------------------------------------------------------------------------- #
# Plain-JAX glue: bf16 NHWC im2col (patch matrix written once, padding folded)
# --------------------------------------------------------------------------- #
def _im2col_nhwc(x, k, stride, pad, mp):
    """(N,H,W,C) bf16 -> (mp, k*k*C) bf16 with (kh, kw, c) inner ordering."""
    N, H, W, C = x.shape
    xp = jnp.pad(x, ((0, 0), (pad, pad), (pad, pad), (0, 0)))
    Ho = (H + 2 * pad - k) // stride + 1
    Wo = (W + 2 * pad - k) // stride + 1
    taps = []
    for i in range(k):
        for j in range(k):
            taps.append(xp[:, i:i + stride * Ho:stride, j:j + stride * Wo:stride, :])
    p = jnp.concatenate(taps, axis=-1).reshape(N * Ho * Wo, k * k * C)
    M = N * Ho * Wo
    if mp > M:
        p = jnp.pad(p, ((0, mp - M), (0, 0)))
    return p


def _conv_layer_nhwc(x_nhwc, layer, kw=4, pad=1):
    N, H, W, _ = x_nhwc.shape
    stride = layer["stride"]
    Ho = (H + 2 * pad - kw) // stride + 1
    Wo = (W + 2 * pad - kw) // stride + 1
    M = N * Ho * Wo
    tm, mp = _choose_m_tile(M)

    patches = _im2col_nhwc(x_nhwc, kw, stride, pad, mp)       # (mp, K) bf16
    w_mat = layer["w_mat"]                                     # (K, Coutp) bf16
    cout = layer["cout"]
    coutp = w_mat.shape[1]
    kind = layer["kind"]

    if kind == "bias_lrelu":
        y = _matmul_bias_act(patches, w_mat, layer["bias"], SLOPE, tm, jnp.bfloat16)
    elif kind == "bias":
        y = _matmul_bias_act(patches, w_mat, layer["bias"], None, tm, jnp.float32)
    else:  # "bn_lrelu": BatchNorm2d training-mode batch stats + LeakyReLU
        if mp == tm:
            # whole layer fits one tile -> single fused kernel, single writeback
            y = _conv_bn_lrelu_fused(patches, w_mat, layer["gamma"], layer["beta"], M)
        else:
            y_raw, stats = _matmul_with_stats(patches, w_mat, tm)
            ntiles = mp // tm
            s3 = stats.reshape(ntiles, 8, coutp)
            col_sum = jnp.sum(s3[:, 0, :], axis=0)
            col_sq = jnp.sum(s3[:, 1, :], axis=0)
            mean = col_sum / M
            var = jnp.maximum(col_sq / M - mean * mean, 0.0)
            scale = layer["gamma"][0] * jax.lax.rsqrt(var + EPS)
            shift = layer["beta"][0] - mean * scale
            y = _affine_lrelu(y_raw, scale[None, :], shift[None, :], tm)

    return y[:M, :cout].reshape(N, Ho, Wo, cout)   # stay NHWC (bf16) between layers


def wang2020_discriminator_forward(x_nchw, layers):
    y = jnp.transpose(x_nchw, (0, 2, 3, 1)).astype(jnp.bfloat16)   # NCHW->NHWC once
    for layer in layers:
        y = _conv_layer_nhwc(y, layer)
    return jnp.transpose(y, (0, 3, 1, 2)).astype(jnp.float32)      # NHWC->NCHW once


# --------------------------------------------------------------------------- #
# Deterministic parameter init matching the module (norm=BatchNorm2d -> the
# middle convs have no bias; first and last convs have bias).  Parameters are
# pre-packed into matmul layout ((K, Coutp) bf16, padded (1, Coutp) f32 vecs).
# --------------------------------------------------------------------------- #
def init_params(key, input_nc, ndf=16, n_layers=3, kw=4):
    specs = [(input_nc, ndf, 2, "bias_lrelu")]
    nf_mult = 1
    for n in range(1, n_layers):
        nf_mult_prev = nf_mult
        nf_mult = min(2 ** n, 8)
        specs.append((ndf * nf_mult_prev, ndf * nf_mult, 2, "bn_lrelu"))
    nf_mult_prev = nf_mult
    nf_mult = min(2 ** n_layers, 8)
    specs.append((ndf * nf_mult_prev, ndf * nf_mult, 1, "bn_lrelu"))
    specs.append((ndf * nf_mult, 1, 1, "bias"))

    layers = []
    for (cin, cout, stride, kind) in specs:
        key, kw_, kb_, kg_, kbeta_ = jax.random.split(key, 5)
        K = kw * kw * cin
        coutp = _round_up(cout, 128)       # lane-dense output stores
        w = 0.05 * jax.random.normal(kw_, (cout, cin, kw, kw), jnp.float32)
        w_mat = jnp.transpose(w, (2, 3, 1, 0)).reshape(K, cout)
        w_mat = jnp.pad(w_mat, ((0, 0), (0, coutp - cout))).astype(jnp.bfloat16)
        layer = {"kind": kind, "stride": stride, "cout": cout, "w_mat": w_mat}
        if kind in ("bias_lrelu", "bias"):
            b = 0.01 * jax.random.normal(kb_, (1, cout), jnp.float32)
            layer["bias"] = jnp.pad(b, ((0, 0), (0, coutp - cout)))
        else:
            g = 1.0 + 0.1 * jax.random.normal(kg_, (1, cout), jnp.float32)
            bta = 0.01 * jax.random.normal(kbeta_, (1, cout), jnp.float32)
            layer["gamma"] = jnp.pad(g, ((0, 0), (0, coutp - cout)))
            layer["beta"] = jnp.pad(bta, ((0, 0), (0, coutp - cout)))
        layers.append(layer)
    return layers


# --------------------------------------------------------------------------- #
if __name__ == "__main__":
    key = jax.random.PRNGKey(0)
    N, Cin, H, W = 2, 4, 32, 32          # spatial=32 keeps all 5 convs valid
    ndf = 16

    kx, kp = jax.random.split(key)
    x = jax.random.normal(kx, (N, Cin, H, W), jnp.float32)
    layers = init_params(kp, Cin, ndf=ndf, n_layers=3)

    fwd = jax.jit(functools.partial(wang2020_discriminator_forward, layers=layers))
    out = fwd(x)
    jax.block_until_ready(out)

    # Expected PatchGAN output: (N, 1, H/8 - 2, W/8 - 2) = (2, 1, 2, 2)
    assert out.shape == (2, 1, 2, 2), out.shape
    assert out.dtype == jnp.float32
    assert bool(jnp.all(jnp.isfinite(out)))
    print("KERNEL_OK")
</pallas_src>

<mosaic_0001>
module attributes {stable_mosaic.version = 11 : i64} {
  func.func @_kernel_matmul_bias_act(%arg0: i32, %arg1: memref<512x64xbf16, #tpu.memory_space<vmem>>, %arg2: memref<64x128xbf16, #tpu.memory_space<vmem>>, %arg3: memref<1x128xf32, #tpu.memory_space<vmem>>, %arg4: memref<512x128xbf16, #tpu.memory_space<vmem>>) attributes {dimension_semantics = [#tpu.dimension_semantics<parallel>], iteration_bounds = array<i64: 1>, scalar_prefetch = 0 : i64, scratch_operands = 0 : i64, tpu.core_type = #tpu.core_type<tc>, window_params = [{transform_indices = @transform_0, window_bounds = array<i64: 512, 64>}, {pipeline_mode = #tpu.pipeline_mode<synchronous>, transform_indices = @transform_1, window_bounds = array<i64: 64, 128>}, {pipeline_mode = #tpu.pipeline_mode<synchronous>, transform_indices = @transform_2, window_bounds = array<i64: 1, 128>}, {transform_indices = @transform_3, window_bounds = array<i64: 512, 128>}]} {
    %c0 = arith.constant 0 : index
    %c0_0 = arith.constant 0 : index
    %0 = vector.load %arg1[%c0, %c0_0] : memref<512x64xbf16, #tpu.memory_space<vmem>>, vector<512x64xbf16>
    %c0_1 = arith.constant 0 : index
    %c0_2 = arith.constant 0 : index
    %1 = vector.load %arg2[%c0_1, %c0_2] : memref<64x128xbf16, #tpu.memory_space<vmem>>, vector<64x128xbf16>
    %cst = arith.constant dense<0.000000e+00> : vector<512x128xf32>
    %2 = tpu.matmul %0, %1, %cst {dimension_numbers = #tpu.dot_dimension_numbers<[1], [0], [0], [1], [0, 0, 1, 1], [], []>} : vector<512x64xbf16>, vector<64x128xbf16>, vector<512x128xf32> -> vector<512x128xf32>
    %c0_3 = arith.constant 0 : index
    %c0_4 = arith.constant 0 : index
    %3 = vector.load %arg3[%c0_3, %c0_4] : memref<1x128xf32, #tpu.memory_space<vmem>>, vector<1x128xf32>
    %4 = vector.broadcast %3 : vector<1x128xf32> to vector<512x128xf32>
    %5 = arith.addf %2, %4 : vector<512x128xf32>
    %cst_5 = arith.constant 2.000000e-01 : f32
    %6 = vector.broadcast %cst_5 : f32 to vector<512x128xf32>
    %7 = arith.mulf %6, %5 : vector<512x128xf32>
    %8 = arith.maximumf %5, %7 : vector<512x128xf32>
    %9 = arith.truncf %8 : vector<512x128xf32> to vector<512x128xbf16>
    %c0_6 = arith.constant 0 : index
    %c0_7 = arith.constant 0 : index
    %10 = vector.load %arg4[%c0_6, %c0_7] : memref<512x128xbf16, #tpu.memory_space<vmem>>, vector<512x128xbf16>
    tpu.vector_store %arg4[%c0_6, %c0_7], %9 {strides = array<i32>} : memref<512x128xbf16, #tpu.memory_space<vmem>>, vector<512x128xbf16>,
    return
  }
  func.func @transform_0(%arg0: i32) -> (i32, i32) {
    %c0_i32 = arith.constant 0 : i32
    %c0_i32_0 = arith.constant 0 : i32
    return %arg0, %c0_i32 : i32, i32
  }
  func.func @transform_1(%arg0: i32) -> (i32, i32) {
    %c0_i32 = arith.constant 0 : i32
    %c0_i32_0 = arith.constant 0 : i32
    %c0_i32_1 = arith.constant 0 : i32
    return %c0_i32, %c0_i32_0 : i32, i32
  }
  func.func @transform_2(%arg0: i32) -> (i32, i32) {
    %c0_i32 = arith.constant 0 : i32
    %c0_i32_0 = arith.constant 0 : i32
    %c0_i32_1 = arith.constant 0 : i32
    return %c0_i32, %c0_i32_0 : i32, i32
  }
  func.func @transform_3(%arg0: i32) -> (i32, i32) {
    %c0_i32 = arith.constant 0 : i32
    %c0_i32_0 = arith.constant 0 : i32
    return %arg0, %c0_i32 : i32, i32
  }
}

module attributes {stable_mosaic.version = 11 : i64} {
  func.func @_kernel_conv_bn_lrelu_fused(%arg0: i32, %arg1: memref<128x256xbf16, #tpu.memory_space<vmem>>, %arg2: memref<256x128xbf16, #tpu.memory_space<vmem>>, %arg3: memref<1x128xf32, #tpu.memory_space<vmem>>, %arg4: memref<1x128xf32, #tpu.memory_space<vmem>>, %arg5: memref<128x128xbf16, #tpu.memory_space<vmem>>) attributes {dimension_semantics = [#tpu.dimension_semantics<arbitrary>], iteration_bounds = array<i64: 1>, scalar_prefetch = 0 : i64, scratch_operands = 0 : i64, tpu.core_type = #tpu.core_type<tc>, window_params = [{pipeline_mode = #tpu.pipeline_mode<synchronous>, transform_indices = @transform_0, window_bounds = array<i64: 128, 256>}, {pipeline_mode = #tpu.pipeline_mode<synchronous>, transform_indices = @transform_1, window_bounds = array<i64: 256, 128>}, {pipeline_mode = #tpu.pipeline_mode<synchronous>, transform_indices = @transform_2, window_bounds = array<i64: 1, 128>}, {pipeline_mode = #tpu.pipeline_mode<synchronous>, transform_indices = @transform_3, window_bounds = array<i64: 1, 128>}, {pipeline_mode = #tpu.pipeline_mode<synchronous>, transform_indices = @transform_4, window_bounds = array<i64: 128, 128>}]} {
    %c0 = arith.constant 0 : index
    %c0_0 = arith.constant 0 : index
    %0 = vector.load %arg1[%c0, %c0_0] : memref<128x256xbf16, #tpu.memory_space<vmem>>, vector<128x256xbf16>
    %c0_1 = arith.constant 0 : index
    %c0_2 = arith.constant 0 : index
    %1 = vector.load %arg2[%c0_1, %c0_2] : memref<256x128xbf16, #tpu.memory_space<vmem>>, vector<256x128xbf16>
    %cst = arith.constant dense<0.000000e+00> : vector<128x128xf32>
    %2 = tpu.matmul %0, %1, %cst {dimension_numbers = #tpu.dot_dimension_numbers<[1], [0], [0], [1], [0, 0, 1, 1], [], []>} : vector<128x256xbf16>, vector<256x128xbf16>, vector<128x128xf32> -> vector<128x128xf32>
    %cst_3 = arith.constant dense<0.000000e+00> : vector<128xf32>
    %3 = vector.multi_reduction <add>, %2, %cst_3 [0] : vector<128x128xf32> to vector<128xf32>
    %4 = vector.shape_cast %3 : vector<128xf32> to vector<1x128xf32>
    %cst_4 = arith.constant 7.812500e-03 : f32
    %5 = vector.broadcast %cst_4 : f32 to vector<1x128xf32>
    %6 = arith.mulf %4, %5 : vector<1x128xf32>
    %7 = arith.mulf %2, %2 : vector<128x128xf32>
    %cst_5 = arith.constant dense<0.000000e+00> : vector<128xf32>
    %8 = vector.multi_reduction <add>, %7, %cst_5 [0] : vector<128x128xf32> to vector<128xf32>
    %9 = vector.shape_cast %8 : vector<128xf32> to vector<1x128xf32>
    %cst_6 = arith.constant 7.812500e-03 : f32
    %10 = vector.broadcast %cst_6 : f32 to vector<1x128xf32>
    %11 = arith.mulf %9, %10 : vector<1x128xf32>
    %12 = arith.mulf %6, %6 : vector<1x128xf32>
    %13 = arith.subf %11, %12 : vector<1x128xf32>
    %cst_7 = arith.constant 0.000000e+00 : f32
    %14 = vector.broadcast %cst_7 : f32 to vector<1x128xf32>
    %15 = arith.maximumf %13, %14 : vector<1x128xf32>
    %cst_8 = arith.constant 9.99999974E-6 : f32
    %16 = vector.broadcast %cst_8 : f32 to vector<1x128xf32>
    %17 = arith.addf %15, %16 : vector<1x128xf32>
    %18 = math.rsqrt %17 : vector<1x128xf32>
    %c0_9 = arith.constant 0 : index
    %c0_10 = arith.constant 0 : index
    %19 = vector.load %arg3[%c0_9, %c0_10] : memref<1x128xf32, #tpu.memory_space<vmem>>, vector<1x128xf32>
    %20 = arith.mulf %18, %19 : vector<1x128xf32>
    %21 = vector.broadcast %6 : vector<1x128xf32> to vector<128x128xf32>
    %22 = arith.subf %2, %21 : vector<128x128xf32>
    %23 = vector.broadcast %20 : vector<1x128xf32> to vector<128x128xf32>
    %24 = arith.mulf %22, %23 : vector<128x128xf32>
    %c0_11 = arith.constant 0 : index
    %c0_12 = arith.constant 0 : index
    %25 = vector.load %arg4[%c0_11, %c0_12] : memref<1x128xf32, #tpu.memory_space<vmem>>, vector<1x128xf32>
    %26 = vector.broadcast %25 : vector<1x128xf32> to vector<128x128xf32>
    %27 = arith.addf %24, %26 : vector<128x128xf32>
    %cst_13 = arith.constant 2.000000e-01 : f32
    %28 = vector.broadcast %cst_13 : f32 to vector<128x128xf32>
    %29 = arith.mulf %28, %27 : vector<128x128xf32>
    %30 = arith.maximumf %27, %29 : vector<128x128xf32>
    %31 = arith.truncf %30 : vector<128x128xf32> to vector<128x128xbf16>
    %c0_14 = arith.constant 0 : index
    %c0_15 = arith.constant 0 : index
    %32 = vector.load %arg5[%c0_14, %c0_15] : memref<128x128xbf16, #tpu.memory_space<vmem>>, vector<128x128xbf16>
    tpu.vector_store %arg5[%c0_14, %c0_15], %31 {strides = array<i32>} : memref<128x128xbf16, #tpu.memory_space<vmem>>, vector<128x128xbf16>,
    return
  }
  func.func @transform_0(%arg0: i32) -> (i32, i32) {
    %c0_i32 = arith.constant 0 : i32
    %c0_i32_0 = arith.constant 0 : i32
    %c0_i32_1 = arith.constant 0 : i32
    return %c0_i32, %c0_i32_0 : i32, i32
  }
  func.func @transform_1(%arg0: i32) -> (i32, i32) {
    %c0_i32 = arith.constant 0 : i32
    %c0_i32_0 = arith.constant 0 : i32
    %c0_i32_1 = arith.constant 0 : i32
    return %c0_i32, %c0_i32_0 : i32, i32
  }
  func.func @transform_2(%arg0: i32) -> (i32, i32) {
    %c0_i32 = arith.constant 0 : i32
    %c0_i32_0 = arith.constant 0 : i32
    %c0_i32_1 = arith.constant 0 : i32
    return %c0_i32, %c0_i32_0 : i32, i32
  }
  func.func @transform_3(%arg0: i32) -> (i32, i32) {
    %c0_i32 = arith.constant 0 : i32
    %c0_i32_0 = arith.constant 0 : i32
    %c0_i32_1 = arith.constant 0 : i32
    return %c0_i32, %c0_i32_0 : i32, i32
  }
  func.func @transform_4(%arg0: i32) -> (i32, i32) {
    %c0_i32 = arith.constant 0 : i32
    %c0_i32_0 = arith.constant 0 : i32
    %c0_i32_1 = arith.constant 0 : i32
    return %c0_i32, %c0_i32_0 : i32, i32
  }
}

module attributes {stable_mosaic.version = 11 : i64} {
  func.func @_kernel_conv_bn_lrelu_fused(%arg0: i32, %arg1: memref<32x512xbf16, #tpu.memory_space<vmem>>, %arg2: memref<512x128xbf16, #tpu.memory_space<vmem>>, %arg3: memref<1x128xf32, #tpu.memory_space<vmem>>, %arg4: memref<1x128xf32, #tpu.memory_space<vmem>>, %arg5: memref<32x128xbf16, #tpu.memory_space<vmem>>) attributes {dimension_semantics = [#tpu.dimension_semantics<arbitrary>], iteration_bounds = array<i64: 1>, scalar_prefetch = 0 : i64, scratch_operands = 0 : i64, tpu.core_type = #tpu.core_type<tc>, window_params = [{pipeline_mode = #tpu.pipeline_mode<synchronous>, transform_indices = @transform_0, window_bounds = array<i64: 32, 512>}, {pipeline_mode = #tpu.pipeline_mode<synchronous>, transform_indices = @transform_1, window_bounds = array<i64: 512, 128>}, {pipeline_mode = #tpu.pipeline_mode<synchronous>, transform_indices = @transform_2, window_bounds = array<i64: 1, 128>}, {pipeline_mode = #tpu.pipeline_mode<synchronous>, transform_indices = @transform_3, window_bounds = array<i64: 1, 128>}, {pipeline_mode = #tpu.pipeline_mode<synchronous>, transform_indices = @transform_4, window_bounds = array<i64: 32, 128>}]} {
    %c0 = arith.constant 0 : index
    %c0_0 = arith.constant 0 : index
    %0 = vector.load %arg1[%c0, %c0_0] : memref<32x512xbf16, #tpu.memory_space<vmem>>, vector<32x512xbf16>
    %c0_1 = arith.constant 0 : index
    %c0_2 = arith.constant 0 : index
    %1 = vector.load %arg2[%c0_1, %c0_2] : memref<512x128xbf16, #tpu.memory_space<vmem>>, vector<512x128xbf16>
    %cst = arith.constant dense<0.000000e+00> : vector<32x128xf32>
    %2 = tpu.matmul %0, %1, %cst {dimension_numbers = #tpu.dot_dimension_numbers<[1], [0], [0], [1], [0, 0, 1, 1], [], []>} : vector<32x512xbf16>, vector<512x128xbf16>, vector<32x128xf32> -> vector<32x128xf32>
    %cst_3 = arith.constant dense<0.000000e+00> : vector<128xf32>
    %3 = vector.multi_reduction <add>, %2, %cst_3 [0] : vector<32x128xf32> to vector<128xf32>
    %4 = vector.shape_cast %3 : vector<128xf32> to vector<1x128xf32>
    %cst_4 = arith.constant 3.125000e-02 : f32
    %5 = vector.broadcast %cst_4 : f32 to vector<1x128xf32>
    %6 = arith.mulf %4, %5 : vector<1x128xf32>
    %7 = arith.mulf %2, %2 : vector<32x128xf32>
    %cst_5 = arith.constant dense<0.000000e+00> : vector<128xf32>
    %8 = vector.multi_reduction <add>, %7, %cst_5 [0] : vector<32x128xf32> to vector<128xf32>
    %9 = vector.shape_cast %8 : vector<128xf32> to vector<1x128xf32>
    %cst_6 = arith.constant 3.125000e-02 : f32
    %10 = vector.broadcast %cst_6 : f32 to vector<1x128xf32>
    %11 = arith.mulf %9, %10 : vector<1x128xf32>
    %12 = arith.mulf %6, %6 : vector<1x128xf32>
    %13 = arith.subf %11, %12 : vector<1x128xf32>
    %cst_7 = arith.constant 0.000000e+00 : f32
    %14 = vector.broadcast %cst_7 : f32 to vector<1x128xf32>
    %15 = arith.maximumf %13, %14 : vector<1x128xf32>
    %cst_8 = arith.constant 9.99999974E-6 : f32
    %16 = vector.broadcast %cst_8 : f32 to vector<1x128xf32>
    %17 = arith.addf %15, %16 : vector<1x128xf32>
    %18 = math.rsqrt %17 : vector<1x128xf32>
    %c0_9 = arith.constant 0 : index
    %c0_10 = arith.constant 0 : index
    %19 = vector.load %arg3[%c0_9, %c0_10] : memref<1x128xf32, #tpu.memory_space<vmem>>, vector<1x128xf32>
    %20 = arith.mulf %18, %19 : vector<1x128xf32>
    %21 = vector.broadcast %6 : vector<1x128xf32> to vector<32x128xf32>
    %22 = arith.subf %2, %21 : vector<32x128xf32>
    %23 = vector.broadcast %20 : vector<1x128xf32> to vector<32x128xf32>
    %24 = arith.mulf %22, %23 : vector<32x128xf32>
    %c0_11 = arith.constant 0 : index
    %c0_12 = arith.constant 0 : index
    %25 = vector.load %arg4[%c0_11, %c0_12] : memref<1x128xf32, #tpu.memory_space<vmem>>, vector<1x128xf32>
    %26 = vector.broadcast %25 : vector<1x128xf32> to vector<32x128xf32>
    %27 = arith.addf %24, %26 : vector<32x128xf32>
    %cst_13 = arith.constant 2.000000e-01 : f32
    %28 = vector.broadcast %cst_13 : f32 to vector<32x128xf32>
    %29 = arith.mulf %28, %27 : vector<32x128xf32>
    %30 = arith.maximumf %27, %29 : vector<32x128xf32>
    %31 = arith.truncf %30 : vector<32x128xf32> to vector<32x128xbf16>
    %c0_14 = arith.constant 0 : index
    %c0_15 = arith.constant 0 : index
    %32 = vector.load %arg5[%c0_14, %c0_15] : memref<32x128xbf16, #tpu.memory_space<vmem>>, vector<32x128xbf16>
    tpu.vector_store %arg5[%c0_14, %c0_15], %31 {strides = array<i32>} : memref<32x128xbf16, #tpu.memory_space<vmem>>, vector<32x128xbf16>,
    return
  }
  func.func @transform_0(%arg0: i32) -> (i32, i32) {
    %c0_i32 = arith.constant 0 : i32
    %c0_i32_0 = arith.constant 0 : i32
    %c0_i32_1 = arith.constant 0 : i32
    return %c0_i32, %c0_i32_0 : i32, i32
  }
  func.func @transform_1(%arg0: i32) -> (i32, i32) {
    %c0_i32 = arith.constant 0 : i32
    %c0_i32_0 = arith.constant 0 : i32
    %c0_i32_1 = arith.constant 0 : i32
    return %c0_i32, %c0_i32_0 : i32, i32
  }
  func.func @transform_2(%arg0: i32) -> (i32, i32) {
    %c0_i32 = arith.constant 0 : i32
    %c0_i32_0 = arith.constant 0 : i32
    %c0_i32_1 = arith.constant 0 : i32
    return %c0_i32, %c0_i32_0 : i32, i32
  }
  func.func @transform_3(%arg0: i32) -> (i32, i32) {
    %c0_i32 = arith.constant 0 : i32
    %c0_i32_0 = arith.constant 0 : i32
    %c0_i32_1 = arith.constant 0 : i32
    return %c0_i32, %c0_i32_0 : i32, i32
  }
  func.func @transform_4(%arg0: i32) -> (i32, i32) {
    %c0_i32 = arith.constant 0 : i32
    %c0_i32_0 = arith.constant 0 : i32
    %c0_i32_1 = arith.constant 0 : i32
    return %c0_i32, %c0_i32_0 : i32, i32
  }
}

module attributes {stable_mosaic.version = 11 : i64} {
  func.func @_kernel_conv_bn_lrelu_fused(%arg0: i32, %arg1: memref<24x1024xbf16, #tpu.memory_space<vmem>>, %arg2: memref<1024x128xbf16, #tpu.memory_space<vmem>>, %arg3: memref<1x128xf32, #tpu.memory_space<vmem>>, %arg4: memref<1x128xf32, #tpu.memory_space<vmem>>, %arg5: memref<24x128xbf16, #tpu.memory_space<vmem>>) attributes {dimension_semantics = [#tpu.dimension_semantics<arbitrary>], iteration_bounds = array<i64: 1>, scalar_prefetch = 0 : i64, scratch_operands = 0 : i64, tpu.core_type = #tpu.core_type<tc>, window_params = [{pipeline_mode = #tpu.pipeline_mode<synchronous>, transform_indices = @transform_0, window_bounds = array<i64: 24, 1024>}, {pipeline_mode = #tpu.pipeline_mode<synchronous>, transform_indices = @transform_1, window_bounds = array<i64: 1024, 128>}, {pipeline_mode = #tpu.pipeline_mode<synchronous>, transform_indices = @transform_2, window_bounds = array<i64: 1, 128>}, {pipeline_mode = #tpu.pipeline_mode<synchronous>, transform_indices = @transform_3, window_bounds = array<i64: 1, 128>}, {pipeline_mode = #tpu.pipeline_mode<synchronous>, transform_indices = @transform_4, window_bounds = array<i64: 24, 128>}]} {
    %c0 = arith.constant 0 : index
    %c0_0 = arith.constant 0 : index
    %0 = vector.load %arg1[%c0, %c0_0] : memref<24x1024xbf16, #tpu.memory_space<vmem>>, vector<24x1024xbf16>
    %c0_1 = arith.constant 0 : index
    %c0_2 = arith.constant 0 : index
    %1 = vector.load %arg2[%c0_1, %c0_2] : memref<1024x128xbf16, #tpu.memory_space<vmem>>, vector<1024x128xbf16>
    %cst = arith.constant dense<0.000000e+00> : vector<24x128xf32>
    %2 = tpu.matmul %0, %1, %cst {dimension_numbers = #tpu.dot_dimension_numbers<[1], [0], [0], [1], [0, 0, 1, 1], [], []>} : vector<24x1024xbf16>, vector<1024x128xbf16>, vector<24x128xf32> -> vector<24x128xf32>
    %cst_3 = arith.constant dense<0.000000e+00> : vector<128xf32>
    %3 = vector.multi_reduction <add>, %2, %cst_3 [0] : vector<24x128xf32> to vector<128xf32>
    %4 = vector.shape_cast %3 : vector<128xf32> to vector<1x128xf32>
    %cst_4 = arith.constant 0.055555556 : f32
    %5 = vector.broadcast %cst_4 : f32 to vector<1x128xf32>
    %6 = arith.mulf %4, %5 : vector<1x128xf32>
    %7 = arith.mulf %2, %2 : vector<24x128xf32>
    %cst_5 = arith.constant dense<0.000000e+00> : vector<128xf32>
    %8 = vector.multi_reduction <add>, %7, %cst_5 [0] : vector<24x128xf32> to vector<128xf32>
    %9 = vector.shape_cast %8 : vector<128xf32> to vector<1x128xf32>
    %cst_6 = arith.constant 0.055555556 : f32
    %10 = vector.broadcast %cst_6 : f32 to vector<1x128xf32>
    %11 = arith.mulf %9, %10 : vector<1x128xf32>
    %12 = arith.mulf %6, %6 : vector<1x128xf32>
    %13 = arith.subf %11, %12 : vector<1x128xf32>
    %cst_7 = arith.constant 0.000000e+00 : f32
    %14 = vector.broadcast %cst_7 : f32 to vector<1x128xf32>
    %15 = arith.maximumf %13, %14 : vector<1x128xf32>
    %cst_8 = arith.constant 9.99999974E-6 : f32
    %16 = vector.broadcast %cst_8 : f32 to vector<1x128xf32>
    %17 = arith.addf %15, %16 : vector<1x128xf32>
    %18 = math.rsqrt %17 : vector<1x128xf32>
    %c0_9 = arith.constant 0 : index
    %c0_10 = arith.constant 0 : index
    %19 = vector.load %arg3[%c0_9, %c0_10] : memref<1x128xf32, #tpu.memory_space<vmem>>, vector<1x128xf32>
    %20 = arith.mulf %18, %19 : vector<1x128xf32>
    %21 = vector.broadcast %6 : vector<1x128xf32> to vector<24x128xf32>
    %22 = arith.subf %2, %21 : vector<24x128xf32>
    %23 = vector.broadcast %20 : vector<1x128xf32> to vector<24x128xf32>
    %24 = arith.mulf %22, %23 : vector<24x128xf32>
    %c0_11 = arith.constant 0 : index
    %c0_12 = arith.constant 0 : index
    %25 = vector.load %arg4[%c0_11, %c0_12] : memref<1x128xf32, #tpu.memory_space<vmem>>, vector<1x128xf32>
    %26 = vector.broadcast %25 : vector<1x128xf32> to vector<24x128xf32>
    %27 = arith.addf %24, %26 : vector<24x128xf32>
    %cst_13 = arith.constant 2.000000e-01 : f32
    %28 = vector.broadcast %cst_13 : f32 to vector<24x128xf32>
    %29 = arith.mulf %28, %27 : vector<24x128xf32>
    %30 = arith.maximumf %27, %29 : vector<24x128xf32>
    %31 = arith.truncf %30 : vector<24x128xf32> to vector<24x128xbf16>
    %c0_14 = arith.constant 0 : index
    %c0_15 = arith.constant 0 : index
    %32 = vector.load %arg5[%c0_14, %c0_15] : memref<24x128xbf16, #tpu.memory_space<vmem>>, vector<24x128xbf16>
    tpu.vector_store %arg5[%c0_14, %c0_15], %31 {strides = array<i32>} : memref<24x128xbf16, #tpu.memory_space<vmem>>, vector<24x128xbf16>,
    return
  }
  func.func @transform_0(%arg0: i32) -> (i32, i32) {
    %c0_i32 = arith.constant 0 : i32
    %c0_i32_0 = arith.constant 0 : i32
    %c0_i32_1 = arith.constant 0 : i32
    return %c0_i32, %c0_i32_0 : i32, i32
  }
  func.func @transform_1(%arg0: i32) -> (i32, i32) {
    %c0_i32 = arith.constant 0 : i32
    %c0_i32_0 = arith.constant 0 : i32
    %c0_i32_1 = arith.constant 0 : i32
    return %c0_i32, %c0_i32_0 : i32, i32
  }
  func.func @transform_2(%arg0: i32) -> (i32, i32) {
    %c0_i32 = arith.constant 0 : i32
    %c0_i32_0 = arith.constant 0 : i32
    %c0_i32_1 = arith.constant 0 : i32
    return %c0_i32, %c0_i32_0 : i32, i32
  }
  func.func @transform_3(%arg0: i32) -> (i32, i32) {
    %c0_i32 = arith.constant 0 : i32
    %c0_i32_0 = arith.constant 0 : i32
    %c0_i32_1 = arith.constant 0 : i32
    return %c0_i32, %c0_i32_0 : i32, i32
  }
  func.func @transform_4(%arg0: i32) -> (i32, i32) {
    %c0_i32 = arith.constant 0 : i32
    %c0_i32_0 = arith.constant 0 : i32
    %c0_i32_1 = arith.constant 0 : i32
    return %c0_i32, %c0_i32_0 : i32, i32
  }
}

module attributes {stable_mosaic.version = 11 : i64} {
  func.func @_kernel_matmul_bias_act(%arg0: i32, %arg1: memref<8x2048xbf16, #tpu.memory_space<vmem>>, %arg2: memref<2048x128xbf16, #tpu.memory_space<vmem>>, %arg3: memref<1x128xf32, #tpu.memory_space<vmem>>, %arg4: memref<8x128xf32, #tpu.memory_space<vmem>>) attributes {dimension_semantics = [#tpu.dimension_semantics<parallel>], iteration_bounds = array<i64: 1>, scalar_prefetch = 0 : i64, scratch_operands = 0 : i64, tpu.core_type = #tpu.core_type<tc>, window_params = [{transform_indices = @transform_0, window_bounds = array<i64: 8, 2048>}, {pipeline_mode = #tpu.pipeline_mode<synchronous>, transform_indices = @transform_1, window_bounds = array<i64: 2048, 128>}, {pipeline_mode = #tpu.pipeline_mode<synchronous>, transform_indices = @transform_2, window_bounds = array<i64: 1, 128>}, {transform_indices = @transform_3, window_bounds = array<i64: 8, 128>}]} {
    %c0 = arith.constant 0 : index
    %c0_0 = arith.constant 0 : index
    %0 = vector.load %arg1[%c0, %c0_0] : memref<8x2048xbf16, #tpu.memory_space<vmem>>, vector<8x2048xbf16>
    %c0_1 = arith.constant 0 : index
    %c0_2 = arith.constant 0 : index
    %1 = vector.load %arg2[%c0_1, %c0_2] : memref<2048x128xbf16, #tpu.memory_space<vmem>>, vector<2048x128xbf16>
    %cst = arith.constant dense<0.000000e+00> : vector<8x128xf32>
    %2 = tpu.matmul %0, %1, %cst {dimension_numbers = #tpu.dot_dimension_numbers<[1], [0], [0], [1], [0, 0, 1, 1], [], []>} : vector<8x2048xbf16>, vector<2048x128xbf16>, vector<8x128xf32> -> vector<8x128xf32>
    %c0_3 = arith.constant 0 : index
    %c0_4 = arith.constant 0 : index
    %3 = vector.load %arg3[%c0_3, %c0_4] : memref<1x128xf32, #tpu.memory_space<vmem>>, vector<1x128xf32>
    %4 = vector.broadcast %3 : vector<1x128xf32> to vector<8x128xf32>
    %5 = arith.addf %2, %4 : vector<8x128xf32>
    %c0_5 = arith.constant 0 : index
    %c0_6 = arith.constant 0 : index
    %6 = vector.load %arg4[%c0_5, %c0_6] : memref<8x128xf32, #tpu.memory_space<vmem>>, vector<8x128xf32>
    tpu.vector_store %arg4[%c0_5, %c0_6], %5 {strides = array<i32>} : memref<8x128xf32, #tpu.memory_space<vmem>>, vector<8x128xf32>,
    return
  }
  func.func @transform_0(%arg0: i32) -> (i32, i32) {
    %c0_i32 = arith.constant 0 : i32
    %c0_i32_0 = arith.constant 0 : i32
    return %arg0, %c0_i32 : i32, i32
  }
  func.func @transform_1(%arg0: i32) -> (i32, i32) {
    %c0_i32 = arith.constant 0 : i32
    %c0_i32_0 = arith.constant 0 : i32
    %c0_i32_1 = arith.constant 0 : i32
    return %c0_i32, %c0_i32_0 : i32, i32
  }
  func.func @transform_2(%arg0: i32) -> (i32, i32) {
    %c0_i32 = arith.constant 0 : i32
    %c0_i32_0 = arith.constant 0 : i32
    %c0_i32_1 = arith.constant 0 : i32
    return %c0_i32, %c0_i32_0 : i32, i32
  }
  func.func @transform_3(%arg0: i32) -> (i32, i32) {
    %c0_i32 = arith.constant 0 : i32
    %c0_i32_0 = arith.constant 0 : i32
    return %arg0, %c0_i32 : i32, i32
  }
}

</mosaic_0001>

<llo_original>
// kernel: wang2020_discriminator_forward.5
$region0: #{wang2020_discriminator_forward.5}
  #allocation0 [shape = 'u32[]', space=smem, size = 0x4, offset = 0x4, fixed_abs, tag = 'smem constant byte address 0x4 - core index']
  #allocation1 [shape = 'u32[144,128]{1,0:T(1,128)}', space=vmem, size = 0x12000, scoped, tag = 'internal scratch']
  %s0 = inlined_call_operand.vmem [shape: bf16[512,64], index: 0, kind: input, shape index: {}]
  %s1 = inlined_call_operand.vmem [shape: bf16[64,128], index: 1, kind: input, shape index: {}]
  %s2 = inlined_call_operand.vmem [shape: f32[1,128], index: 2, kind: input, shape index: {}]
  %s3 = inlined_call_operand.vmem [shape: bf16[512,128], index: 3, kind: output, shape index: {}]
  %s4 = sld [smem:[#allocation0]]
  $region22: #{wang2020_discriminator_forward.5} parent=0
    _
  %s6 = ssub.s32 1, %s4
  %s7 = scalar_select 0, %s6, %s4
  // Predicated region
  $region2: #{wang2020_discriminator_forward.5} parent=0 // pred_check
    _
  $region3: #{wang2020_discriminator_forward.5} parent=0 // pred_check_branch
    %9 = sbr.rel (0) target = $region5
  $region4: #{wang2020_discriminator_forward.5} parent=0 // pred_region
    _
  $region5: #{wang2020_discriminator_forward.5} parent=0 // pred_fallthru
    _
  // Predicated region
  $region6: #{wang2020_discriminator_forward.5} parent=0 // pred_check
    _
  $region7: #{wang2020_discriminator_forward.5} parent=0 // pred_check_branch
    %11 = sbr.rel (0) target = $region9
  $region8: #{wang2020_discriminator_forward.5} parent=0 // pred_region
    _
  $region9: #{wang2020_discriminator_forward.5} parent=0 // pred_fallthru
    _
  // Predicated region
  $region10: #{wang2020_discriminator_forward.5} parent=0 // pred_check
    _
  $region11: #{wang2020_discriminator_forward.5} parent=0 // pred_check_branch
    %13 = sbr.rel (0) target = $region13
  $region12: #{wang2020_discriminator_forward.5} parent=0 // pred_region
    _
  $region13: #{wang2020_discriminator_forward.5} parent=0 // pred_fallthru
    _
  %v15 = vld [vmem:[%s0] sm:$0xf]
  %v16 = vld [vmem:[%s0 + $0x4] sm:$0xf]
  %v17 = vld [vmem:[%s0 + $0x8] sm:$0xf]
  %v18 = vld [vmem:[%s0 + $0xc] sm:$0xf]
  %v19 = vld [vmem:[%s0 + $0x10] sm:$0xf]
  %v20 = vld [vmem:[%s0 + $0x14] sm:$0xf]
  %v21 = vld [vmem:[%s0 + $0x18] sm:$0xf]
  %v22 = vld [vmem:[%s0 + $0x1c] sm:$0xf]
  %v23 = vld [vmem:[%s0 + $0x20] sm:$0xf]
  %v24 = vld [vmem:[%s0 + $0x24] sm:$0xf]
  %v25 = vld [vmem:[%s0 + $0x28] sm:$0xf]
  %v26 = vld [vmem:[%s0 + $0x2c] sm:$0xf]
  %v27 = vld [vmem:[%s0 + $0x30] sm:$0xf]
  %v28 = vld [vmem:[%s0 + $0x34] sm:$0xf]
  %v29 = vld [vmem:[%s0 + $0x38] sm:$0xf]
  %v30 = vld [vmem:[%s0 + $0x3c] sm:$0xf]
  %v31 = vld [vmem:[%s0 + $0x40] sm:$0xf]
  %v32 = vld [vmem:[%s0 + $0x44] sm:$0xf]
  %v33 = vld [vmem:[%s0 + $0x48] sm:$0xf]
  %v34 = vld [vmem:[%s0 + $0x4c] sm:$0xf]
  %v35 = vld [vmem:[%s0 + $0x50] sm:$0xf]
  %v36 = vld [vmem:[%s0 + $0x54] sm:$0xf]
  %v37 = vld [vmem:[%s0 + $0x58] sm:$0xf]
  %v38 = vld [vmem:[%s0 + $0x5c] sm:$0xf]
  %v39 = vld [vmem:[%s0 + $0x60] sm:$0xf]
  %v40 = vld [vmem:[%s0 + $0x64] sm:$0xf]
  %v41 = vld [vmem:[%s0 + $0x68] sm:$0xf]
  %v42 = vld [vmem:[%s0 + $0x6c] sm:$0xf]
  %v43 = vld [vmem:[%s0 + $0x70] sm:$0xf]
  %v44 = vld [vmem:[%s0 + $0x74] sm:$0xf]
  %v45 = vld [vmem:[%s0 + $0x78] sm:$0xf]
  %v46 = vld [vmem:[%s0 + $0x7c] sm:$0xf]
  %v47 = vld [vmem:[%s0 + $0x80] sm:$0xf]
  %v48 = vld [vmem:[%s0 + $0x84] sm:$0xf]
  %v49 = vld [vmem:[%s0 + $0x88] sm:$0xf]
  %v50 = vld [vmem:[%s0 + $0x8c] sm:$0xf]
  %v51 = vld [vmem:[%s0 + $0x90] sm:$0xf]
  %v52 = vld [vmem:[%s0 + $0x94] sm:$0xf]
  %v53 = vld [vmem:[%s0 + $0x98] sm:$0xf]
  %v54 = vld [vmem:[%s0 + $0x9c] sm:$0xf]
  %v55 = vld [vmem:[%s0 + $0xa0] sm:$0xf]
  %v56 = vld [vmem:[%s0 + $0xa4] sm:$0xf]
  %v57 = vld [vmem:[%s0 + $0xa8] sm:$0xf]
  %v58 = vld [vmem:[%s0 + $0xac] sm:$0xf]
  %v59 = vld [vmem:[%s0 + $0xb0] sm:$0xf]
  %v60 = vld [vmem:[%s0 + $0xb4] sm:$0xf]
  %v61 = vld [vmem:[%s0 + $0xb8] sm:$0xf]
  %v62 = vld [vmem:[%s0 + $0xbc] sm:$0xf]
  %v63 = vld [vmem:[%s0 + $0xc0] sm:$0xf]
  %v64 = vld [vmem:[%s0 + $0xc4] sm:$0xf]
  %v65 = vld [vmem:[%s0 + $0xc8] sm:$0xf]
  %v66 = vld [vmem:[%s0 + $0xcc] sm:$0xf]
  %v67 = vld [vmem:[%s0 + $0xd0] sm:$0xf]
  %v68 = vld [vmem:[%s0 + $0xd4] sm:$0xf]
  %v69 = vld [vmem:[%s0 + $0xd8] sm:$0xf]
  %v70 = vld [vmem:[%s0 + $0xdc] sm:$0xf]
  %v71 = vld [vmem:[%s0 + $0xe0] sm:$0xf]
  %v72 = vld [vmem:[%s0 + $0xe4] sm:$0xf]
  %v73 = vld [vmem:[%s0 + $0xe8] sm:$0xf]
  %v74 = vld [vmem:[%s0 + $0xec] sm:$0xf]
  %v75 = vld [vmem:[%s0 + $0xf0] sm:$0xf]
  %v76 = vld [vmem:[%s0 + $0xf4] sm:$0xf]
  %v77 = vld [vmem:[%s0 + $0xf8] sm:$0xf]
  %v78 = vld [vmem:[%s0 + $0xfc] sm:$0xf]
  %v79 = vld [vmem:[%s1] sm:$0xf]
  %v80 = vld [vmem:[%s1 + $0x4] sm:$0xf]
  %v81 = vld [vmem:[%s1 + $0x8] sm:$0xf]
  %v82 = vld [vmem:[%s1 + $0xc] sm:$0xf]
  %v83 = vld [vmem:[%s1 + $0x10] sm:$0xf]
  %v84 = vld [vmem:[%s1 + $0x14] sm:$0xf]
  %v85 = vld [vmem:[%s1 + $0x18] sm:$0xf]
  %v86 = vld [vmem:[%s1 + $0x1c] sm:$0xf]
  %v87 = vld [vmem:[%s2] sm:$0x1]
  %v89 = vlaneseq
  %v90 = vshrl.u32 %v89, 7
  %v91 = vsub.s32 0, %v90
  %v92 = vrot.slane %v87, %v91
  %v158 = vunpack.c.l.b16 %v15
  %v159 = vunpack.c.l.b16 %v16
  %v160 = vunpack.c.l.b16 %v17
  %v161 = vunpack.c.l.b16 %v18
  %v162 = vunpack.c.l.b16 %v19
  %v163 = vunpack.c.l.b16 %v20
  %v164 = vunpack.c.l.b16 %v21
  %v165 = vunpack.c.l.b16 %v22
  %v166 = vunpack.c.l.b16 %v23
  %v167 = vunpack.c.l.b16 %v24
  %v168 = vunpack.c.l.b16 %v25
  %v169 = vunpack.c.l.b16 %v26
  %v170 = vunpack.c.l.b16 %v27
  %v171 = vunpack.c.l.b16 %v28
  %v172 = vunpack.c.l.b16 %v29
  %v173 = vunpack.c.l.b16 %v30
  %v174 = vunpack.c.l.b16 %v31
  %v175 = vunpack.c.l.b16 %v32
  %v176 = vunpack.c.l.b16 %v33
  %v177 = vunpack.c.l.b16 %v34
  %v178 = vunpack.c.l.b16 %v35
  %v179 = vunpack.c.l.b16 %v36
  %v180 = vunpack.c.l.b16 %v37
  %v181 = vunpack.c.l.b16 %v38
  %v182 = vunpack.c.l.b16 %v39
  %v183 = vunpack.c.l.b16 %v40
  %v184 = vunpack.c.l.b16 %v41
  %v185 = vunpack.c.l.b16 %v42
  %v186 = vunpack.c.l.b16 %v43
  %v187 = vunpack.c.l.b16 %v44
  %v188 = vunpack.c.l.b16 %v45
  %v189 = vunpack.c.l.b16 %v46
  %v190 = vunpack.c.l.b16 %v47
  %v191 = vunpack.c.l.b16 %v48
  %v192 = vunpack.c.l.b16 %v49
  %v193 = vunpack.c.l.b16 %v50
  %v194 = vunpack.c.l.b16 %v51
  %v195 = vunpack.c.l.b16 %v52
  %v196 = vunpack.c.l.b16 %v53
  %v197 = vunpack.c.l.b16 %v54
  %v198 = vunpack.c.l.b16 %v55
  %v199 = vunpack.c.l.b16 %v56
  %v200 = vunpack.c.l.b16 %v57
  %v201 = vunpack.c.l.b16 %v58
  %v202 = vunpack.c.l.b16 %v59
  %v203 = vunpack.c.l.b16 %v60
  %v204 = vunpack.c.l.b16 %v61
  %v205 = vunpack.c.l.b16 %v62
  %v206 = vunpack.c.l.b16 %v63
  %v207 = vunpack.c.l.b16 %v64
  %v208 = vunpack.c.l.b16 %v65
  %v209 = vunpack.c.l.b16 %v66
  %v210 = vunpack.c.l.b16 %v67
  %v211 = vunpack.c.l.b16 %v68
  %v212 = vunpack.c.l.b16 %v69
  %v213 = vunpack.c.l.b16 %v70
  %v214 = vunpack.c.l.b16 %v71
  %v215 = vunpack.c.l.b16 %v72
  %v216 = vunpack.c.l.b16 %v73
  %v217 = vunpack.c.l.b16 %v74
  %v218 = vunpack.c.l.b16 %v75
  %v219 = vunpack.c.l.b16 %v76
  %v220 = vunpack.c.l.b16 %v77
  %v221 = vunpack.c.l.b16 %v78
  %v222 = vpack.c.b16 %v159, %v158
  %v223 = vpack.c.b16 %v161, %v160
  %v224 = vpack.c.b16 %v163, %v162
  %v225 = vpack.c.b16 %v165, %v164
  %v226 = vpack.c.b16 %v167, %v166
  %v227 = vpack.c.b16 %v169, %v168
  %v228 = vpack.c.b16 %v171, %v170
  %v229 = vpack.c.b16 %v173, %v172
  %v230 = vpack.c.b16 %v175, %v174
  %v231 = vpack.c.b16 %v177, %v176
  %v232 = vpack.c.b16 %v179, %v178
  %v233 = vpack.c.b16 %v181, %v180
  %v234 = vpack.c.b16 %v183, %v182
  %v235 = vpack.c.b16 %v185, %v184
  %v236 = vpack.c.b16 %v187, %v186
  %v237 = vpack.c.b16 %v189, %v188
  %v238 = vpack.c.b16 %v191, %v190
  %v239 = vpack.c.b16 %v193, %v192
  %v240 = vpack.c.b16 %v195, %v194
  %v241 = vpack.c.b16 %v197, %v196
  %v242 = vpack.c.b16 %v199, %v198
  %v243 = vpack.c.b16 %v201, %v200
  %v244 = vpack.c.b16 %v203, %v202
  %v245 = vpack.c.b16 %v205, %v204
  %v246 = vpack.c.b16 %v207, %v206
  %v247 = vpack.c.b16 %v209, %v208
  %v248 = vpack.c.b16 %v211, %v210
  %v249 = vpack.c.b16 %v213, %v212
  %v250 = vpack.c.b16 %v215, %v214
  %v251 = vpack.c.b16 %v217, %v216
  %v252 = vpack.c.b16 %v219, %v218
  %v253 = vpack.c.b16 %v221, %v220
  %v262 = vunpack.c.l.b16 %v79
  %v263 = vunpack.c.l.b16 %v80
  %v264 = vunpack.c.l.b16 %v81
  %v265 = vunpack.c.l.b16 %v82
  %v266 = vunpack.c.l.b16 %v83
  %v267 = vunpack.c.l.b16 %v84
  %v268 = vunpack.c.l.b16 %v85
  %v269 = vunpack.c.l.b16 %v86
  %v270 = vpack.c.b16 %v263, %v262
  %v271 = vpack.c.b16 %v265, %v264
  %v272 = vpack.c.b16 %v267, %v266
  %v273 = vpack.c.b16 %v269, %v268
  %vm278 = vcmask 523264
  %v280 = vsel %vm278, %v222, 0
  %v283 = vsel %vm278, %v223, 0
  %v286 = vsel %vm278, %v224, 0
  %v289 = vsel %vm278, %v225, 0
  %v292 = vsel %vm278, %v226, 0
  %v295 = vsel %vm278, %v227, 0
  %v298 = vsel %vm278, %v228, 0
  %v301 = vsel %vm278, %v229, 0
  %v304 = vsel %vm278, %v230, 0
  %v307 = vsel %vm278, %v231, 0
  %v310 = vsel %vm278, %v232, 0
  %v313 = vsel %vm278, %v233, 0
  %v316 = vsel %vm278, %v234, 0
  %v319 = vsel %vm278, %v235, 0
  %v322 = vsel %vm278, %v236, 0
  %v325 = vsel %vm278, %v237, 0
  %v328 = vsel %vm278, %v238, 0
  %v331 = vsel %vm278, %v239, 0
  %v334 = vsel %vm278, %v240, 0
  %v337 = vsel %vm278, %v241, 0
  %v340 = vsel %vm278, %v242, 0
  %v343 = vsel %vm278, %v243, 0
  %v346 = vsel %vm278, %v244, 0
  %v349 = vsel %vm278, %v245, 0
  %v352 = vsel %vm278, %v246, 0
  %v355 = vsel %vm278, %v247, 0
  %v358 = vsel %vm278, %v248, 0
  %v361 = vsel %vm278, %v249, 0
  %v364 = vsel %vm278, %v250, 0
  %v367 = vsel %vm278, %v251, 0
  %v370 = vsel %vm278, %v252, 0
  %v373 = vsel %vm278, %v253, 0
  %375 = vmatprep.subr.bf16.mxu0 0
  %376 = vmatpush1.bf16.msra.mxu0 %v270
  %377 = vmatprep.subr.bf16.mxu0 0
  %378 = vmatpush1.bf16.msra.mxu0 %v271
  %379 = vmatprep.subr.bf16.mxu0 0
  %380 = vmatpush1.bf16.msra.mxu0 %v272
  %381 = vmatprep.subr.bf16.mxu0 0
  %382 = vmatpush1.bf16.msra.mxu0 %v273
  %383 = vmatprep.subr.bf16.mxu0 0
  %384 = vmatpush1.bf16.msra.mxu0 0
  %385 = vmatprep.subr.bf16.mxu0 0
  %386 = vmatpush1.bf16.msra.mxu0 0
  %387 = vmatprep.subr.bf16.mxu0 0
  %388 = vmatpush1.bf16.msra.mxu0 0
  %389 = vmatprep.subr.bf16.mxu0 0
  %390 = vmatpush1.bf16.msra.mxu0 0
  %391 = vmatprep.subr.bf16.mxu0 0
  %392 = vmatpush1.bf16.msra.mxu0 0
  %393 = vmatprep.subr.bf16.mxu0 0
  %394 = vmatpush1.bf16.msra.mxu0 0
  %395 = vmatprep.subr.bf16.mxu0 0
  %396 = vmatpush1.bf16.msra.mxu0 0
  %397 = vmatprep.subr.bf16.mxu0 0
  %398 = vmatpush1.bf16.msra.mxu0 0
  %399 = vmatprep.subr.bf16.mxu0 0
  %400 = vmatpush1.bf16.msra.mxu0 0
  %401 = vmatprep.subr.bf16.mxu0 0
  %402 = vmatpush1.bf16.msra.mxu0 0
  %403 = vmatprep.subr.bf16.mxu0 0
  %404 = vmatpush1.bf16.msra.mxu0 0
  %405 = vmatprep.subr.bf16.mxu0 0
  %406 = vmatpush1.bf16.msra.mxu0 0
  %407 = vmatprep.mubr.bf16.mxu0 0
  %408 = vmatmul.mubr.bf16.gmra.mrb[0].mxu0 %v280
  %v409 = vpop.f32.mrb[0].mxu0
  %v410 = vadd.f32 %v92, %v409
  %v411 = vpop.f32.mrb[0].mxu0
  %v412 = vpop.f32.mrb[0].mxu0
  %v413 = vadd.f32 %v92, %v412
  %v414 = vpop.f32.mrb[0].mxu0
  %415 = vmatprep.mubr.bf16.mxu0 0
  %416 = vmatmul.mubr.bf16.gmra.mrb[0].mxu0 %v283
  %v417 = vpop.f32.mrb[0].mxu0
  %v418 = vadd.f32 %v92, %v417
  %v419 = vpop.f32.mrb[0].mxu0
  %v420 = vpop.f32.mrb[0].mxu0
  %v421 = vadd.f32 %v92, %v420
  %v422 = vpop.f32.mrb[0].mxu0
  %423 = vmatprep.mubr.bf16.mxu0 0
  %424 = vmatmul.mubr.bf16.gmra.mrb[0].mxu0 %v286
  %v425 = vpop.f32.mrb[0].mxu0
  %v426 = vadd.f32 %v92, %v425
  %v427 = vpop.f32.mrb[0].mxu0
  %v428 = vpop.f32.mrb[0].mxu0
  %v429 = vadd.f32 %v92, %v428
  %v430 = vpop.f32.mrb[0].mxu0
  %431 = vmatprep.mubr.bf16.mxu0 0
  %432 = vmatmul.mubr.bf16.gmra.mrb[0].mxu0 %v289
  %v433 = vpop.f32.mrb[0].mxu0
  %v434 = vadd.f32 %v92, %v433
  %v435 = vpop.f32.mrb[0].mxu0
  %v436 = vpop.f32.mrb[0].mxu0
  %v437 = vadd.f32 %v92, %v436
  %v438 = vpop.f32.mrb[0].mxu0
  %439 = vmatprep.mubr.bf16.mxu0 0
  %440 = vmatmul.mubr.bf16.gmra.mrb[0].mxu0 %v292
  %v441 = vpop.f32.mrb[0].mxu0
  %v442 = vadd.f32 %v92, %v441
  %v443 = vpop.f32.mrb[0].mxu0
  %v444 = vpop.f32.mrb[0].mxu0
  %v445 = vadd.f32 %v92, %v444
  %v446 = vpop.f32.mrb[0].mxu0
  %447 = vmatprep.mubr.bf16.mxu0 0
  %448 = vmatmul.mubr.bf16.gmra.mrb[0].mxu0 %v295
  %v449 = vpop.f32.mrb[0].mxu0
  %v450 = vadd.f32 %v92, %v449
  %v451 = vpop.f32.mrb[0].mxu0
  %v452 = vpop.f32.mrb[0].mxu0
  %v453 = vadd.f32 %v92, %v452
  %v454 = vpop.f32.mrb[0].mxu0
  %455 = vmatprep.mubr.bf16.mxu0 0
  %456 = vmatmul.mubr.bf16.gmra.mrb[0].mxu0 %v298
  %v457 = vpop.f32.mrb[0].mxu0
  %v458 = vadd.f32 %v92, %v457
  %v459 = vpop.f32.mrb[0].mxu0
  %v460 = vpop.f32.mrb[0].mxu0
  %v461 = vadd.f32 %v92, %v460
  %v462 = vpop.f32.mrb[0].mxu0
  %463 = vmatprep.mubr.bf16.mxu0 0
  %464 = vmatmul.mubr.bf16.gmra.mrb[0].mxu0 %v301
  %v465 = vpop.f32.mrb[0].mxu0
  %v466 = vadd.f32 %v92, %v465
  %v467 = vpop.f32.mrb[0].mxu0
  %v468 = vpop.f32.mrb[0].mxu0
  %v469 = vadd.f32 %v92, %v468
  %v470 = vpop.f32.mrb[0].mxu0
  %471 = vmatprep.mubr.bf16.mxu0 0
  %472 = vmatmul.mubr.bf16.gmra.mrb[0].mxu0 %v304
  %v473 = vpop.f32.mrb[0].mxu0
  %v474 = vadd.f32 %v92, %v473
  %v475 = vpop.f32.mrb[0].mxu0
  %v476 = vpop.f32.mrb[0].mxu0
  %v477 = vadd.f32 %v92, %v476
  %v478 = vpop.f32.mrb[0].mxu0
  %479 = vmatprep.mubr.bf16.mxu0 0
  %480 = vmatmul.mubr.bf16.gmra.mrb[0].mxu0 %v307
  %v481 = vpop.f32.mrb[0].mxu0
  %v482 = vadd.f32 %v92, %v481
  %v483 = vpop.f32.mrb[0].mxu0
  %v484 = vpop.f32.mrb[0].mxu0
  %v485 = vadd.f32 %v92, %v484
  %v486 = vpop.f32.mrb[0].mxu0
  %487 = vmatprep.mubr.bf16.mxu0 0
  %488 = vmatmul.mubr.bf16.gmra.mrb[0].mxu0 %v310
  %v489 = vpop.f32.mrb[0].mxu0
  %v490 = vadd.f32 %v92, %v489
  %v491 = vpop.f32.mrb[0].mxu0
  %v492 = vpop.f32.mrb[0].mxu0
  %v493 = vadd.f32 %v92, %v492
  %v494 = vpop.f32.mrb[0].mxu0
  %495 = vmatprep.mubr.bf16.mxu0 0
  %496 = vmatmul.mubr.bf16.gmra.mrb[0].mxu0 %v313
  %v497 = vpop.f32.mrb[0].mxu0
  %v498 = vadd.f32 %v92, %v497
  %v499 = vpop.f32.mrb[0].mxu0
  %v500 = vpop.f32.mrb[0].mxu0
  %v501 = vadd.f32 %v92, %v500
  %v502 = vpop.f32.mrb[0].mxu0
  %503 = vmatprep.mubr.bf16.mxu0 0
  %504 = vmatmul.mubr.bf16.gmra.mrb[0].mxu0 %v316
  %v505 = vpop.f32.mrb[0].mxu0
  %v506 = vadd.f32 %v92, %v505
  %v507 = vpop.f32.mrb[0].mxu0
  %v508 = vpop.f32.mrb[0].mxu0
  %v509 = vadd.f32 %v92, %v508
  %v510 = vpop.f32.mrb[0].mxu0
  %511 = vmatprep.mubr.bf16.mxu0 0
  %512 = vmatmul.mubr.bf16.gmra.mrb[0].mxu0 %v319
  %v513 = vpop.f32.mrb[0].mxu0
  %v514 = vadd.f32 %v92, %v513
  %v515 = vpop.f32.mrb[0].mxu0
  %v516 = vpop.f32.mrb[0].mxu0
  %v517 = vadd.f32 %v92, %v516
  %v518 = vpop.f32.mrb[0].mxu0
  %519 = vmatprep.mubr.bf16.mxu0 0
  %520 = vmatmul.mubr.bf16.gmra.mrb[0].mxu0 %v322
  %v521 = vpop.f32.mrb[0].mxu0
  %v522 = vadd.f32 %v92, %v521
  %v523 = vpop.f32.mrb[0].mxu0
  %v524 = vpop.f32.mrb[0].mxu0
  %v525 = vadd.f32 %v92, %v524
  %v526 = vpop.f32.mrb[0].mxu0
  %527 = vmatprep.mubr.bf16.mxu0 0
  %528 = vmatmul.mubr.bf16.gmra.mrb[0].mxu0 %v325
  %v529 = vpop.f32.mrb[0].mxu0
  %v530 = vadd.f32 %v92, %v529
  %v531 = vpop.f32.mrb[0].mxu0
  %v532 = vpop.f32.mrb[0].mxu0
  %v533 = vadd.f32 %v92, %v532
  %v534 = vpop.f32.mrb[0].mxu0
  %535 = vmatprep.mubr.bf16.mxu0 0
  %536 = vmatmul.mubr.bf16.gmra.mrb[0].mxu0 %v328
  %v537 = vpop.f32.mrb[0].mxu0
  %v538 = vadd.f32 %v92, %v537
  %v539 = vpop.f32.mrb[0].mxu0
  %v540 = vpop.f32.mrb[0].mxu0
  %v541 = vadd.f32 %v92, %v540
  %v542 = vpop.f32.mrb[0].mxu0
  %543 = vmatprep.mubr.bf16.mxu0 0
  %544 = vmatmul.mubr.bf16.gmra.mrb[0].mxu0 %v331
  %v545 = vpop.f32.mrb[0].mxu0
  %v546 = vadd.f32 %v92, %v545
  %v547 = vpop.f32.mrb[0].mxu0
  %v548 = vpop.f32.mrb[0].mxu0
  %v549 = vadd.f32 %v92, %v548
  %v550 = vpop.f32.mrb[0].mxu0
  %551 = vmatprep.mubr.bf16.mxu0 0
  %552 = vmatmul.mubr.bf16.gmra.mrb[0].mxu0 %v334
  %v553 = vpop.f32.mrb[0].mxu0
  %v554 = vadd.f32 %v92, %v553
  %v555 = vpop.f32.mrb[0].mxu0
  %v556 = vpop.f32.mrb[0].mxu0
  %v557 = vadd.f32 %v92, %v556
  %v558 = vpop.f32.mrb[0].mxu0
  %559 = vmatprep.mubr.bf16.mxu0 0
  %560 = vmatmul.mubr.bf16.gmra.mrb[0].mxu0 %v337
  %v561 = vpop.f32.mrb[0].mxu0
  %v562 = vadd.f32 %v92, %v561
  %v563 = vpop.f32.mrb[0].mxu0
  %v564 = vpop.f32.mrb[0].mxu0
  %v565 = vadd.f32 %v92, %v564
  %v566 = vpop.f32.mrb[0].mxu0
  %567 = vmatprep.mubr.bf16.mxu0 0
  %568 = vmatmul.mubr.bf16.gmra.mrb[0].mxu0 %v340
  %v569 = vpop.f32.mrb[0].mxu0
  %v570 = vadd.f32 %v92, %v569
  %v571 = vpop.f32.mrb[0].mxu0
  %v572 = vpop.f32.mrb[0].mxu0
  %v573 = vadd.f32 %v92, %v572
  %v574 = vpop.f32.mrb[0].mxu0
  %575 = vmatprep.mubr.bf16.mxu0 0
  %576 = vmatmul.mubr.bf16.gmra.mrb[0].mxu0 %v343
  %v577 = vpop.f32.mrb[0].mxu0
  %v578 = vadd.f32 %v92, %v577
  %v579 = vpop.f32.mrb[0].mxu0
  %v580 = vpop.f32.mrb[0].mxu0
  %v581 = vadd.f32 %v92, %v580
  %v582 = vpop.f32.mrb[0].mxu0
  %583 = vmatprep.mubr.bf16.mxu0 0
  %584 = vmatmul.mubr.bf16.gmra.mrb[0].mxu0 %v346
  %v585 = vpop.f32.mrb[0].mxu0
  %v586 = vadd.f32 %v92, %v585
  %v587 = vpop.f32.mrb[0].mxu0
  %v588 = vpop.f32.mrb[0].mxu0
  %v589 = vadd.f32 %v92, %v588
  %v590 = vpop.f32.mrb[0].mxu0
  %591 = vmatprep.mubr.bf16.mxu0 0
  %592 = vmatmul.mubr.bf16.gmra.mrb[0].mxu0 %v349
  %v593 = vpop.f32.mrb[0].mxu0
  %v594 = vadd.f32 %v92, %v593
  %v595 = vpop.f32.mrb[0].mxu0
  %v596 = vpop.f32.mrb[0].mxu0
  %v597 = vadd.f32 %v92, %v596
  %v598 = vpop.f32.mrb[0].mxu0
  %599 = vmatprep.mubr.bf16.mxu0 0
  %600 = vmatmul.mubr.bf16.gmra.mrb[0].mxu0 %v352
  %v601 = vpop.f32.mrb[0].mxu0
  %v602 = vadd.f32 %v92, %v601
  %v603 = vpop.f32.mrb[0].mxu0
  %v604 = vpop.f32.mrb[0].mxu0
  %v605 = vadd.f32 %v92, %v604
  %v606 = vpop.f32.mrb[0].mxu0
  %607 = vmatprep.mubr.bf16.mxu0 0
  %608 = vmatmul.mubr.bf16.gmra.mrb[0].mxu0 %v355
  %v609 = vpop.f32.mrb[0].mxu0
  %v610 = vadd.f32 %v92, %v609
  %v611 = vpop.f32.mrb[0].mxu0
  %v612 = vpop.f32.mrb[0].mxu0
  %v613 = vadd.f32 %v92, %v612
  %v614 = vpop.f32.mrb[0].mxu0
  %615 = vmatprep.mubr.bf16.mxu0 0
  %616 = vmatmul.mubr.bf16.gmra.mrb[0].mxu0 %v358
  %v617 = vpop.f32.mrb[0].mxu0
  %v618 = vadd.f32 %v92, %v617
  %v619 = vpop.f32.mrb[0].mxu0
  %v620 = vpop.f32.mrb[0].mxu0
  %v621 = vadd.f32 %v92, %v620
  %v622 = vpop.f32.mrb[0].mxu0
  %623 = vmatprep.mubr.bf16.mxu0 0
  %624 = vmatmul.mubr.bf16.gmra.mrb[0].mxu0 %v361
  %v625 = vpop.f32.mrb[0].mxu0
  %v626 = vadd.f32 %v92, %v625
  %v627 = vpop.f32.mrb[0].mxu0
  %v628 = vpop.f32.mrb[0].mxu0
  %v629 = vadd.f32 %v92, %v628
  %v630 = vpop.f32.mrb[0].mxu0
  %631 = vmatprep.mubr.bf16.mxu0 0
  %632 = vmatmul.mubr.bf16.gmra.mrb[0].mxu0 %v364
  %v633 = vpop.f32.mrb[0].mxu0
  %v634 = vadd.f32 %v92, %v633
  %v635 = vpop.f32.mrb[0].mxu0
  %v636 = vpop.f32.mrb[0].mxu0
  %v637 = vadd.f32 %v92, %v636
  %v638 = vpop.f32.mrb[0].mxu0
  %639 = vmatprep.mubr.bf16.mxu0 0
  %640 = vmatmul.mubr.bf16.gmra.mrb[0].mxu0 %v367
  %v641 = vpop.f32.mrb[0].mxu0
  %v642 = vadd.f32 %v92, %v641
  %v643 = vpop.f32.mrb[0].mxu0
  %v644 = vpop.f32.mrb[0].mxu0
  %v645 = vadd.f32 %v92, %v644
  %v646 = vpop.f32.mrb[0].mxu0
  %647 = vmatprep.mubr.bf16.mxu0 0
  %648 = vmatmul.mubr.bf16.gmra.mrb[0].mxu0 %v370
  %v649 = vpop.f32.mrb[0].mxu0
  %v650 = vadd.f32 %v92, %v649
  %v651 = vpop.f32.mrb[0].mxu0
  %v652 = vpop.f32.mrb[0].mxu0
  %v653 = vadd.f32 %v92, %v652
  %v654 = vpop.f32.mrb[0].mxu0
  %655 = vmatprep.mubr.bf16.mxu0 0
  %656 = vmatmul.mubr.bf16.gmra.mrb[0].mxu0 %v373
  %v657 = vpop.f32.mrb[0].mxu0
  %v658 = vadd.f32 %v92, %v657
  %v659 = vpop.f32.mrb[0].mxu0
  %v660 = vpop.f32.mrb[0].mxu0
  %v661 = vadd.f32 %v92, %v660
  %v662 = vpop.f32.mrb[0].mxu0
  %663 = vdwg.mxu0
  %v664 = vmul.f32 %v410, 0.2
  %v665 = vmul.f32 %v413, 0.2
  %v666 = vmul.f32 %v418, 0.2
  %v667 = vmul.f32 %v421, 0.2
  %v668 = vmul.f32 %v426, 0.2
  %v669 = vmul.f32 %v429, 0.2
  %v670 = vmul.f32 %v434, 0.2
  %v671 = vmul.f32 %v437, 0.2
  %v672 = vmul.f32 %v442, 0.2
  %v673 = vmul.f32 %v445, 0.2
  %v674 = vmul.f32 %v450, 0.2
  %v675 = vmul.f32 %v453, 0.2
  %v676 = vmul.f32 %v458, 0.2
  %v677 = vmul.f32 %v461, 0.2
  %v678 = vmul.f32 %v466, 0.2
  %v679 = vmul.f32 %v469, 0.2
  %v680 = vmul.f32 %v474, 0.2
  %v681 = vmul.f32 %v477, 0.2
  %v682 = vmul.f32 %v482, 0.2
  %v683 = vmul.f32 %v485, 0.2
  %v684 = vmul.f32 %v490, 0.2
  %v685 = vmul.f32 %v493, 0.2
  %v686 = vmul.f32 %v498, 0.2
  %v687 = vmul.f32 %v501, 0.2
  %v688 = vmul.f32 %v506, 0.2
  %v689 = vmul.f32 %v509, 0.2
  %v690 = vmul.f32 %v514, 0.2
  %v691 = vmul.f32 %v517, 0.2
  %v692 = vmul.f32 %v522, 0.2
  %v693 = vmul.f32 %v525, 0.2
  %v694 = vmul.f32 %v530, 0.2
  %v695 = vmul.f32 %v533, 0.2
  %v696 = vmul.f32 %v538, 0.2
  %v697 = vmul.f32 %v541, 0.2
  %v698 = vmul.f32 %v546, 0.2
  %v699 = vmul.f32 %v549, 0.2
  %v700 = vmul.f32 %v554, 0.2
  %v701 = vmul.f32 %v557, 0.2
  %v702 = vmul.f32 %v562, 0.2
  %v703 = vmul.f32 %v565, 0.2
  %v704 = vmul.f32 %v570, 0.2
  %v705 = vmul.f32 %v573, 0.2
  %v706 = vmul.f32 %v578, 0.2
  %v707 = vmul.f32 %v581, 0.2
  %v708 = vmul.f32 %v586, 0.2
  %v709 = vmul.f32 %v589, 0.2
  %v710 = vmul.f32 %v594, 0.2
  %v711 = vmul.f32 %v597, 0.2
  %v712 = vmul.f32 %v602, 0.2
  %v713 = vmul.f32 %v605, 0.2
  %v714 = vmul.f32 %v610, 0.2
  %v715 = vmul.f32 %v613, 0.2
  %v716 = vmul.f32 %v618, 0.2
  %v717 = vmul.f32 %v621, 0.2
  %v718 = vmul.f32 %v626, 0.2
  %v719 = vmul.f32 %v629, 0.2
  %v720 = vmul.f32 %v634, 0.2
  %v721 = vmul.f32 %v637, 0.2
  %v722 = vmul.f32 %v642, 0.2
  %v723 = vmul.f32 %v645, 0.2
  %v724 = vmul.f32 %v650, 0.2
  %v725 = vmul.f32 %v653, 0.2
  %v726 = vmul.f32 %v658, 0.2
  %v727 = vmul.f32 %v661, 0.2
  %v728 = vmax.f32 %v410, %v664
  %v729 = vmax.f32 %v413, %v665
  %v730 = vmax.f32 %v418, %v666
  %v731 = vmax.f32 %v421, %v667
  %v732 = vmax.f32 %v426, %v668
  %v733 = vmax.f32 %v429, %v669
  %v734 = vmax.f32 %v434, %v670
  %v735 = vmax.f32 %v437, %v671
  %v736 = vmax.f32 %v442, %v672
  %v737 = vmax.f32 %v445, %v673
  %v738 = vmax.f32 %v450, %v674
  %v739 = vmax.f32 %v453, %v675
  %v740 = vmax.f32 %v458, %v676
  %v741 = vmax.f32 %v461, %v677
  %v742 = vmax.f32 %v466, %v678
  %v743 = vmax.f32 %v469, %v679
  %v744 = vmax.f32 %v474, %v680
  %v745 = vmax.f32 %v477, %v681
  %v746 = vmax.f32 %v482, %v682
  %v747 = vmax.f32 %v485, %v683
  %v748 = vmax.f32 %v490, %v684
  %v749 = vmax.f32 %v493, %v685
  %v750 = vmax.f32 %v498, %v686
  %v751 = vmax.f32 %v501, %v687
  %v752 = vmax.f32 %v506, %v688
  %v753 = vmax.f32 %v509, %v689
  %v754 = vmax.f32 %v514, %v690
  %v755 = vmax.f32 %v517, %v691
  %v756 = vmax.f32 %v522, %v692
  %v757 = vmax.f32 %v525, %v693
  %v758 = vmax.f32 %v530, %v694
  %v759 = vmax.f32 %v533, %v695
  %v760 = vmax.f32 %v538, %v696
  %v761 = vmax.f32 %v541, %v697
  %v762 = vmax.f32 %v546, %v698
  %v763 = vmax.f32 %v549, %v699
  %v764 = vmax.f32 %v554, %v700
  %v765 = vmax.f32 %v557, %v701
  %v766 = vmax.f32 %v562, %v702
  %v767 = vmax.f32 %v565, %v703
  %v768 = vmax.f32 %v570, %v704
  %v769 = vmax.f32 %v573, %v705
  %v770 = vmax.f32 %v578, %v706
  %v771 = vmax.f32 %v581, %v707
  %v772 = vmax.f32 %v586, %v708
  %v773 = vmax.f32 %v589, %v709
  %v774 = vmax.f32 %v594, %v710
  %v775 = vmax.f32 %v597, %v711
  %v776 = vmax.f32 %v602, %v712
  %v777 = vmax.f32 %v605, %v713
  %v778 = vmax.f32 %v610, %v714
  %v779 = vmax.f32 %v613, %v715
  %v780 = vmax.f32 %v618, %v716
  %v781 = vmax.f32 %v621, %v717
  %v782 = vmax.f32 %v626, %v718
  %v783 = vmax.f32 %v629, %v719
  %v784 = vmax.f32 %v634, %v720
  %v785 = vmax.f32 %v637, %v721
  %v786 = vmax.f32 %v642, %v722
  %v787 = vmax.f32 %v645, %v723
  %v788 = vmax.f32 %v650, %v724
  %v789 = vmax.f32 %v653, %v725
  %v790 = vmax.f32 %v658, %v726
  %v791 = vmax.f32 %v661, %v727
  %v792 = vpack.c.bf16 %v729, %v728
  %v793 = vpack.c.bf16 %v731, %v730
  %v794 = vpack.c.bf16 %v733, %v732
  %v795 = vpack.c.bf16 %v735, %v734
  %v796 = vpack.c.bf16 %v737, %v736
  %v797 = vpack.c.bf16 %v739, %v738
  %v798 = vpack.c.bf16 %v741, %v740
  %v799 = vpack.c.bf16 %v743, %v742
  %v800 = vpack.c.bf16 %v745, %v744
  %v801 = vpack.c.bf16 %v747, %v746
  %v802 = vpack.c.bf16 %v749, %v748
  %v803 = vpack.c.bf16 %v751, %v750
  %v804 = vpack.c.bf16 %v753, %v752
  %v805 = vpack.c.bf16 %v755, %v754
  %v806 = vpack.c.bf16 %v757, %v756
  %v807 = vpack.c.bf16 %v759, %v758
  %v808 = vpack.c.bf16 %v761, %v760
  %v809 = vpack.c.bf16 %v763, %v762
  %v810 = vpack.c.bf16 %v765, %v764
  %v811 = vpack.c.bf16 %v767, %v766
  %v812 = vpack.c.bf16 %v769, %v768
  %v813 = vpack.c.bf16 %v771, %v770
  %v814 = vpack.c.bf16 %v773, %v772
  %v815 = vpack.c.bf16 %v775, %v774
  %v816 = vpack.c.bf16 %v777, %v776
  %v817 = vpack.c.bf16 %v779, %v778
  %v818 = vpack.c.bf16 %v781, %v780
  %v819 = vpack.c.bf16 %v783, %v782
  %v820 = vpack.c.bf16 %v785, %v784
  %v821 = vpack.c.bf16 %v787, %v786
  %v822 = vpack.c.bf16 %v789, %v788
  %v823 = vpack.c.bf16 %v791, %v790
  %v856 = vunpack.c.l.b16 %v792
  %v857 = vunpack.c.h.b16 %v792
  %v858 = vunpack.c.l.b16 %v793
  %v859 = vunpack.c.h.b16 %v793
  %v860 = vunpack.c.l.b16 %v794
  %v861 = vunpack.c.h.b16 %v794
  %v862 = vunpack.c.l.b16 %v795
  %v863 = vunpack.c.h.b16 %v795
  %v864 = vunpack.c.l.b16 %v796
  %v865 = vunpack.c.h.b16 %v796
  %v866 = vunpack.c.l.b16 %v797
  %v867 = vunpack.c.h.b16 %v797
  %v868 = vunpack.c.l.b16 %v798
  %v869 = vunpack.c.h.b16 %v798
  %v870 = vunpack.c.l.b16 %v799
  %v871 = vunpack.c.h.b16 %v799
  %v872 = vunpack.c.l.b16 %v800
  %v873 = vunpack.c.h.b16 %v800
  %v874 = vunpack.c.l.b16 %v801
  %v875 = vunpack.c.h.b16 %v801
  %v876 = vunpack.c.l.b16 %v802
  %v877 = vunpack.c.h.b16 %v802
  %v878 = vunpack.c.l.b16 %v803
  %v879 = vunpack.c.h.b16 %v803
  %v880 = vunpack.c.l.b16 %v804
  %v881 = vunpack.c.h.b16 %v804
  %v882 = vunpack.c.l.b16 %v805
  %v883 = vunpack.c.h.b16 %v805
  %v884 = vunpack.c.l.b16 %v806
  %v885 = vunpack.c.h.b16 %v806
  %v886 = vunpack.c.l.b16 %v807
  %v887 = vunpack.c.h.b16 %v807
  %v888 = vunpack.c.l.b16 %v808
  %v889 = vunpack.c.h.b16 %v808
  %v890 = vunpack.c.l.b16 %v809
  %v891 = vunpack.c.h.b16 %v809
  %v892 = vunpack.c.l.b16 %v810
  %v893 = vunpack.c.h.b16 %v810
  %v894 = vunpack.c.l.b16 %v811
  %v895 = vunpack.c.h.b16 %v811
  %v896 = vunpack.c.l.b16 %v812
  %v897 = vunpack.c.h.b16 %v812
  %v898 = vunpack.c.l.b16 %v813
  %v899 = vunpack.c.h.b16 %v813
  %v900 = vunpack.c.l.b16 %v814
  %v901 = vunpack.c.h.b16 %v814
  %v902 = vunpack.c.l.b16 %v815
  %v903 = vunpack.c.h.b16 %v815
  %v904 = vunpack.c.l.b16 %v816
  %v905 = vunpack.c.h.b16 %v816
  %v906 = vunpack.c.l.b16 %v817
  %v907 = vunpack.c.h.b16 %v817
  %v908 = vunpack.c.l.b16 %v818
  %v909 = vunpack.c.h.b16 %v818
  %v910 = vunpack.c.l.b16 %v819
  %v911 = vunpack.c.h.b16 %v819
  %v912 = vunpack.c.l.b16 %v820
  %v913 = vunpack.c.h.b16 %v820
  %v914 = vunpack.c.l.b16 %v821
  %v915 = vunpack.c.h.b16 %v821
  %v916 = vunpack.c.l.b16 %v822
  %v917 = vunpack.c.h.b16 %v822
  %v918 = vunpack.c.l.b16 %v823
  %v919 = vunpack.c.h.b16 %v823
  %v920 = vpack.c.b16 %v856, %v856
  %v921 = vpack.c.b16 %v857, %v857
  %v922 = vpack.c.b16 %v858, %v858
  %v923 = vpack.c.b16 %v859, %v859
  %v924 = vpack.c.b16 %v860, %v860
  %v925 = vpack.c.b16 %v861, %v861
  %v926 = vpack.c.b16 %v862, %v862
  %v927 = vpack.c.b16 %v863, %v863
  %v928 = vpack.c.b16 %v864, %v864
  %v929 = vpack.c.b16 %v865, %v865
  %v930 = vpack.c.b16 %v866, %v866
  %v931 = vpack.c.b16 %v867, %v867
  %v932 = vpack.c.b16 %v868, %v868
  %v933 = vpack.c.b16 %v869, %v869
  %v934 = vpack.c.b16 %v870, %v870
  %v935 = vpack.c.b16 %v871, %v871
  %v936 = vpack.c.b16 %v872, %v872
  %v937 = vpack.c.b16 %v873, %v873
  %v938 = vpack.c.b16 %v874, %v874
  %v939 = vpack.c.b16 %v875, %v875
  %v940 = vpack.c.b16 %v876, %v876
  %v941 = vpack.c.b16 %v877, %v877
  %v942 = vpack.c.b16 %v878, %v878
  %v943 = vpack.c.b16 %v879, %v879
  %v944 = vpack.c.b16 %v880, %v880
  %v945 = vpack.c.b16 %v881, %v881
  %v946 = vpack.c.b16 %v882, %v882
  %v947 = vpack.c.b16 %v883, %v883
  %v948 = vpack.c.b16 %v884, %v884
  %v949 = vpack.c.b16 %v885, %v885
  %v950 = vpack.c.b16 %v886, %v886
  %v951 = vpack.c.b16 %v887, %v887
  %v952 = vpack.c.b16 %v888, %v888
  %v953 = vpack.c.b16 %v889, %v889
  %v954 = vpack.c.b16 %v890, %v890
  %v955 = vpack.c.b16 %v891, %v891
  %v956 = vpack.c.b16 %v892, %v892
  %v957 = vpack.c.b16 %v893, %v893
  %v958 = vpack.c.b16 %v894, %v894
  %v959 = vpack.c.b16 %v895, %v895
  %v960 = vpack.c.b16 %v896, %v896
  %v961 = vpack.c.b16 %v897, %v897
  %v962 = vpack.c.b16 %v898, %v898
  %v963 = vpack.c.b16 %v899, %v899
  %v964 = vpack.c.b16 %v900, %v900
  %v965 = vpack.c.b16 %v901, %v901
  %v966 = vpack.c.b16 %v902, %v902
  %v967 = vpack.c.b16 %v903, %v903
  %v968 = vpack.c.b16 %v904, %v904
  %v969 = vpack.c.b16 %v905, %v905
  %v970 = vpack.c.b16 %v906, %v906
  %v971 = vpack.c.b16 %v907, %v907
  %v972 = vpack.c.b16 %v908, %v908
  %v973 = vpack.c.b16 %v909, %v909
  %v974 = vpack.c.b16 %v910, %v910
  %v975 = vpack.c.b16 %v911, %v911
  %v976 = vpack.c.b16 %v912, %v912
  %v977 = vpack.c.b16 %v913, %v913
  %v978 = vpack.c.b16 %v914, %v914
  %v979 = vpack.c.b16 %v915, %v915
  %v980 = vpack.c.b16 %v916, %v916
  %v981 = vpack.c.b16 %v917, %v917
  %v982 = vpack.c.b16 %v918, %v918
  %v983 = vpack.c.b16 %v919, %v919
  %1048 = vst [vmem:[%s3] sm:$0xf] %v920
  %1049 = vst [vmem:[%s3 + $0x4] sm:$0xf] %v921
  %1050 = vst [vmem:[%s3 + $0x8] sm:$0xf] %v922
  %1051 = vst [vmem:[%s3 + $0xc] sm:$0xf] %v923
  %1052 = vst [vmem:[%s3 + $0x10] sm:$0xf] %v924
  %1053 = vst [vmem:[%s3 + $0x14] sm:$0xf] %v925
  %1054 = vst [vmem:[%s3 + $0x18] sm:$0xf] %v926
  %1055 = vst [vmem:[%s3 + $0x1c] sm:$0xf] %v927
  %1056 = vst [vmem:[%s3 + $0x20] sm:$0xf] %v928
  %1057 = vst [vmem:[%s3 + $0x24] sm:$0xf] %v929
  %1058 = vst [vmem:[%s3 + $0x28] sm:$0xf] %v930
  %1059 = vst [vmem:[%s3 + $0x2c] sm:$0xf] %v931
  %1060 = vst [vmem:[%s3 + $0x30] sm:$0xf] %v932
  %1061 = vst [vmem:[%s3 + $0x34] sm:$0xf] %v933
  %1062 = vst [vmem:[%s3 + $0x38] sm:$0xf] %v934
  %1063 = vst [vmem:[%s3 + $0x3c] sm:$0xf] %v935
  %1064 = vst [vmem:[%s3 + $0x40] sm:$0xf] %v936
  %1065 = vst [vmem:[%s3 + $0x44] sm:$0xf] %v937
  %1066 = vst [vmem:[%s3 + $0x48] sm:$0xf] %v938
  %1067 = vst [vmem:[%s3 + $0x4c] sm:$0xf] %v939
  %1068 = vst [vmem:[%s3 + $0x50] sm:$0xf] %v940
  %1069 = vst [vmem:[%s3 + $0x54] sm:$0xf] %v941
  %1070 = vst [vmem:[%s3 + $0x58] sm:$0xf] %v942
  %1071 = vst [vmem:[%s3 + $0x5c] sm:$0xf] %v943
  %1072 = vst [vmem:[%s3 + $0x60] sm:$0xf] %v944
  %1073 = vst [vmem:[%s3 + $0x64] sm:$0xf] %v945
  %1074 = vst [vmem:[%s3 + $0x68] sm:$0xf] %v946
  %1075 = vst [vmem:[%s3 + $0x6c] sm:$0xf] %v947
  %1076 = vst [vmem:[%s3 + $0x70] sm:$0xf] %v948
  %1077 = vst [vmem:[%s3 + $0x74] sm:$0xf] %v949
  %1078 = vst [vmem:[%s3 + $0x78] sm:$0xf] %v950
  %1079 = vst [vmem:[%s3 + $0x7c] sm:$0xf] %v951
  %1080 = vst [vmem:[%s3 + $0x80] sm:$0xf] %v952
  %1081 = vst [vmem:[%s3 + $0x84] sm:$0xf] %v953
  %1082 = vst [vmem:[%s3 + $0x88] sm:$0xf] %v954
  %1083 = vst [vmem:[%s3 + $0x8c] sm:$0xf] %v955
  %1084 = vst [vmem:[%s3 + $0x90] sm:$0xf] %v956
  %1085 = vst [vmem:[%s3 + $0x94] sm:$0xf] %v957
  %1086 = vst [vmem:[%s3 + $0x98] sm:$0xf] %v958
  %1087 = vst [vmem:[%s3 + $0x9c] sm:$0xf] %v959
  %1088 = vst [vmem:[%s3 + $0xa0] sm:$0xf] %v960
  %1089 = vst [vmem:[%s3 + $0xa4] sm:$0xf] %v961
  %1090 = vst [vmem:[%s3 + $0xa8] sm:$0xf] %v962
  %1091 = vst [vmem:[%s3 + $0xac] sm:$0xf] %v963
  %1092 = vst [vmem:[%s3 + $0xb0] sm:$0xf] %v964
  %1093 = vst [vmem:[%s3 + $0xb4] sm:$0xf] %v965
  %1094 = vst [vmem:[%s3 + $0xb8] sm:$0xf] %v966
  %1095 = vst [vmem:[%s3 + $0xbc] sm:$0xf] %v967
  %1096 = vst [vmem:[%s3 + $0xc0] sm:$0xf] %v968
  %1097 = vst [vmem:[%s3 + $0xc4] sm:$0xf] %v969
  %1098 = vst [vmem:[%s3 + $0xc8] sm:$0xf] %v970
  %1099 = vst [vmem:[%s3 + $0xcc] sm:$0xf] %v971
  %1100 = vst [vmem:[%s3 + $0xd0] sm:$0xf] %v972
  %1101 = vst [vmem:[%s3 + $0xd4] sm:$0xf] %v973
  %1102 = vst [vmem:[%s3 + $0xd8] sm:$0xf] %v974
  %1103 = vst [vmem:[%s3 + $0xdc] sm:$0xf] %v975
  %1104 = vst [vmem:[%s3 + $0xe0] sm:$0xf] %v976
  %1105 = vst [vmem:[%s3 + $0xe4] sm:$0xf] %v977
  %1106 = vst [vmem:[%s3 + $0xe8] sm:$0xf] %v978
  %1107 = vst [vmem:[%s3 + $0xec] sm:$0xf] %v979
  %1108 = vst [vmem:[%s3 + $0xf0] sm:$0xf] %v980
  %1109 = vst [vmem:[%s3 + $0xf4] sm:$0xf] %v981
  %1110 = vst [vmem:[%s3 + $0xf8] sm:$0xf] %v982
  %1111 = vst [vmem:[%s3 + $0xfc] sm:$0xf] %v983
  // Predicated region
  $region14: #{wang2020_discriminator_forward.5} parent=0 // pred_check
    _
  $region15: #{wang2020_discriminator_forward.5} parent=0 // pred_check_branch
    %1113 = sbr.rel (0) target = $region17
  $region16: #{wang2020_discriminator_forward.5} parent=0 // pred_region
    _
  $region17: #{wang2020_discriminator_forward.5} parent=0 // pred_fallthru
    _
  // Predicated region
  $region18: #{wang2020_discriminator_forward.5} parent=0 // pred_check
    _
  $region19: #{wang2020_discriminator_forward.5} parent=0 // pred_check_branch
    %1115 = sbr.rel (0) target = $region21
  $region20: #{wang2020_discriminator_forward.5} parent=0 // pred_region
    _
  $region21: #{wang2020_discriminator_forward.5} parent=0 // pred_fallthru
    _

// kernel: wang2020_discriminator_forward.6
$region0: #{wang2020_discriminator_forward.6}
  #allocation0 [shape = 'u32[]', space=smem, size = 0x4, offset = 0x4, fixed_abs, tag = 'smem constant byte address 0x4 - core index']
  #allocation1 [shape = 'u32[144,128]{1,0:T(1,128)}', space=vmem, size = 0x12000, scoped, tag = 'internal scratch']
  %s0 = inlined_call_operand.vmem [shape: bf16[128,256], index: 0, kind: input, shape index: {}]
  %s1 = inlined_call_operand.vmem [shape: bf16[256,128], index: 1, kind: input, shape index: {}]
  %s2 = inlined_call_operand.vmem [shape: f32[1,128], index: 2, kind: input, shape index: {}]
  %s3 = inlined_call_operand.vmem [shape: f32[1,128], index: 3, kind: input, shape index: {}]
  %s4 = inlined_call_operand.vmem [shape: bf16[128,128], index: 4, kind: output, shape index: {}]
  %s5 = sld [smem:[#allocation0]]
  $region26: #{wang2020_discriminator_forward.6} parent=0
    _
  %s7 = ssub.s32 1, %s5
  %s8 = scalar_select 0, %s7, %s5
  // Predicated region
  $region2: #{wang2020_discriminator_forward.6} parent=0 // pred_check
    _
  $region3: #{wang2020_discriminator_forward.6} parent=0 // pred_check_branch
    %10 = sbr.rel (0) target = $region5
  $region4: #{wang2020_discriminator_forward.6} parent=0 // pred_region
    _
  $region5: #{wang2020_discriminator_forward.6} parent=0 // pred_fallthru
    _
  // Predicated region
  $region6: #{wang2020_discriminator_forward.6} parent=0 // pred_check
    _
  $region7: #{wang2020_discriminator_forward.6} parent=0 // pred_check_branch
    %12 = sbr.rel (0) target = $region9
  $region8: #{wang2020_discriminator_forward.6} parent=0 // pred_region
    _
  $region9: #{wang2020_discriminator_forward.6} parent=0 // pred_fallthru
    _
  // Predicated region
  $region10: #{wang2020_discriminator_forward.6} parent=0 // pred_check
    _
  $region11: #{wang2020_discriminator_forward.6} parent=0 // pred_check_branch
    %14 = sbr.rel (0) target = $region13
  $region12: #{wang2020_discriminator_forward.6} parent=0 // pred_region
    _
  $region13: #{wang2020_discriminator_forward.6} parent=0 // pred_fallthru
    _
  // Predicated region
  $region14: #{wang2020_discriminator_forward.6} parent=0 // pred_check
    _
  $region15: #{wang2020_discriminator_forward.6} parent=0 // pred_check_branch
    %16 = sbr.rel (0) target = $region17
  $region16: #{wang2020_discriminator_forward.6} parent=0 // pred_region
    _
  $region17: #{wang2020_discriminator_forward.6} parent=0 // pred_fallthru
    _
  %v18 = vld [vmem:[%s0] sm:$0xff]
  %v19 = vld [vmem:[%s0 + $0x8] sm:$0xff]
  %v20 = vld [vmem:[%s0 + $0x10] sm:$0xff]
  %v21 = vld [vmem:[%s0 + $0x18] sm:$0xff]
  %v22 = vld [vmem:[%s0 + $0x20] sm:$0xff]
  %v23 = vld [vmem:[%s0 + $0x28] sm:$0xff]
  %v24 = vld [vmem:[%s0 + $0x30] sm:$0xff]
  %v25 = vld [vmem:[%s0 + $0x38] sm:$0xff]
  %v26 = vld [vmem:[%s0 + $0x40] sm:$0xff]
  %v27 = vld [vmem:[%s0 + $0x48] sm:$0xff]
  %v28 = vld [vmem:[%s0 + $0x50] sm:$0xff]
  %v29 = vld [vmem:[%s0 + $0x58] sm:$0xff]
  %v30 = vld [vmem:[%s0 + $0x60] sm:$0xff]
  %v31 = vld [vmem:[%s0 + $0x68] sm:$0xff]
  %v32 = vld [vmem:[%s0 + $0x70] sm:$0xff]
  %v33 = vld [vmem:[%s0 + $0x78] sm:$0xff]
  %v34 = vld [vmem:[%s1] sm:$0xf]
  %v35 = vld [vmem:[%s1 + $0x4] sm:$0xf]
  %v36 = vld [vmem:[%s1 + $0x8] sm:$0xf]
  %v37 = vld [vmem:[%s1 + $0xc] sm:$0xf]
  %v38 = vld [vmem:[%s1 + $0x10] sm:$0xf]
  %v39 = vld [vmem:[%s1 + $0x14] sm:$0xf]
  %v40 = vld [vmem:[%s1 + $0x18] sm:$0xf]
  %v41 = vld [vmem:[%s1 + $0x1c] sm:$0xf]
  %v42 = vld [vmem:[%s1 + $0x20] sm:$0xf]
  %v43 = vld [vmem:[%s1 + $0x24] sm:$0xf]
  %v44 = vld [vmem:[%s1 + $0x28] sm:$0xf]
  %v45 = vld [vmem:[%s1 + $0x2c] sm:$0xf]
  %v46 = vld [vmem:[%s1 + $0x30] sm:$0xf]
  %v47 = vld [vmem:[%s1 + $0x34] sm:$0xf]
  %v48 = vld [vmem:[%s1 + $0x38] sm:$0xf]
  %v49 = vld [vmem:[%s1 + $0x3c] sm:$0xf]
  %v50 = vld [vmem:[%s1 + $0x40] sm:$0xf]
  %v51 = vld [vmem:[%s1 + $0x44] sm:$0xf]
  %v52 = vld [vmem:[%s1 + $0x48] sm:$0xf]
  %v53 = vld [vmem:[%s1 + $0x4c] sm:$0xf]
  %v54 = vld [vmem:[%s1 + $0x50] sm:$0xf]
  %v55 = vld [vmem:[%s1 + $0x54] sm:$0xf]
  %v56 = vld [vmem:[%s1 + $0x58] sm:$0xf]
  %v57 = vld [vmem:[%s1 + $0x5c] sm:$0xf]
  %v58 = vld [vmem:[%s1 + $0x60] sm:$0xf]
  %v59 = vld [vmem:[%s1 + $0x64] sm:$0xf]
  %v60 = vld [vmem:[%s1 + $0x68] sm:$0xf]
  %v61 = vld [vmem:[%s1 + $0x6c] sm:$0xf]
  %v62 = vld [vmem:[%s1 + $0x70] sm:$0xf]
  %v63 = vld [vmem:[%s1 + $0x74] sm:$0xf]
  %v64 = vld [vmem:[%s1 + $0x78] sm:$0xf]
  %v65 = vld [vmem:[%s1 + $0x7c] sm:$0xf]
  %v82 = vunpack.c.l.b16 %v18
  %v83 = vunpack.c.h.b16 %v18
  %v84 = vunpack.c.l.b16 %v19
  %v85 = vunpack.c.h.b16 %v19
  %v86 = vunpack.c.l.b16 %v20
  %v87 = vunpack.c.h.b16 %v20
  %v88 = vunpack.c.l.b16 %v21
  %v89 = vunpack.c.h.b16 %v21
  %v90 = vunpack.c.l.b16 %v22
  %v91 = vunpack.c.h.b16 %v22
  %v92 = vunpack.c.l.b16 %v23
  %v93 = vunpack.c.h.b16 %v23
  %v94 = vunpack.c.l.b16 %v24
  %v95 = vunpack.c.h.b16 %v24
  %v96 = vunpack.c.l.b16 %v25
  %v97 = vunpack.c.h.b16 %v25
  %v98 = vunpack.c.l.b16 %v26
  %v99 = vunpack.c.h.b16 %v26
  %v100 = vunpack.c.l.b16 %v27
  %v101 = vunpack.c.h.b16 %v27
  %v102 = vunpack.c.l.b16 %v28
  %v103 = vunpack.c.h.b16 %v28
  %v104 = vunpack.c.l.b16 %v29
  %v105 = vunpack.c.h.b16 %v29
  %v106 = vunpack.c.l.b16 %v30
  %v107 = vunpack.c.h.b16 %v30
  %v108 = vunpack.c.l.b16 %v31
  %v109 = vunpack.c.h.b16 %v31
  %v110 = vunpack.c.l.b16 %v32
  %v111 = vunpack.c.h.b16 %v32
  %v112 = vunpack.c.l.b16 %v33
  %v113 = vunpack.c.h.b16 %v33
  %v114 = vpack.c.b16 %v84, %v82
  %v115 = vpack.c.b16 %v85, %v83
  %v116 = vpack.c.b16 %v88, %v86
  %v117 = vpack.c.b16 %v89, %v87
  %v118 = vpack.c.b16 %v92, %v90
  %v119 = vpack.c.b16 %v93, %v91
  %v120 = vpack.c.b16 %v96, %v94
  %v121 = vpack.c.b16 %v97, %v95
  %v122 = vpack.c.b16 %v100, %v98
  %v123 = vpack.c.b16 %v101, %v99
  %v124 = vpack.c.b16 %v104, %v102
  %v125 = vpack.c.b16 %v105, %v103
  %v126 = vpack.c.b16 %v108, %v106
  %v127 = vpack.c.b16 %v109, %v107
  %v128 = vpack.c.b16 %v112, %v110
  %v129 = vpack.c.b16 %v113, %v111
  %v178 = vunpack.c.l.b16 %v34
  %v179 = vunpack.c.l.b16 %v35
  %v180 = vunpack.c.l.b16 %v36
  %v181 = vunpack.c.l.b16 %v37
  %v182 = vunpack.c.l.b16 %v38
  %v183 = vunpack.c.l.b16 %v39
  %v184 = vunpack.c.l.b16 %v40
  %v185 = vunpack.c.l.b16 %v41
  %v186 = vunpack.c.l.b16 %v42
  %v187 = vunpack.c.l.b16 %v43
  %v188 = vunpack.c.l.b16 %v44
  %v189 = vunpack.c.l.b16 %v45
  %v190 = vunpack.c.l.b16 %v46
  %v191 = vunpack.c.l.b16 %v47
  %v192 = vunpack.c.l.b16 %v48
  %v193 = vunpack.c.l.b16 %v49
  %v194 = vunpack.c.l.b16 %v50
  %v195 = vunpack.c.l.b16 %v51
  %v196 = vunpack.c.l.b16 %v52
  %v197 = vunpack.c.l.b16 %v53
  %v198 = vunpack.c.l.b16 %v54
  %v199 = vunpack.c.l.b16 %v55
  %v200 = vunpack.c.l.b16 %v56
  %v201 = vunpack.c.l.b16 %v57
  %v202 = vunpack.c.l.b16 %v58
  %v203 = vunpack.c.l.b16 %v59
  %v204 = vunpack.c.l.b16 %v60
  %v205 = vunpack.c.l.b16 %v61
  %v206 = vunpack.c.l.b16 %v62
  %v207 = vunpack.c.l.b16 %v63
  %v208 = vunpack.c.l.b16 %v64
  %v209 = vunpack.c.l.b16 %v65
  %v210 = vpack.c.b16 %v179, %v178
  %v211 = vpack.c.b16 %v181, %v180
  %v212 = vpack.c.b16 %v183, %v182
  %v213 = vpack.c.b16 %v185, %v184
  %v214 = vpack.c.b16 %v187, %v186
  %v215 = vpack.c.b16 %v189, %v188
  %v216 = vpack.c.b16 %v191, %v190
  %v217 = vpack.c.b16 %v193, %v192
  %v218 = vpack.c.b16 %v195, %v194
  %v219 = vpack.c.b16 %v197, %v196
  %v220 = vpack.c.b16 %v199, %v198
  %v221 = vpack.c.b16 %v201, %v200
  %v222 = vpack.c.b16 %v203, %v202
  %v223 = vpack.c.b16 %v205, %v204
  %v224 = vpack.c.b16 %v207, %v206
  %v225 = vpack.c.b16 %v209, %v208
  %242 = vmatprep.subr.bf16.mxu0 0
  %243 = vmatpush1.bf16.msra.mxu0 %v210
  %244 = vmatprep.subr.bf16.mxu0 0
  %245 = vmatpush1.bf16.msra.mxu0 %v211
  %246 = vmatprep.subr.bf16.mxu0 0
  %247 = vmatpush1.bf16.msra.mxu0 %v212
  %248 = vmatprep.subr.bf16.mxu0 0
  %249 = vmatpush1.bf16.msra.mxu0 %v213
  %250 = vmatprep.subr.bf16.mxu0 0
  %251 = vmatpush1.bf16.msra.mxu0 %v214
  %252 = vmatprep.subr.bf16.mxu0 0
  %253 = vmatpush1.bf16.msra.mxu0 %v215
  %254 = vmatprep.subr.bf16.mxu0 0
  %255 = vmatpush1.bf16.msra.mxu0 %v216
  %256 = vmatprep.subr.bf16.mxu0 0
  %257 = vmatpush1.bf16.msra.mxu0 %v217
  %258 = vmatprep.subr.bf16.mxu0 0
  %259 = vmatpush1.bf16.msra.mxu0 %v218
  %260 = vmatprep.subr.bf16.mxu0 0
  %261 = vmatpush1.bf16.msra.mxu0 %v219
  %262 = vmatprep.subr.bf16.mxu0 0
  %263 = vmatpush1.bf16.msra.mxu0 %v220
  %264 = vmatprep.subr.bf16.mxu0 0
  %265 = vmatpush1.bf16.msra.mxu0 %v221
  %266 = vmatprep.subr.bf16.mxu0 0
  %267 = vmatpush1.bf16.msra.mxu0 %v222
  %268 = vmatprep.subr.bf16.mxu0 0
  %269 = vmatpush1.bf16.msra.mxu0 %v223
  %270 = vmatprep.subr.bf16.mxu0 0
  %271 = vmatpush1.bf16.msra.mxu0 %v224
  %272 = vmatprep.subr.bf16.mxu0 0
  %273 = vmatpush1.bf16.msra.mxu0 %v225
  %274 = vmatprep.mubr.bf16.mxu0 %v115
  %275 = vmatmul.mubr.bf16.gmra.mrb[0].mxu0 %v114
  %v276 = vpop.f32.mrb[0].mxu0
  %v277 = vadd.f32 0.0, %v276
  %v278 = vpop.f32.mrb[0].mxu0
  %v279 = vpop.f32.mrb[0].mxu0
  %v280 = vadd.f32 0.0, %v279
  %v281 = vpop.f32.mrb[0].mxu0
  %282 = vmatprep.mubr.bf16.mxu0 %v117
  %283 = vmatmul.mubr.bf16.gmra.mrb[0].mxu0 %v116
  %v284 = vpop.f32.mrb[0].mxu0
  %v285 = vadd.f32 0.0, %v284
  %v286 = vpop.f32.mrb[0].mxu0
  %v287 = vpop.f32.mrb[0].mxu0
  %v288 = vadd.f32 0.0, %v287
  %v289 = vpop.f32.mrb[0].mxu0
  %290 = vmatprep.mubr.bf16.mxu0 %v119
  %291 = vmatmul.mubr.bf16.gmra.mrb[0].mxu0 %v118
  %v292 = vpop.f32.mrb[0].mxu0
  %v293 = vadd.f32 0.0, %v292
  %v294 = vpop.f32.mrb[0].mxu0
  %v295 = vpop.f32.mrb[0].mxu0
  %v296 = vadd.f32 0.0, %v295
  %v297 = vpop.f32.mrb[0].mxu0
  %298 = vmatprep.mubr.bf16.mxu0 %v121
  %299 = vmatmul.mubr.bf16.gmra.mrb[0].mxu0 %v120
  %v300 = vpop.f32.mrb[0].mxu0
  %v301 = vadd.f32 0.0, %v300
  %v302 = vpop.f32.mrb[0].mxu0
  %v303 = vpop.f32.mrb[0].mxu0
  %v304 = vadd.f32 0.0, %v303
  %v305 = vpop.f32.mrb[0].mxu0
  %306 = vmatprep.mubr.bf16.mxu0 %v123
  %307 = vmatmul.mubr.bf16.gmra.mrb[0].mxu0 %v122
  %v308 = vpop.f32.mrb[0].mxu0
  %v309 = vadd.f32 0.0, %v308
  %v310 = vpop.f32.mrb[0].mxu0
  %v311 = vpop.f32.mrb[0].mxu0
  %v312 = vadd.f32 0.0, %v311
  %v313 = vpop.f32.mrb[0].mxu0
  %314 = vmatprep.mubr.bf16.mxu0 %v125
  %315 = vmatmul.mubr.bf16.gmra.mrb[0].mxu0 %v124
  %v316 = vpop.f32.mrb[0].mxu0
  %v317 = vadd.f32 0.0, %v316
  %v318 = vpop.f32.mrb[0].mxu0
  %v319 = vpop.f32.mrb[0].mxu0
  %v320 = vadd.f32 0.0, %v319
  %v321 = vpop.f32.mrb[0].mxu0
  %322 = vmatprep.mubr.bf16.mxu0 %v127
  %323 = vmatmul.mubr.bf16.gmra.mrb[0].mxu0 %v126
  %v324 = vpop.f32.mrb[0].mxu0
  %v325 = vadd.f32 0.0, %v324
  %v326 = vpop.f32.mrb[0].mxu0
  %v327 = vpop.f32.mrb[0].mxu0
  %v328 = vadd.f32 0.0, %v327
  %v329 = vpop.f32.mrb[0].mxu0
  %330 = vmatprep.mubr.bf16.mxu0 %v129
  %331 = vmatmul.mubr.bf16.gmra.mrb[0].mxu0 %v128
  %v332 = vpop.f32.mrb[0].mxu0
  %v333 = vadd.f32 0.0, %v332
  %v334 = vpop.f32.mrb[0].mxu0
  %v335 = vpop.f32.mrb[0].mxu0
  %v336 = vadd.f32 0.0, %v335
  %v337 = vpop.f32.mrb[0].mxu0
  %338 = vdwg.mxu0
  %v339 = vadd.f32 %v277, %v280
  %v340 = vadd.f32 %v339, %v285
  %v341 = vadd.f32 %v340, %v288
  %v342 = vadd.f32 %v341, %v293
  %v343 = vadd.f32 %v342, %v296
  %v344 = vadd.f32 %v343, %v301
  %v345 = vadd.f32 %v344, %v304
  %v346 = vadd.f32 %v345, %v309
  %v347 = vadd.f32 %v346, %v312
  %v348 = vadd.f32 %v347, %v317
  %v349 = vadd.f32 %v348, %v320
  %v350 = vadd.f32 %v349, %v325
  %v351 = vadd.f32 %v350, %v328
  %v352 = vadd.f32 %v351, %v333
  %v353 = vadd.f32 %v352, %v336
  %v354 = vrot.slane %v353, 4
  %v355 = vadd.f32 %v353, %v354
  %v356 = vrot.slane %v355, 2
  %v357 = vadd.f32 %v355, %v356
  %v358 = vrot.slane %v357, 1
  %v359 = vadd.f32 %v357, %v358
  %v360 = vmul.f32 %v359, 0.0078125
  %v361 = vmul.f32 %v277, %v277
  %v362 = vmul.f32 %v280, %v280
  %v363 = vmul.f32 %v285, %v285
  %v364 = vmul.f32 %v288, %v288
  %v365 = vmul.f32 %v293, %v293
  %v366 = vmul.f32 %v296, %v296
  %v367 = vmul.f32 %v301, %v301
  %v368 = vmul.f32 %v304, %v304
  %v369 = vmul.f32 %v309, %v309
  %v370 = vmul.f32 %v312, %v312
  %v371 = vmul.f32 %v317, %v317
  %v372 = vmul.f32 %v320, %v320
  %v373 = vmul.f32 %v325, %v325
  %v374 = vmul.f32 %v328, %v328
  %v375 = vmul.f32 %v333, %v333
  %v376 = vmul.f32 %v336, %v336
  %v377 = vadd.f32 %v361, %v362
  %v378 = vadd.f32 %v377, %v363
  %v379 = vadd.f32 %v378, %v364
  %v380 = vadd.f32 %v379, %v365
  %v381 = vadd.f32 %v380, %v366
  %v382 = vadd.f32 %v381, %v367
  %v383 = vadd.f32 %v382, %v368
  %v384 = vadd.f32 %v383, %v369
  %v385 = vadd.f32 %v384, %v370
  %v386 = vadd.f32 %v385, %v371
  %v387 = vadd.f32 %v386, %v372
  %v388 = vadd.f32 %v387, %v373
  %v389 = vadd.f32 %v388, %v374
  %v390 = vadd.f32 %v389, %v375
  %v391 = vadd.f32 %v390, %v376
  %v392 = vrot.slane %v391, 4
  %v393 = vadd.f32 %v391, %v392
  %v394 = vrot.slane %v393, 2
  %v395 = vadd.f32 %v393, %v394
  %v396 = vrot.slane %v395, 1
  %v397 = vadd.f32 %v395, %v396
  %v398 = vmul.f32 %v397, 0.0078125
  %v399 = vmul.f32 %v360, %v360
  %v400 = vsub.f32 %v398, %v399
  %v401 = vmax.f32 %v400, 0.0
  %v402 = vadd.f32 %v401, 1e-05
  %v403 = vrsqrt.pop %v402
  %v404 = vld [vmem:[%s2] sm:$0x1]
  %v405 = vmul.f32 %v403, %v404
  %v406 = vsub.f32 %v277, %v360
  %v407 = vsub.f32 %v280, %v360
  %v408 = vsub.f32 %v285, %v360
  %v409 = vsub.f32 %v288, %v360
  %v410 = vsub.f32 %v293, %v360
  %v411 = vsub.f32 %v296, %v360
  %v412 = vsub.f32 %v301, %v360
  %v413 = vsub.f32 %v304, %v360
  %v414 = vsub.f32 %v309, %v360
  %v415 = vsub.f32 %v312, %v360
  %v416 = vsub.f32 %v317, %v360
  %v417 = vsub.f32 %v320, %v360
  %v418 = vsub.f32 %v325, %v360
  %v419 = vsub.f32 %v328, %v360
  %v420 = vsub.f32 %v333, %v360
  %v421 = vsub.f32 %v336, %v360
  %v422 = vlaneseq
  %v423 = vshrl.u32 %v422, 7
  %v424 = vsub.s32 0, %v423
  %v425 = vrot.slane %v405, %v424
  %v426 = vmul.f32 %v406, %v425
  %v427 = vmul.f32 %v407, %v425
  %v428 = vmul.f32 %v408, %v425
  %v429 = vmul.f32 %v409, %v425
  %v430 = vmul.f32 %v410, %v425
  %v431 = vmul.f32 %v411, %v425
  %v432 = vmul.f32 %v412, %v425
  %v433 = vmul.f32 %v413, %v425
  %v434 = vmul.f32 %v414, %v425
  %v435 = vmul.f32 %v415, %v425
  %v436 = vmul.f32 %v416, %v425
  %v437 = vmul.f32 %v417, %v425
  %v438 = vmul.f32 %v418, %v425
  %v439 = vmul.f32 %v419, %v425
  %v440 = vmul.f32 %v420, %v425
  %v441 = vmul.f32 %v421, %v425
  %v442 = vld [vmem:[%s3] sm:$0x1]
  %v444 = vlaneseq
  %v445 = vshrl.u32 %v444, 7
  %v446 = vsub.s32 0, %v445
  %v447 = vrot.slane %v442, %v446
  %v449 = vadd.f32 %v426, %v447
  %v450 = vadd.f32 %v427, %v447
  %v451 = vadd.f32 %v428, %v447
  %v452 = vadd.f32 %v429, %v447
  %v453 = vadd.f32 %v430, %v447
  %v454 = vadd.f32 %v431, %v447
  %v455 = vadd.f32 %v432, %v447
  %v456 = vadd.f32 %v433, %v447
  %v457 = vadd.f32 %v434, %v447
  %v458 = vadd.f32 %v435, %v447
  %v459 = vadd.f32 %v436, %v447
  %v460 = vadd.f32 %v437, %v447
  %v461 = vadd.f32 %v438, %v447
  %v462 = vadd.f32 %v439, %v447
  %v463 = vadd.f32 %v440, %v447
  %v464 = vadd.f32 %v441, %v447
  %v465 = vmul.f32 %v449, 0.2
  %v466 = vmul.f32 %v450, 0.2
  %v467 = vmul.f32 %v451, 0.2
  %v468 = vmul.f32 %v452, 0.2
  %v469 = vmul.f32 %v453, 0.2
  %v470 = vmul.f32 %v454, 0.2
  %v471 = vmul.f32 %v455, 0.2
  %v472 = vmul.f32 %v456, 0.2
  %v473 = vmul.f32 %v457, 0.2
  %v474 = vmul.f32 %v458, 0.2
  %v475 = vmul.f32 %v459, 0.2
  %v476 = vmul.f32 %v460, 0.2
  %v477 = vmul.f32 %v461, 0.2
  %v478 = vmul.f32 %v462, 0.2
  %v479 = vmul.f32 %v463, 0.2
  %v480 = vmul.f32 %v464, 0.2
  %v481 = vmax.f32 %v449, %v465
  %v482 = vmax.f32 %v450, %v466
  %v483 = vmax.f32 %v451, %v467
  %v484 = vmax.f32 %v452, %v468
  %v485 = vmax.f32 %v453, %v469
  %v486 = vmax.f32 %v454, %v470
  %v487 = vmax.f32 %v455, %v471
  %v488 = vmax.f32 %v456, %v472
  %v489 = vmax.f32 %v457, %v473
  %v490 = vmax.f32 %v458, %v474
  %v491 = vmax.f32 %v459, %v475
  %v492 = vmax.f32 %v460, %v476
  %v493 = vmax.f32 %v461, %v477
  %v494 = vmax.f32 %v462, %v478
  %v495 = vmax.f32 %v463, %v479
  %v496 = vmax.f32 %v464, %v480
  %v497 = vpack.c.bf16 %v482, %v481
  %v498 = vpack.c.bf16 %v484, %v483
  %v499 = vpack.c.bf16 %v486, %v485
  %v500 = vpack.c.bf16 %v488, %v487
  %v501 = vpack.c.bf16 %v490, %v489
  %v502 = vpack.c.bf16 %v492, %v491
  %v503 = vpack.c.bf16 %v494, %v493
  %v504 = vpack.c.bf16 %v496, %v495
  %v513 = vunpack.c.l.b16 %v497
  %v514 = vunpack.c.h.b16 %v497
  %v515 = vunpack.c.l.b16 %v498
  %v516 = vunpack.c.h.b16 %v498
  %v517 = vunpack.c.l.b16 %v499
  %v518 = vunpack.c.h.b16 %v499
  %v519 = vunpack.c.l.b16 %v500
  %v520 = vunpack.c.h.b16 %v500
  %v521 = vunpack.c.l.b16 %v501
  %v522 = vunpack.c.h.b16 %v501
  %v523 = vunpack.c.l.b16 %v502
  %v524 = vunpack.c.h.b16 %v502
  %v525 = vunpack.c.l.b16 %v503
  %v526 = vunpack.c.h.b16 %v503
  %v527 = vunpack.c.l.b16 %v504
  %v528 = vunpack.c.h.b16 %v504
  %v529 = vpack.c.b16 %v513, %v513
  %v530 = vpack.c.b16 %v514, %v514
  %v531 = vpack.c.b16 %v515, %v515
  %v532 = vpack.c.b16 %v516, %v516
  %v533 = vpack.c.b16 %v517, %v517
  %v534 = vpack.c.b16 %v518, %v518
  %v535 = vpack.c.b16 %v519, %v519
  %v536 = vpack.c.b16 %v520, %v520
  %v537 = vpack.c.b16 %v521, %v521
  %v538 = vpack.c.b16 %v522, %v522
  %v539 = vpack.c.b16 %v523, %v523
  %v540 = vpack.c.b16 %v524, %v524
  %v541 = vpack.c.b16 %v525, %v525
  %v542 = vpack.c.b16 %v526, %v526
  %v543 = vpack.c.b16 %v527, %v527
  %v544 = vpack.c.b16 %v528, %v528
  %561 = vst [vmem:[%s4] sm:$0xf] %v529
  %562 = vst [vmem:[%s4 + $0x4] sm:$0xf] %v530
  %563 = vst [vmem:[%s4 + $0x8] sm:$0xf] %v531
  %564 = vst [vmem:[%s4 + $0xc] sm:$0xf] %v532
  %565 = vst [vmem:[%s4 + $0x10] sm:$0xf] %v533
  %566 = vst [vmem:[%s4 + $0x14] sm:$0xf] %v534
  %567 = vst [vmem:[%s4 + $0x18] sm:$0xf] %v535
  %568 = vst [vmem:[%s4 + $0x1c] sm:$0xf] %v536
  %569 = vst [vmem:[%s4 + $0x20] sm:$0xf] %v537
  %570 = vst [vmem:[%s4 + $0x24] sm:$0xf] %v538
  %571 = vst [vmem:[%s4 + $0x28] sm:$0xf] %v539
  %572 = vst [vmem:[%s4 + $0x2c] sm:$0xf] %v540
  %573 = vst [vmem:[%s4 + $0x30] sm:$0xf] %v541
  %574 = vst [vmem:[%s4 + $0x34] sm:$0xf] %v542
  %575 = vst [vmem:[%s4 + $0x38] sm:$0xf] %v543
  %576 = vst [vmem:[%s4 + $0x3c] sm:$0xf] %v544
  // Predicated region
  $region18: #{wang2020_discriminator_forward.6} parent=0 // pred_check
    _
  $region19: #{wang2020_discriminator_forward.6} parent=0 // pred_check_branch
    %578 = sbr.rel (0) target = $region21
  $region20: #{wang2020_discriminator_forward.6} parent=0 // pred_region
    _
  $region21: #{wang2020_discriminator_forward.6} parent=0 // pred_fallthru
    _
  // Predicated region
  $region22: #{wang2020_discriminator_forward.6} parent=0 // pred_check
    _
  $region23: #{wang2020_discriminator_forward.6} parent=0 // pred_check_branch
    %580 = sbr.rel (0) target = $region25
  $region24: #{wang2020_discriminator_forward.6} parent=0 // pred_region
    _
  $region25: #{wang2020_discriminator_forward.6} parent=0 // pred_fallthru
    _

// kernel: wang2020_discriminator_forward.7
$region0: #{wang2020_discriminator_forward.7}
  #allocation0 [shape = 'u32[]', space=smem, size = 0x4, offset = 0x4, fixed_abs, tag = 'smem constant byte address 0x4 - core index']
  #allocation1 [shape = 'u32[144,128]{1,0:T(1,128)}', space=vmem, size = 0x12000, scoped, tag = 'internal scratch']
  %s0 = inlined_call_operand.vmem [shape: bf16[32,512], index: 0, kind: input, shape index: {}]
  %s1 = inlined_call_operand.vmem [shape: bf16[512,128], index: 1, kind: input, shape index: {}]
  %s2 = inlined_call_operand.vmem [shape: f32[1,128], index: 2, kind: input, shape index: {}]
  %s3 = inlined_call_operand.vmem [shape: f32[1,128], index: 3, kind: input, shape index: {}]
  %s4 = inlined_call_operand.vmem [shape: bf16[32,128], index: 4, kind: output, shape index: {}]
  %s5 = sld [smem:[#allocation0]]
  $region26: #{wang2020_discriminator_forward.7} parent=0
    _
  %s7 = ssub.s32 1, %s5
  %s8 = scalar_select 0, %s7, %s5
  // Predicated region
  $region2: #{wang2020_discriminator_forward.7} parent=0 // pred_check
    _
  $region3: #{wang2020_discriminator_forward.7} parent=0 // pred_check_branch
    %10 = sbr.rel (0) target = $region5
  $region4: #{wang2020_discriminator_forward.7} parent=0 // pred_region
    _
  $region5: #{wang2020_discriminator_forward.7} parent=0 // pred_fallthru
    _
  // Predicated region
  $region6: #{wang2020_discriminator_forward.7} parent=0 // pred_check
    _
  $region7: #{wang2020_discriminator_forward.7} parent=0 // pred_check_branch
    %12 = sbr.rel (0) target = $region9
  $region8: #{wang2020_discriminator_forward.7} parent=0 // pred_region
    _
  $region9: #{wang2020_discriminator_forward.7} parent=0 // pred_fallthru
    _
  // Predicated region
  $region10: #{wang2020_discriminator_forward.7} parent=0 // pred_check
    _
  $region11: #{wang2020_discriminator_forward.7} parent=0 // pred_check_branch
    %14 = sbr.rel (0) target = $region13
  $region12: #{wang2020_discriminator_forward.7} parent=0 // pred_region
    _
  $region13: #{wang2020_discriminator_forward.7} parent=0 // pred_fallthru
    _
  // Predicated region
  $region14: #{wang2020_discriminator_forward.7} parent=0 // pred_check
    _
  $region15: #{wang2020_discriminator_forward.7} parent=0 // pred_check_branch
    %16 = sbr.rel (0) target = $region17
  $region16: #{wang2020_discriminator_forward.7} parent=0 // pred_region
    _
  $region17: #{wang2020_discriminator_forward.7} parent=0 // pred_fallthru
    _
  %v18 = vld [vmem:[%s0] sm:$0xff]
  %v19 = vld [vmem:[%s0 + $0x8] sm:$0xff]
  %v20 = vld [vmem:[%s0 + $0x10] sm:$0xff]
  %v21 = vld [vmem:[%s0 + $0x18] sm:$0xff]
  %v22 = vld [vmem:[%s0 + $0x20] sm:$0xff]
  %v23 = vld [vmem:[%s0 + $0x28] sm:$0xff]
  %v24 = vld [vmem:[%s0 + $0x30] sm:$0xff]
  %v25 = vld [vmem:[%s0 + $0x38] sm:$0xff]
  %v26 = vld [vmem:[%s1] sm:$0xf]
  %v27 = vld [vmem:[%s1 + $0x4] sm:$0xf]
  %v28 = vld [vmem:[%s1 + $0x8] sm:$0xf]
  %v29 = vld [vmem:[%s1 + $0xc] sm:$0xf]
  %v30 = vld [vmem:[%s1 + $0x10] sm:$0xf]
  %v31 = vld [vmem:[%s1 + $0x14] sm:$0xf]
  %v32 = vld [vmem:[%s1 + $0x18] sm:$0xf]
  %v33 = vld [vmem:[%s1 + $0x1c] sm:$0xf]
  %v34 = vld [vmem:[%s1 + $0x20] sm:$0xf]
  %v35 = vld [vmem:[%s1 + $0x24] sm:$0xf]
  %v36 = vld [vmem:[%s1 + $0x28] sm:$0xf]
  %v37 = vld [vmem:[%s1 + $0x2c] sm:$0xf]
  %v38 = vld [vmem:[%s1 + $0x30] sm:$0xf]
  %v39 = vld [vmem:[%s1 + $0x34] sm:$0xf]
  %v40 = vld [vmem:[%s1 + $0x38] sm:$0xf]
  %v41 = vld [vmem:[%s1 + $0x3c] sm:$0xf]
  %v42 = vld [vmem:[%s1 + $0x40] sm:$0xf]
  %v43 = vld [vmem:[%s1 + $0x44] sm:$0xf]
  %v44 = vld [vmem:[%s1 + $0x48] sm:$0xf]
  %v45 = vld [vmem:[%s1 + $0x4c] sm:$0xf]
  %v46 = vld [vmem:[%s1 + $0x50] sm:$0xf]
  %v47 = vld [vmem:[%s1 + $0x54] sm:$0xf]
  %v48 = vld [vmem:[%s1 + $0x58] sm:$0xf]
  %v49 = vld [vmem:[%s1 + $0x5c] sm:$0xf]
  %v50 = vld [vmem:[%s1 + $0x60] sm:$0xf]
  %v51 = vld [vmem:[%s1 + $0x64] sm:$0xf]
  %v52 = vld [vmem:[%s1 + $0x68] sm:$0xf]
  %v53 = vld [vmem:[%s1 + $0x6c] sm:$0xf]
  %v54 = vld [vmem:[%s1 + $0x70] sm:$0xf]
  %v55 = vld [vmem:[%s1 + $0x74] sm:$0xf]
  %v56 = vld [vmem:[%s1 + $0x78] sm:$0xf]
  %v57 = vld [vmem:[%s1 + $0x7c] sm:$0xf]
  %v58 = vld [vmem:[%s1 + $0x80] sm:$0xf]
  %v59 = vld [vmem:[%s1 + $0x84] sm:$0xf]
  %v60 = vld [vmem:[%s1 + $0x88] sm:$0xf]
  %v61 = vld [vmem:[%s1 + $0x8c] sm:$0xf]
  %v62 = vld [vmem:[%s1 + $0x90] sm:$0xf]
  %v63 = vld [vmem:[%s1 + $0x94] sm:$0xf]
  %v64 = vld [vmem:[%s1 + $0x98] sm:$0xf]
  %v65 = vld [vmem:[%s1 + $0x9c] sm:$0xf]
  %v66 = vld [vmem:[%s1 + $0xa0] sm:$0xf]
  %v67 = vld [vmem:[%s1 + $0xa4] sm:$0xf]
  %v68 = vld [vmem:[%s1 + $0xa8] sm:$0xf]
  %v69 = vld [vmem:[%s1 + $0xac] sm:$0xf]
  %v70 = vld [vmem:[%s1 + $0xb0] sm:$0xf]
  %v71 = vld [vmem:[%s1 + $0xb4] sm:$0xf]
  %v72 = vld [vmem:[%s1 + $0xb8] sm:$0xf]
  %v73 = vld [vmem:[%s1 + $0xbc] sm:$0xf]
  %v74 = vld [vmem:[%s1 + $0xc0] sm:$0xf]
  %v75 = vld [vmem:[%s1 + $0xc4] sm:$0xf]
  %v76 = vld [vmem:[%s1 + $0xc8] sm:$0xf]
  %v77 = vld [vmem:[%s1 + $0xcc] sm:$0xf]
  %v78 = vld [vmem:[%s1 + $0xd0] sm:$0xf]
  %v79 = vld [vmem:[%s1 + $0xd4] sm:$0xf]
  %v80 = vld [vmem:[%s1 + $0xd8] sm:$0xf]
  %v81 = vld [vmem:[%s1 + $0xdc] sm:$0xf]
  %v82 = vld [vmem:[%s1 + $0xe0] sm:$0xf]
  %v83 = vld [vmem:[%s1 + $0xe4] sm:$0xf]
  %v84 = vld [vmem:[%s1 + $0xe8] sm:$0xf]
  %v85 = vld [vmem:[%s1 + $0xec] sm:$0xf]
  %v86 = vld [vmem:[%s1 + $0xf0] sm:$0xf]
  %v87 = vld [vmem:[%s1 + $0xf4] sm:$0xf]
  %v88 = vld [vmem:[%s1 + $0xf8] sm:$0xf]
  %v89 = vld [vmem:[%s1 + $0xfc] sm:$0xf]
  %v98 = vunpack.c.l.b16 %v18
  %v99 = vunpack.c.h.b16 %v18
  %v100 = vunpack.c.l.b16 %v19
  %v101 = vunpack.c.h.b16 %v19
  %v102 = vunpack.c.l.b16 %v20
  %v103 = vunpack.c.h.b16 %v20
  %v104 = vunpack.c.l.b16 %v21
  %v105 = vunpack.c.h.b16 %v21
  %v106 = vunpack.c.l.b16 %v22
  %v107 = vunpack.c.h.b16 %v22
  %v108 = vunpack.c.l.b16 %v23
  %v109 = vunpack.c.h.b16 %v23
  %v110 = vunpack.c.l.b16 %v24
  %v111 = vunpack.c.h.b16 %v24
  %v112 = vunpack.c.l.b16 %v25
  %v113 = vunpack.c.h.b16 %v25
  %v114 = vpack.c.b16 %v102, %v98
  %v115 = vpack.c.b16 %v103, %v99
  %v116 = vpack.c.b16 %v104, %v100
  %v117 = vpack.c.b16 %v105, %v101
  %v118 = vpack.c.b16 %v110, %v106
  %v119 = vpack.c.b16 %v111, %v107
  %v120 = vpack.c.b16 %v112, %v108
  %v121 = vpack.c.b16 %v113, %v109
  %v194 = vunpack.c.l.b16 %v26
  %v195 = vunpack.c.l.b16 %v27
  %v196 = vunpack.c.l.b16 %v28
  %v197 = vunpack.c.l.b16 %v29
  %v198 = vunpack.c.l.b16 %v30
  %v199 = vunpack.c.l.b16 %v31
  %v200 = vunpack.c.l.b16 %v32
  %v201 = vunpack.c.l.b16 %v33
  %v202 = vunpack.c.l.b16 %v34
  %v203 = vunpack.c.l.b16 %v35
  %v204 = vunpack.c.l.b16 %v36
  %v205 = vunpack.c.l.b16 %v37
  %v206 = vunpack.c.l.b16 %v38
  %v207 = vunpack.c.l.b16 %v39
  %v208 = vunpack.c.l.b16 %v40
  %v209 = vunpack.c.l.b16 %v41
  %v210 = vunpack.c.l.b16 %v42
  %v211 = vunpack.c.l.b16 %v43
  %v212 = vunpack.c.l.b16 %v44
  %v213 = vunpack.c.l.b16 %v45
  %v214 = vunpack.c.l.b16 %v46
  %v215 = vunpack.c.l.b16 %v47
  %v216 = vunpack.c.l.b16 %v48
  %v217 = vunpack.c.l.b16 %v49
  %v218 = vunpack.c.l.b16 %v50
  %v219 = vunpack.c.l.b16 %v51
  %v220 = vunpack.c.l.b16 %v52
  %v221 = vunpack.c.l.b16 %v53
  %v222 = vunpack.c.l.b16 %v54
  %v223 = vunpack.c.l.b16 %v55
  %v224 = vunpack.c.l.b16 %v56
  %v225 = vunpack.c.l.b16 %v57
  %v226 = vunpack.c.l.b16 %v58
  %v227 = vunpack.c.l.b16 %v59
  %v228 = vunpack.c.l.b16 %v60
  %v229 = vunpack.c.l.b16 %v61
  %v230 = vunpack.c.l.b16 %v62
  %v231 = vunpack.c.l.b16 %v63
  %v232 = vunpack.c.l.b16 %v64
  %v233 = vunpack.c.l.b16 %v65
  %v234 = vunpack.c.l.b16 %v66
  %v235 = vunpack.c.l.b16 %v67
  %v236 = vunpack.c.l.b16 %v68
  %v237 = vunpack.c.l.b16 %v69
  %v238 = vunpack.c.l.b16 %v70
  %v239 = vunpack.c.l.b16 %v71
  %v240 = vunpack.c.l.b16 %v72
  %v241 = vunpack.c.l.b16 %v73
  %v242 = vunpack.c.l.b16 %v74
  %v243 = vunpack.c.l.b16 %v75
  %v244 = vunpack.c.l.b16 %v76
  %v245 = vunpack.c.l.b16 %v77
  %v246 = vunpack.c.l.b16 %v78
  %v247 = vunpack.c.l.b16 %v79
  %v248 = vunpack.c.l.b16 %v80
  %v249 = vunpack.c.l.b16 %v81
  %v250 = vunpack.c.l.b16 %v82
  %v251 = vunpack.c.l.b16 %v83
  %v252 = vunpack.c.l.b16 %v84
  %v253 = vunpack.c.l.b16 %v85
  %v254 = vunpack.c.l.b16 %v86
  %v255 = vunpack.c.l.b16 %v87
  %v256 = vunpack.c.l.b16 %v88
  %v257 = vunpack.c.l.b16 %v89
  %v258 = vpack.c.b16 %v195, %v194
  %v259 = vpack.c.b16 %v197, %v196
  %v260 = vpack.c.b16 %v199, %v198
  %v261 = vpack.c.b16 %v201, %v200
  %v262 = vpack.c.b16 %v203, %v202
  %v263 = vpack.c.b16 %v205, %v204
  %v264 = vpack.c.b16 %v207, %v206
  %v265 = vpack.c.b16 %v209, %v208
  %v266 = vpack.c.b16 %v211, %v210
  %v267 = vpack.c.b16 %v213, %v212
  %v268 = vpack.c.b16 %v215, %v214
  %v269 = vpack.c.b16 %v217, %v216
  %v270 = vpack.c.b16 %v219, %v218
  %v271 = vpack.c.b16 %v221, %v220
  %v272 = vpack.c.b16 %v223, %v222
  %v273 = vpack.c.b16 %v225, %v224
  %v274 = vpack.c.b16 %v227, %v226
  %v275 = vpack.c.b16 %v229, %v228
  %v276 = vpack.c.b16 %v231, %v230
  %v277 = vpack.c.b16 %v233, %v232
  %v278 = vpack.c.b16 %v235, %v234
  %v279 = vpack.c.b16 %v237, %v236
  %v280 = vpack.c.b16 %v239, %v238
  %v281 = vpack.c.b16 %v241, %v240
  %v282 = vpack.c.b16 %v243, %v242
  %v283 = vpack.c.b16 %v245, %v244
  %v284 = vpack.c.b16 %v247, %v246
  %v285 = vpack.c.b16 %v249, %v248
  %v286 = vpack.c.b16 %v251, %v250
  %v287 = vpack.c.b16 %v253, %v252
  %v288 = vpack.c.b16 %v255, %v254
  %v289 = vpack.c.b16 %v257, %v256
  %322 = vmatprep.subr.bf16.mxu0 0
  %323 = vmatpush1.bf16.msra.mxu0 %v258
  %324 = vmatprep.subr.bf16.mxu0 0
  %325 = vmatpush1.bf16.msra.mxu0 %v259
  %326 = vmatprep.subr.bf16.mxu0 0
  %327 = vmatpush1.bf16.msra.mxu0 %v260
  %328 = vmatprep.subr.bf16.mxu0 0
  %329 = vmatpush1.bf16.msra.mxu0 %v261
  %330 = vmatprep.subr.bf16.mxu0 0
  %331 = vmatpush1.bf16.msra.mxu0 %v262
  %332 = vmatprep.subr.bf16.mxu0 0
  %333 = vmatpush1.bf16.msra.mxu0 %v263
  %334 = vmatprep.subr.bf16.mxu0 0
  %335 = vmatpush1.bf16.msra.mxu0 %v264
  %336 = vmatprep.subr.bf16.mxu0 0
  %337 = vmatpush1.bf16.msra.mxu0 %v265
  %338 = vmatprep.subr.bf16.mxu0 0
  %339 = vmatpush1.bf16.msra.mxu0 %v266
  %340 = vmatprep.subr.bf16.mxu0 0
  %341 = vmatpush1.bf16.msra.mxu0 %v267
  %342 = vmatprep.subr.bf16.mxu0 0
  %343 = vmatpush1.bf16.msra.mxu0 %v268
  %344 = vmatprep.subr.bf16.mxu0 0
  %345 = vmatpush1.bf16.msra.mxu0 %v269
  %346 = vmatprep.subr.bf16.mxu0 0
  %347 = vmatpush1.bf16.msra.mxu0 %v270
  %348 = vmatprep.subr.bf16.mxu0 0
  %349 = vmatpush1.bf16.msra.mxu0 %v271
  %350 = vmatprep.subr.bf16.mxu0 0
  %351 = vmatpush1.bf16.msra.mxu0 %v272
  %352 = vmatprep.subr.bf16.mxu0 0
  %353 = vmatpush1.bf16.msra.mxu0 %v273
  %354 = vmatprep.mubr.bf16.mxu0 %v115
  %355 = vmatmul.mubr.bf16.gmra.mrb[0].mxu0 %v114
  %v356 = vpop.f32.mrb[0].mxu0
  %v357 = vadd.f32 0.0, %v356
  %v358 = vpop.f32.mrb[0].mxu0
  %v359 = vpop.f32.mrb[0].mxu0
  %v360 = vadd.f32 0.0, %v359
  %v361 = vpop.f32.mrb[0].mxu0
  %362 = vmatprep.mubr.bf16.mxu0 %v119
  %363 = vmatmul.mubr.bf16.gmra.mrb[0].mxu0 %v118
  %v364 = vpop.f32.mrb[0].mxu0
  %v365 = vadd.f32 0.0, %v364
  %v366 = vpop.f32.mrb[0].mxu0
  %v367 = vpop.f32.mrb[0].mxu0
  %v368 = vadd.f32 0.0, %v367
  %v369 = vpop.f32.mrb[0].mxu0
  %370 = vdwg.mxu0
  %371 = vmatprep.subr.bf16.mxu0 0
  %372 = vmatpush1.bf16.msra.mxu0 %v274
  %373 = vmatprep.subr.bf16.mxu0 0
  %374 = vmatpush1.bf16.msra.mxu0 %v275
  %375 = vmatprep.subr.bf16.mxu0 0
  %376 = vmatpush1.bf16.msra.mxu0 %v276
  %377 = vmatprep.subr.bf16.mxu0 0
  %378 = vmatpush1.bf16.msra.mxu0 %v277
  %379 = vmatprep.subr.bf16.mxu0 0
  %380 = vmatpush1.bf16.msra.mxu0 %v278
  %381 = vmatprep.subr.bf16.mxu0 0
  %382 = vmatpush1.bf16.msra.mxu0 %v279
  %383 = vmatprep.subr.bf16.mxu0 0
  %384 = vmatpush1.bf16.msra.mxu0 %v280
  %385 = vmatprep.subr.bf16.mxu0 0
  %386 = vmatpush1.bf16.msra.mxu0 %v281
  %387 = vmatprep.subr.bf16.mxu0 0
  %388 = vmatpush1.bf16.msra.mxu0 %v282
  %389 = vmatprep.subr.bf16.mxu0 0
  %390 = vmatpush1.bf16.msra.mxu0 %v283
  %391 = vmatprep.subr.bf16.mxu0 0
  %392 = vmatpush1.bf16.msra.mxu0 %v284
  %393 = vmatprep.subr.bf16.mxu0 0
  %394 = vmatpush1.bf16.msra.mxu0 %v285
  %395 = vmatprep.subr.bf16.mxu0 0
  %396 = vmatpush1.bf16.msra.mxu0 %v286
  %397 = vmatprep.subr.bf16.mxu0 0
  %398 = vmatpush1.bf16.msra.mxu0 %v287
  %399 = vmatprep.subr.bf16.mxu0 0
  %400 = vmatpush1.bf16.msra.mxu0 %v288
  %401 = vmatprep.subr.bf16.mxu0 0
  %402 = vmatpush1.bf16.msra.mxu0 %v289
  %403 = vmatprep.mubr.bf16.mxu0 %v117
  %404 = vmatmul.mubr.bf16.gmra.mrb[0].mxu0 %v116
  %v405 = vpop.f32.mrb[0].mxu0
  %v406 = vadd.f32 %v357, %v405
  %v407 = vpop.f32.mrb[0].mxu0
  %v408 = vpop.f32.mrb[0].mxu0
  %v409 = vadd.f32 %v360, %v408
  %v410 = vpop.f32.mrb[0].mxu0
  %411 = vmatprep.mubr.bf16.mxu0 %v121
  %412 = vmatmul.mubr.bf16.gmra.mrb[0].mxu0 %v120
  %v413 = vpop.f32.mrb[0].mxu0
  %v414 = vadd.f32 %v365, %v413
  %v415 = vpop.f32.mrb[0].mxu0
  %v416 = vpop.f32.mrb[0].mxu0
  %v417 = vadd.f32 %v368, %v416
  %v418 = vpop.f32.mrb[0].mxu0
  %419 = vdwg.mxu0
  %v420 = vadd.f32 %v406, %v409
  %v421 = vadd.f32 %v420, %v414
  %v422 = vadd.f32 %v421, %v417
  %v423 = vrot.slane %v422, 4
  %v424 = vadd.f32 %v422, %v423
  %v425 = vrot.slane %v424, 2
  %v426 = vadd.f32 %v424, %v425
  %v427 = vrot.slane %v426, 1
  %v428 = vadd.f32 %v426, %v427
  %v429 = vmul.f32 %v428, 0.03125
  %v430 = vmul.f32 %v406, %v406
  %v431 = vmul.f32 %v409, %v409
  %v432 = vmul.f32 %v414, %v414
  %v433 = vmul.f32 %v417, %v417
  %v434 = vadd.f32 %v430, %v431
  %v435 = vadd.f32 %v434, %v432
  %v436 = vadd.f32 %v435, %v433
  %v437 = vrot.slane %v436, 4
  %v438 = vadd.f32 %v436, %v437
  %v439 = vrot.slane %v438, 2
  %v440 = vadd.f32 %v438, %v439
  %v441 = vrot.slane %v440, 1
  %v442 = vadd.f32 %v440, %v441
  %v443 = vmul.f32 %v442, 0.03125
  %v444 = vmul.f32 %v429, %v429
  %v445 = vsub.f32 %v443, %v444
  %v446 = vmax.f32 %v445, 0.0
  %v447 = vadd.f32 %v446, 1e-05
  %v448 = vrsqrt.pop %v447
  %v449 = vld [vmem:[%s2] sm:$0x1]
  %v450 = vmul.f32 %v448, %v449
  %v451 = vsub.f32 %v406, %v429
  %v452 = vsub.f32 %v409, %v429
  %v453 = vsub.f32 %v414, %v429
  %v454 = vsub.f32 %v417, %v429
  %v455 = vlaneseq
  %v456 = vshrl.u32 %v455, 7
  %v457 = vsub.s32 0, %v456
  %v458 = vrot.slane %v450, %v457
  %v459 = vmul.f32 %v451, %v458
  %v460 = vmul.f32 %v452, %v458
  %v461 = vmul.f32 %v453, %v458
  %v462 = vmul.f32 %v454, %v458
  %v463 = vld [vmem:[%s3] sm:$0x1]
  %v465 = vlaneseq
  %v466 = vshrl.u32 %v465, 7
  %v467 = vsub.s32 0, %v466
  %v468 = vrot.slane %v463, %v467
  %v470 = vadd.f32 %v459, %v468
  %v471 = vadd.f32 %v460, %v468
  %v472 = vadd.f32 %v461, %v468
  %v473 = vadd.f32 %v462, %v468
  %v474 = vmul.f32 %v470, 0.2
  %v475 = vmul.f32 %v471, 0.2
  %v476 = vmul.f32 %v472, 0.2
  %v477 = vmul.f32 %v473, 0.2
  %v478 = vmax.f32 %v470, %v474
  %v479 = vmax.f32 %v471, %v475
  %v480 = vmax.f32 %v472, %v476
  %v481 = vmax.f32 %v473, %v477
  %v482 = vpack.c.bf16 %v479, %v478
  %v483 = vpack.c.bf16 %v481, %v480
  %v486 = vunpack.c.l.b16 %v482
  %v487 = vunpack.c.h.b16 %v482
  %v488 = vunpack.c.l.b16 %v483
  %v489 = vunpack.c.h.b16 %v483
  %v490 = vpack.c.b16 %v486, %v486
  %v491 = vpack.c.b16 %v487, %v487
  %v492 = vpack.c.b16 %v488, %v488
  %v493 = vpack.c.b16 %v489, %v489
  %498 = vst [vmem:[%s4] sm:$0xf] %v490
  %499 = vst [vmem:[%s4 + $0x4] sm:$0xf] %v491
  %500 = vst [vmem:[%s4 + $0x8] sm:$0xf] %v492
  %501 = vst [vmem:[%s4 + $0xc] sm:$0xf] %v493
  // Predicated region
  $region18: #{wang2020_discriminator_forward.7} parent=0 // pred_check
    _
  $region19: #{wang2020_discriminator_forward.7} parent=0 // pred_check_branch
    %503 = sbr.rel (0) target = $region21
  $region20: #{wang2020_discriminator_forward.7} parent=0 // pred_region
    _
  $region21: #{wang2020_discriminator_forward.7} parent=0 // pred_fallthru
    _
  // Predicated region
  $region22: #{wang2020_discriminator_forward.7} parent=0 // pred_check
    _
  $region23: #{wang2020_discriminator_forward.7} parent=0 // pred_check_branch
    %505 = sbr.rel (0) target = $region25
  $region24: #{wang2020_discriminator_forward.7} parent=0 // pred_region
    _
  $region25: #{wang2020_discriminator_forward.7} parent=0 // pred_fallthru
    _

// kernel: wang2020_discriminator_forward.8
$region0: #{wang2020_discriminator_forward.8}
  #allocation0 [shape = 'u32[]', space=smem, size = 0x4, offset = 0x4, fixed_abs, tag = 'smem constant byte address 0x4 - core index']
  #allocation1 [shape = 'u32[144,128]{1,0:T(1,128)}', space=vmem, size = 0x12000, scoped, tag = 'internal scratch']
  %s0 = inlined_call_operand.vmem [shape: bf16[24,1024], index: 0, kind: input, shape index: {}]
  %s1 = inlined_call_operand.vmem [shape: bf16[1024,128], index: 1, kind: input, shape index: {}]
  %s2 = inlined_call_operand.vmem [shape: f32[1,128], index: 2, kind: input, shape index: {}]
  %s3 = inlined_call_operand.vmem [shape: f32[1,128], index: 3, kind: input, shape index: {}]
  %s4 = inlined_call_operand.vmem [shape: bf16[24,128], index: 4, kind: output, shape index: {}]
  %s5 = sld [smem:[#allocation0]]
  $region26: #{wang2020_discriminator_forward.8} parent=0
    _
  %s7 = ssub.s32 1, %s5
  %s8 = scalar_select 0, %s7, %s5
  // Predicated region
  $region2: #{wang2020_discriminator_forward.8} parent=0 // pred_check
    _
  $region3: #{wang2020_discriminator_forward.8} parent=0 // pred_check_branch
    %10 = sbr.rel (0) target = $region5
  $region4: #{wang2020_discriminator_forward.8} parent=0 // pred_region
    _
  $region5: #{wang2020_discriminator_forward.8} parent=0 // pred_fallthru
    _
  // Predicated region
  $region6: #{wang2020_discriminator_forward.8} parent=0 // pred_check
    _
  $region7: #{wang2020_discriminator_forward.8} parent=0 // pred_check_branch
    %12 = sbr.rel (0) target = $region9
  $region8: #{wang2020_discriminator_forward.8} parent=0 // pred_region
    _
  $region9: #{wang2020_discriminator_forward.8} parent=0 // pred_fallthru
    _
  // Predicated region
  $region10: #{wang2020_discriminator_forward.8} parent=0 // pred_check
    _
  $region11: #{wang2020_discriminator_forward.8} parent=0 // pred_check_branch
    %14 = sbr.rel (0) target = $region13
  $region12: #{wang2020_discriminator_forward.8} parent=0 // pred_region
    _
  $region13: #{wang2020_discriminator_forward.8} parent=0 // pred_fallthru
    _
  // Predicated region
  $region14: #{wang2020_discriminator_forward.8} parent=0 // pred_check
    _
  $region15: #{wang2020_discriminator_forward.8} parent=0 // pred_check_branch
    %16 = sbr.rel (0) target = $region17
  $region16: #{wang2020_discriminator_forward.8} parent=0 // pred_region
    _
  $region17: #{wang2020_discriminator_forward.8} parent=0 // pred_fallthru
    _
  %v18 = vld [vmem:[%s0] sm:$0xff]
  %v19 = vld [vmem:[%s0 + $0x8] sm:$0xff]
  %v20 = vld [vmem:[%s0 + $0x10] sm:$0xff]
  %v21 = vld [vmem:[%s0 + $0x18] sm:$0xff]
  %v22 = vld [vmem:[%s0 + $0x20] sm:$0xff]
  %v23 = vld [vmem:[%s0 + $0x28] sm:$0xff]
  %v24 = vld [vmem:[%s0 + $0x30] sm:$0xff]
  %v25 = vld [vmem:[%s0 + $0x38] sm:$0xff]
  %v26 = vld [vmem:[%s0 + $0x40] sm:$0xff]
  %v27 = vld [vmem:[%s0 + $0x48] sm:$0xff]
  %v28 = vld [vmem:[%s0 + $0x50] sm:$0xff]
  %v29 = vld [vmem:[%s0 + $0x58] sm:$0xff]
  %v30 = vld [vmem:[%s1] sm:$0xf]
  %v31 = vld [vmem:[%s1 + $0x4] sm:$0xf]
  %v32 = vld [vmem:[%s1 + $0x8] sm:$0xf]
  %v33 = vld [vmem:[%s1 + $0xc] sm:$0xf]
  %v34 = vld [vmem:[%s1 + $0x10] sm:$0xf]
  %v35 = vld [vmem:[%s1 + $0x14] sm:$0xf]
  %v36 = vld [vmem:[%s1 + $0x18] sm:$0xf]
  %v37 = vld [vmem:[%s1 + $0x1c] sm:$0xf]
  %v38 = vld [vmem:[%s1 + $0x20] sm:$0xf]
  %v39 = vld [vmem:[%s1 + $0x24] sm:$0xf]
  %v40 = vld [vmem:[%s1 + $0x28] sm:$0xf]
  %v41 = vld [vmem:[%s1 + $0x2c] sm:$0xf]
  %v42 = vld [vmem:[%s1 + $0x30] sm:$0xf]
  %v43 = vld [vmem:[%s1 + $0x34] sm:$0xf]
  %v44 = vld [vmem:[%s1 + $0x38] sm:$0xf]
  %v45 = vld [vmem:[%s1 + $0x3c] sm:$0xf]
  %v46 = vld [vmem:[%s1 + $0x40] sm:$0xf]
  %v47 = vld [vmem:[%s1 + $0x44] sm:$0xf]
  %v48 = vld [vmem:[%s1 + $0x48] sm:$0xf]
  %v49 = vld [vmem:[%s1 + $0x4c] sm:$0xf]
  %v50 = vld [vmem:[%s1 + $0x50] sm:$0xf]
  %v51 = vld [vmem:[%s1 + $0x54] sm:$0xf]
  %v52 = vld [vmem:[%s1 + $0x58] sm:$0xf]
  %v53 = vld [vmem:[%s1 + $0x5c] sm:$0xf]
  %v54 = vld [vmem:[%s1 + $0x60] sm:$0xf]
  %v55 = vld [vmem:[%s1 + $0x64] sm:$0xf]
  %v56 = vld [vmem:[%s1 + $0x68] sm:$0xf]
  %v57 = vld [vmem:[%s1 + $0x6c] sm:$0xf]
  %v58 = vld [vmem:[%s1 + $0x70] sm:$0xf]
  %v59 = vld [vmem:[%s1 + $0x74] sm:$0xf]
  %v60 = vld [vmem:[%s1 + $0x78] sm:$0xf]
  %v61 = vld [vmem:[%s1 + $0x7c] sm:$0xf]
  %v62 = vld [vmem:[%s1 + $0x80] sm:$0xf]
  %v63 = vld [vmem:[%s1 + $0x84] sm:$0xf]
  %v64 = vld [vmem:[%s1 + $0x88] sm:$0xf]
  %v65 = vld [vmem:[%s1 + $0x8c] sm:$0xf]
  %v66 = vld [vmem:[%s1 + $0x90] sm:$0xf]
  %v67 = vld [vmem:[%s1 + $0x94] sm:$0xf]
  %v68 = vld [vmem:[%s1 + $0x98] sm:$0xf]
  %v69 = vld [vmem:[%s1 + $0x9c] sm:$0xf]
  %v70 = vld [vmem:[%s1 + $0xa0] sm:$0xf]
  %v71 = vld [vmem:[%s1 + $0xa4] sm:$0xf]
  %v72 = vld [vmem:[%s1 + $0xa8] sm:$0xf]
  %v73 = vld [vmem:[%s1 + $0xac] sm:$0xf]
  %v74 = vld [vmem:[%s1 + $0xb0] sm:$0xf]
  %v75 = vld [vmem:[%s1 + $0xb4] sm:$0xf]
  %v76 = vld [vmem:[%s1 + $0xb8] sm:$0xf]
  %v77 = vld [vmem:[%s1 + $0xbc] sm:$0xf]
  %v78 = vld [vmem:[%s1 + $0xc0] sm:$0xf]
  %v79 = vld [vmem:[%s1 + $0xc4] sm:$0xf]
  %v80 = vld [vmem:[%s1 + $0xc8] sm:$0xf]
  %v81 = vld [vmem:[%s1 + $0xcc] sm:$0xf]
  %v82 = vld [vmem:[%s1 + $0xd0] sm:$0xf]
  %v83 = vld [vmem:[%s1 + $0xd4] sm:$0xf]
  %v84 = vld [vmem:[%s1 + $0xd8] sm:$0xf]
  %v85 = vld [vmem:[%s1 + $0xdc] sm:$0xf]
  %v86 = vld [vmem:[%s1 + $0xe0] sm:$0xf]
  %v87 = vld [vmem:[%s1 + $0xe4] sm:$0xf]
  %v88 = vld [vmem:[%s1 + $0xe8] sm:$0xf]
  %v89 = vld [vmem:[%s1 + $0xec] sm:$0xf]
  %v90 = vld [vmem:[%s1 + $0xf0] sm:$0xf]
  %v91 = vld [vmem:[%s1 + $0xf4] sm:$0xf]
  %v92 = vld [vmem:[%s1 + $0xf8] sm:$0xf]
  %v93 = vld [vmem:[%s1 + $0xfc] sm:$0xf]
  %v94 = vld [vmem:[%s1 + $0x100] sm:$0xf]
  %v95 = vld [vmem:[%s1 + $0x104] sm:$0xf]
  %v96 = vld [vmem:[%s1 + $0x108] sm:$0xf]
  %v97 = vld [vmem:[%s1 + $0x10c] sm:$0xf]
  %v98 = vld [vmem:[%s1 + $0x110] sm:$0xf]
  %v99 = vld [vmem:[%s1 + $0x114] sm:$0xf]
  %v100 = vld [vmem:[%s1 + $0x118] sm:$0xf]
  %v101 = vld [vmem:[%s1 + $0x11c] sm:$0xf]
  %v102 = vld [vmem:[%s1 + $0x120] sm:$0xf]
  %v103 = vld [vmem:[%s1 + $0x124] sm:$0xf]
  %v104 = vld [vmem:[%s1 + $0x128] sm:$0xf]
  %v105 = vld [vmem:[%s1 + $0x12c] sm:$0xf]
  %v106 = vld [vmem:[%s1 + $0x130] sm:$0xf]
  %v107 = vld [vmem:[%s1 + $0x134] sm:$0xf]
  %v108 = vld [vmem:[%s1 + $0x138] sm:$0xf]
  %v109 = vld [vmem:[%s1 + $0x13c] sm:$0xf]
  %v110 = vld [vmem:[%s1 + $0x140] sm:$0xf]
  %v111 = vld [vmem:[%s1 + $0x144] sm:$0xf]
  %v112 = vld [vmem:[%s1 + $0x148] sm:$0xf]
  %v113 = vld [vmem:[%s1 + $0x14c] sm:$0xf]
  %v114 = vld [vmem:[%s1 + $0x150] sm:$0xf]
  %v115 = vld [vmem:[%s1 + $0x154] sm:$0xf]
  %v116 = vld [vmem:[%s1 + $0x158] sm:$0xf]
  %v117 = vld [vmem:[%s1 + $0x15c] sm:$0xf]
  %v118 = vld [vmem:[%s1 + $0x160] sm:$0xf]
  %v119 = vld [vmem:[%s1 + $0x164] sm:$0xf]
  %v120 = vld [vmem:[%s1 + $0x168] sm:$0xf]
  %v121 = vld [vmem:[%s1 + $0x16c] sm:$0xf]
  %v122 = vld [vmem:[%s1 + $0x170] sm:$0xf]
  %v123 = vld [vmem:[%s1 + $0x174] sm:$0xf]
  %v124 = vld [vmem:[%s1 + $0x178] sm:$0xf]
  %v125 = vld [vmem:[%s1 + $0x17c] sm:$0xf]
  %v126 = vld [vmem:[%s1 + $0x180] sm:$0xf]
  %v127 = vld [vmem:[%s1 + $0x184] sm:$0xf]
  %v128 = vld [vmem:[%s1 + $0x188] sm:$0xf]
  %v129 = vld [vmem:[%s1 + $0x18c] sm:$0xf]
  %v130 = vld [vmem:[%s1 + $0x190] sm:$0xf]
  %v131 = vld [vmem:[%s1 + $0x194] sm:$0xf]
  %v132 = vld [vmem:[%s1 + $0x198] sm:$0xf]
  %v133 = vld [vmem:[%s1 + $0x19c] sm:$0xf]
  %v134 = vld [vmem:[%s1 + $0x1a0] sm:$0xf]
  %v135 = vld [vmem:[%s1 + $0x1a4] sm:$0xf]
  %v136 = vld [vmem:[%s1 + $0x1a8] sm:$0xf]
  %v137 = vld [vmem:[%s1 + $0x1ac] sm:$0xf]
  %v138 = vld [vmem:[%s1 + $0x1b0] sm:$0xf]
  %v139 = vld [vmem:[%s1 + $0x1b4] sm:$0xf]
  %v140 = vld [vmem:[%s1 + $0x1b8] sm:$0xf]
  %v141 = vld [vmem:[%s1 + $0x1bc] sm:$0xf]
  %v142 = vld [vmem:[%s1 + $0x1c0] sm:$0xf]
  %v143 = vld [vmem:[%s1 + $0x1c4] sm:$0xf]
  %v144 = vld [vmem:[%s1 + $0x1c8] sm:$0xf]
  %v145 = vld [vmem:[%s1 + $0x1cc] sm:$0xf]
  %v146 = vld [vmem:[%s1 + $0x1d0] sm:$0xf]
  %v147 = vld [vmem:[%s1 + $0x1d4] sm:$0xf]
  %v148 = vld [vmem:[%s1 + $0x1d8] sm:$0xf]
  %v149 = vld [vmem:[%s1 + $0x1dc] sm:$0xf]
  %v150 = vld [vmem:[%s1 + $0x1e0] sm:$0xf]
  %v151 = vld [vmem:[%s1 + $0x1e4] sm:$0xf]
  %v152 = vld [vmem:[%s1 + $0x1e8] sm:$0xf]
  %v153 = vld [vmem:[%s1 + $0x1ec] sm:$0xf]
  %v154 = vld [vmem:[%s1 + $0x1f0] sm:$0xf]
  %v155 = vld [vmem:[%s1 + $0x1f4] sm:$0xf]
  %v156 = vld [vmem:[%s1 + $0x1f8] sm:$0xf]
  %v157 = vld [vmem:[%s1 + $0x1fc] sm:$0xf]
  %v170 = vunpack.c.l.b16 %v18
  %v171 = vunpack.c.h.b16 %v18
  %v172 = vunpack.c.l.b16 %v19
  %v173 = vunpack.c.h.b16 %v19
  %v174 = vunpack.c.l.b16 %v20
  %v175 = vunpack.c.h.b16 %v20
  %v176 = vunpack.c.l.b16 %v21
  %v177 = vunpack.c.h.b16 %v21
  %v178 = vunpack.c.l.b16 %v22
  %v179 = vunpack.c.h.b16 %v22
  %v180 = vunpack.c.l.b16 %v23
  %v181 = vunpack.c.h.b16 %v23
  %v182 = vunpack.c.l.b16 %v24
  %v183 = vunpack.c.h.b16 %v24
  %v184 = vunpack.c.l.b16 %v25
  %v185 = vunpack.c.h.b16 %v25
  %v186 = vunpack.c.l.b16 %v26
  %v187 = vunpack.c.h.b16 %v26
  %v188 = vunpack.c.l.b16 %v27
  %v189 = vunpack.c.h.b16 %v27
  %v190 = vunpack.c.l.b16 %v28
  %v191 = vunpack.c.h.b16 %v28
  %v192 = vunpack.c.l.b16 %v29
  %v193 = vunpack.c.h.b16 %v29
  %v194 = vpack.c.b16 %v178, %v170
  %v195 = vpack.c.b16 %v179, %v171
  %v196 = vpack.c.b16 %v180, %v172
  %v197 = vpack.c.b16 %v181, %v173
  %v198 = vpack.c.b16 %v182, %v174
  %v199 = vpack.c.b16 %v183, %v175
  %v200 = vpack.c.b16 %v184, %v176
  %v201 = vpack.c.b16 %v185, %v177
  %v202 = vpack.c.b16 %v186, %v186
  %v203 = vpack.c.b16 %v187, %v187
  %v204 = vpack.c.b16 %v188, %v188
  %v205 = vpack.c.b16 %v189, %v189
  %v206 = vpack.c.b16 %v190, %v190
  %v207 = vpack.c.b16 %v191, %v191
  %v208 = vpack.c.b16 %v192, %v192
  %v209 = vpack.c.b16 %v193, %v193
  %v354 = vunpack.c.l.b16 %v30
  %v355 = vunpack.c.l.b16 %v31
  %v356 = vunpack.c.l.b16 %v32
  %v357 = vunpack.c.l.b16 %v33
  %v358 = vunpack.c.l.b16 %v34
  %v359 = vunpack.c.l.b16 %v35
  %v360 = vunpack.c.l.b16 %v36
  %v361 = vunpack.c.l.b16 %v37
  %v362 = vunpack.c.l.b16 %v38
  %v363 = vunpack.c.l.b16 %v39
  %v364 = vunpack.c.l.b16 %v40
  %v365 = vunpack.c.l.b16 %v41
  %v366 = vunpack.c.l.b16 %v42
  %v367 = vunpack.c.l.b16 %v43
  %v368 = vunpack.c.l.b16 %v44
  %v369 = vunpack.c.l.b16 %v45
  %v370 = vunpack.c.l.b16 %v46
  %v371 = vunpack.c.l.b16 %v47
  %v372 = vunpack.c.l.b16 %v48
  %v373 = vunpack.c.l.b16 %v49
  %v374 = vunpack.c.l.b16 %v50
  %v375 = vunpack.c.l.b16 %v51
  %v376 = vunpack.c.l.b16 %v52
  %v377 = vunpack.c.l.b16 %v53
  %v378 = vunpack.c.l.b16 %v54
  %v379 = vunpack.c.l.b16 %v55
  %v380 = vunpack.c.l.b16 %v56
  %v381 = vunpack.c.l.b16 %v57
  %v382 = vunpack.c.l.b16 %v58
  %v383 = vunpack.c.l.b16 %v59
  %v384 = vunpack.c.l.b16 %v60
  %v385 = vunpack.c.l.b16 %v61
  %v386 = vunpack.c.l.b16 %v62
  %v387 = vunpack.c.l.b16 %v63
  %v388 = vunpack.c.l.b16 %v64
  %v389 = vunpack.c.l.b16 %v65
  %v390 = vunpack.c.l.b16 %v66
  %v391 = vunpack.c.l.b16 %v67
  %v392 = vunpack.c.l.b16 %v68
  %v393 = vunpack.c.l.b16 %v69
  %v394 = vunpack.c.l.b16 %v70
  %v395 = vunpack.c.l.b16 %v71
  %v396 = vunpack.c.l.b16 %v72
  %v397 = vunpack.c.l.b16 %v73
  %v398 = vunpack.c.l.b16 %v74
  %v399 = vunpack.c.l.b16 %v75
  %v400 = vunpack.c.l.b16 %v76
  %v401 = vunpack.c.l.b16 %v77
  %v402 = vunpack.c.l.b16 %v78
  %v403 = vunpack.c.l.b16 %v79
  %v404 = vunpack.c.l.b16 %v80
  %v405 = vunpack.c.l.b16 %v81
  %v406 = vunpack.c.l.b16 %v82
  %v407 = vunpack.c.l.b16 %v83
  %v408 = vunpack.c.l.b16 %v84
  %v409 = vunpack.c.l.b16 %v85
  %v410 = vunpack.c.l.b16 %v86
  %v411 = vunpack.c.l.b16 %v87
  %v412 = vunpack.c.l.b16 %v88
  %v413 = vunpack.c.l.b16 %v89
  %v414 = vunpack.c.l.b16 %v90
  %v415 = vunpack.c.l.b16 %v91
  %v416 = vunpack.c.l.b16 %v92
  %v417 = vunpack.c.l.b16 %v93
  %v418 = vunpack.c.l.b16 %v94
  %v419 = vunpack.c.l.b16 %v95
  %v420 = vunpack.c.l.b16 %v96
  %v421 = vunpack.c.l.b16 %v97
  %v422 = vunpack.c.l.b16 %v98
  %v423 = vunpack.c.l.b16 %v99
  %v424 = vunpack.c.l.b16 %v100
  %v425 = vunpack.c.l.b16 %v101
  %v426 = vunpack.c.l.b16 %v102
  %v427 = vunpack.c.l.b16 %v103
  %v428 = vunpack.c.l.b16 %v104
  %v429 = vunpack.c.l.b16 %v105
  %v430 = vunpack.c.l.b16 %v106
  %v431 = vunpack.c.l.b16 %v107
  %v432 = vunpack.c.l.b16 %v108
  %v433 = vunpack.c.l.b16 %v109
  %v434 = vunpack.c.l.b16 %v110
  %v435 = vunpack.c.l.b16 %v111
  %v436 = vunpack.c.l.b16 %v112
  %v437 = vunpack.c.l.b16 %v113
  %v438 = vunpack.c.l.b16 %v114
  %v439 = vunpack.c.l.b16 %v115
  %v440 = vunpack.c.l.b16 %v116
  %v441 = vunpack.c.l.b16 %v117
  %v442 = vunpack.c.l.b16 %v118
  %v443 = vunpack.c.l.b16 %v119
  %v444 = vunpack.c.l.b16 %v120
  %v445 = vunpack.c.l.b16 %v121
  %v446 = vunpack.c.l.b16 %v122
  %v447 = vunpack.c.l.b16 %v123
  %v448 = vunpack.c.l.b16 %v124
  %v449 = vunpack.c.l.b16 %v125
  %v450 = vunpack.c.l.b16 %v126
  %v451 = vunpack.c.l.b16 %v127
  %v452 = vunpack.c.l.b16 %v128
  %v453 = vunpack.c.l.b16 %v129
  %v454 = vunpack.c.l.b16 %v130
  %v455 = vunpack.c.l.b16 %v131
  %v456 = vunpack.c.l.b16 %v132
  %v457 = vunpack.c.l.b16 %v133
  %v458 = vunpack.c.l.b16 %v134
  %v459 = vunpack.c.l.b16 %v135
  %v460 = vunpack.c.l.b16 %v136
  %v461 = vunpack.c.l.b16 %v137
  %v462 = vunpack.c.l.b16 %v138
  %v463 = vunpack.c.l.b16 %v139
  %v464 = vunpack.c.l.b16 %v140
  %v465 = vunpack.c.l.b16 %v141
  %v466 = vunpack.c.l.b16 %v142
  %v467 = vunpack.c.l.b16 %v143
  %v468 = vunpack.c.l.b16 %v144
  %v469 = vunpack.c.l.b16 %v145
  %v470 = vunpack.c.l.b16 %v146
  %v471 = vunpack.c.l.b16 %v147
  %v472 = vunpack.c.l.b16 %v148
  %v473 = vunpack.c.l.b16 %v149
  %v474 = vunpack.c.l.b16 %v150
  %v475 = vunpack.c.l.b16 %v151
  %v476 = vunpack.c.l.b16 %v152
  %v477 = vunpack.c.l.b16 %v153
  %v478 = vunpack.c.l.b16 %v154
  %v479 = vunpack.c.l.b16 %v155
  %v480 = vunpack.c.l.b16 %v156
  %v481 = vunpack.c.l.b16 %v157
  %v482 = vpack.c.b16 %v355, %v354
  %v483 = vpack.c.b16 %v357, %v356
  %v484 = vpack.c.b16 %v359, %v358
  %v485 = vpack.c.b16 %v361, %v360
  %v486 = vpack.c.b16 %v363, %v362
  %v487 = vpack.c.b16 %v365, %v364
  %v488 = vpack.c.b16 %v367, %v366
  %v489 = vpack.c.b16 %v369, %v368
  %v490 = vpack.c.b16 %v371, %v370
  %v491 = vpack.c.b16 %v373, %v372
  %v492 = vpack.c.b16 %v375, %v374
  %v493 = vpack.c.b16 %v377, %v376
  %v494 = vpack.c.b16 %v379, %v378
  %v495 = vpack.c.b16 %v381, %v380
  %v496 = vpack.c.b16 %v383, %v382
  %v497 = vpack.c.b16 %v385, %v384
  %v498 = vpack.c.b16 %v387, %v386
  %v499 = vpack.c.b16 %v389, %v388
  %v500 = vpack.c.b16 %v391, %v390
  %v501 = vpack.c.b16 %v393, %v392
  %v502 = vpack.c.b16 %v395, %v394
  %v503 = vpack.c.b16 %v397, %v396
  %v504 = vpack.c.b16 %v399, %v398
  %v505 = vpack.c.b16 %v401, %v400
  %v506 = vpack.c.b16 %v403, %v402
  %v507 = vpack.c.b16 %v405, %v404
  %v508 = vpack.c.b16 %v407, %v406
  %v509 = vpack.c.b16 %v409, %v408
  %v510 = vpack.c.b16 %v411, %v410
  %v511 = vpack.c.b16 %v413, %v412
  %v512 = vpack.c.b16 %v415, %v414
  %v513 = vpack.c.b16 %v417, %v416
  %v514 = vpack.c.b16 %v419, %v418
  %v515 = vpack.c.b16 %v421, %v420
  %v516 = vpack.c.b16 %v423, %v422
  %v517 = vpack.c.b16 %v425, %v424
  %v518 = vpack.c.b16 %v427, %v426
  %v519 = vpack.c.b16 %v429, %v428
  %v520 = vpack.c.b16 %v431, %v430
  %v521 = vpack.c.b16 %v433, %v432
  %v522 = vpack.c.b16 %v435, %v434
  %v523 = vpack.c.b16 %v437, %v436
  %v524 = vpack.c.b16 %v439, %v438
  %v525 = vpack.c.b16 %v441, %v440
  %v526 = vpack.c.b16 %v443, %v442
  %v527 = vpack.c.b16 %v445, %v444
  %v528 = vpack.c.b16 %v447, %v446
  %v529 = vpack.c.b16 %v449, %v448
  %v530 = vpack.c.b16 %v451, %v450
  %v531 = vpack.c.b16 %v453, %v452
  %v532 = vpack.c.b16 %v455, %v454
  %v533 = vpack.c.b16 %v457, %v456
  %v534 = vpack.c.b16 %v459, %v458
  %v535 = vpack.c.b16 %v461, %v460
  %v536 = vpack.c.b16 %v463, %v462
  %v537 = vpack.c.b16 %v465, %v464
  %v538 = vpack.c.b16 %v467, %v466
  %v539 = vpack.c.b16 %v469, %v468
  %v540 = vpack.c.b16 %v471, %v470
  %v541 = vpack.c.b16 %v473, %v472
  %v542 = vpack.c.b16 %v475, %v474
  %v543 = vpack.c.b16 %v477, %v476
  %v544 = vpack.c.b16 %v479, %v478
  %v545 = vpack.c.b16 %v481, %v480
  %610 = vmatprep.subr.bf16.mxu0 0
  %611 = vmatpush1.bf16.msra.mxu0 %v482
  %612 = vmatprep.subr.bf16.mxu0 0
  %613 = vmatpush1.bf16.msra.mxu0 %v483
  %614 = vmatprep.subr.bf16.mxu0 0
  %615 = vmatpush1.bf16.msra.mxu0 %v484
  %616 = vmatprep.subr.bf16.mxu0 0
  %617 = vmatpush1.bf16.msra.mxu0 %v485
  %618 = vmatprep.subr.bf16.mxu0 0
  %619 = vmatpush1.bf16.msra.mxu0 %v486
  %620 = vmatprep.subr.bf16.mxu0 0
  %621 = vmatpush1.bf16.msra.mxu0 %v487
  %622 = vmatprep.subr.bf16.mxu0 0
  %623 = vmatpush1.bf16.msra.mxu0 %v488
  %624 = vmatprep.subr.bf16.mxu0 0
  %625 = vmatpush1.bf16.msra.mxu0 %v489
  %626 = vmatprep.subr.bf16.mxu0 0
  %627 = vmatpush1.bf16.msra.mxu0 %v490
  %628 = vmatprep.subr.bf16.mxu0 0
  %629 = vmatpush1.bf16.msra.mxu0 %v491
  %630 = vmatprep.subr.bf16.mxu0 0
  %631 = vmatpush1.bf16.msra.mxu0 %v492
  %632 = vmatprep.subr.bf16.mxu0 0
  %633 = vmatpush1.bf16.msra.mxu0 %v493
  %634 = vmatprep.subr.bf16.mxu0 0
  %635 = vmatpush1.bf16.msra.mxu0 %v494
  %636 = vmatprep.subr.bf16.mxu0 0
  %637 = vmatpush1.bf16.msra.mxu0 %v495
  %638 = vmatprep.subr.bf16.mxu0 0
  %639 = vmatpush1.bf16.msra.mxu0 %v496
  %640 = vmatprep.subr.bf16.mxu0 0
  %641 = vmatpush1.bf16.msra.mxu0 %v497
  %642 = vmatprep.mubr.bf16.mxu0 %v195
  %643 = vmatmul.mubr.bf16.gmra.mrb[0].mxu0 %v194
  %v644 = vpop.f32.mrb[0].mxu0
  %v645 = vadd.f32 0.0, %v644
  %v646 = vpop.f32.mrb[0].mxu0
  %v647 = vpop.f32.mrb[0].mxu0
  %v648 = vadd.f32 0.0, %v647
  %v649 = vpop.f32.mrb[0].mxu0
  %650 = vmatprep.mubr.bf16.mxu0 %v203
  %651 = vmatmul.mubr.bf16.gmra.mrb[0].mxu0 %v202
  %v652 = vpop.f32.mrb[0].mxu0
  %v653 = vadd.f32 0.0, %v652
  %v654 = vpop.f32.mrb[0].mxu0
  %v655 = vpop.f32.mrb[0].mxu0
  %v656 = vpop.f32.mrb[0].mxu0
  %657 = vdwg.mxu0
  %658 = vmatprep.subr.bf16.mxu0 0
  %659 = vmatpush1.bf16.msra.mxu0 %v498
  %660 = vmatprep.subr.bf16.mxu0 0
  %661 = vmatpush1.bf16.msra.mxu0 %v499
  %662 = vmatprep.subr.bf16.mxu0 0
  %663 = vmatpush1.bf16.msra.mxu0 %v500
  %664 = vmatprep.subr.bf16.mxu0 0
  %665 = vmatpush1.bf16.msra.mxu0 %v501
  %666 = vmatprep.subr.bf16.mxu0 0
  %667 = vmatpush1.bf16.msra.mxu0 %v502
  %668 = vmatprep.subr.bf16.mxu0 0
  %669 = vmatpush1.bf16.msra.mxu0 %v503
  %670 = vmatprep.subr.bf16.mxu0 0
  %671 = vmatpush1.bf16.msra.mxu0 %v504
  %672 = vmatprep.subr.bf16.mxu0 0
  %673 = vmatpush1.bf16.msra.mxu0 %v505
  %674 = vmatprep.subr.bf16.mxu0 0
  %675 = vmatpush1.bf16.msra.mxu0 %v506
  %676 = vmatprep.subr.bf16.mxu0 0
  %677 = vmatpush1.bf16.msra.mxu0 %v507
  %678 = vmatprep.subr.bf16.mxu0 0
  %679 = vmatpush1.bf16.msra.mxu0 %v508
  %680 = vmatprep.subr.bf16.mxu0 0
  %681 = vmatpush1.bf16.msra.mxu0 %v509
  %682 = vmatprep.subr.bf16.mxu0 0
  %683 = vmatpush1.bf16.msra.mxu0 %v510
  %684 = vmatprep.subr.bf16.mxu0 0
  %685 = vmatpush1.bf16.msra.mxu0 %v511
  %686 = vmatprep.subr.bf16.mxu0 0
  %687 = vmatpush1.bf16.msra.mxu0 %v512
  %688 = vmatprep.subr.bf16.mxu0 0
  %689 = vmatpush1.bf16.msra.mxu0 %v513
  %690 = vmatprep.mubr.bf16.mxu0 %v197
  %691 = vmatmul.mubr.bf16.gmra.mrb[0].mxu0 %v196
  %v692 = vpop.f32.mrb[0].mxu0
  %v693 = vadd.f32 %v645, %v692
  %v694 = vpop.f32.mrb[0].mxu0
  %v695 = vpop.f32.mrb[0].mxu0
  %v696 = vadd.f32 %v648, %v695
  %v697 = vpop.f32.mrb[0].mxu0
  %698 = vmatprep.mubr.bf16.mxu0 %v205
  %699 = vmatmul.mubr.bf16.gmra.mrb[0].mxu0 %v204
  %v700 = vpop.f32.mrb[0].mxu0
  %v701 = vadd.f32 %v653, %v700
  %v702 = vpop.f32.mrb[0].mxu0
  %v703 = vpop.f32.mrb[0].mxu0
  %v704 = vpop.f32.mrb[0].mxu0
  %705 = vdwg.mxu0
  %706 = vmatprep.subr.bf16.mxu0 0
  %707 = vmatpush1.bf16.msra.mxu0 %v514
  %708 = vmatprep.subr.bf16.mxu0 0
  %709 = vmatpush1.bf16.msra.mxu0 %v515
  %710 = vmatprep.subr.bf16.mxu0 0
  %711 = vmatpush1.bf16.msra.mxu0 %v516
  %712 = vmatprep.subr.bf16.mxu0 0
  %713 = vmatpush1.bf16.msra.mxu0 %v517
  %714 = vmatprep.subr.bf16.mxu0 0
  %715 = vmatpush1.bf16.msra.mxu0 %v518
  %716 = vmatprep.subr.bf16.mxu0 0
  %717 = vmatpush1.bf16.msra.mxu0 %v519
  %718 = vmatprep.subr.bf16.mxu0 0
  %719 = vmatpush1.bf16.msra.mxu0 %v520
  %720 = vmatprep.subr.bf16.mxu0 0
  %721 = vmatpush1.bf16.msra.mxu0 %v521
  %722 = vmatprep.subr.bf16.mxu0 0
  %723 = vmatpush1.bf16.msra.mxu0 %v522
  %724 = vmatprep.subr.bf16.mxu0 0
  %725 = vmatpush1.bf16.msra.mxu0 %v523
  %726 = vmatprep.subr.bf16.mxu0 0
  %727 = vmatpush1.bf16.msra.mxu0 %v524
  %728 = vmatprep.subr.bf16.mxu0 0
  %729 = vmatpush1.bf16.msra.mxu0 %v525
  %730 = vmatprep.subr.bf16.mxu0 0
  %731 = vmatpush1.bf16.msra.mxu0 %v526
  %732 = vmatprep.subr.bf16.mxu0 0
  %733 = vmatpush1.bf16.msra.mxu0 %v527
  %734 = vmatprep.subr.bf16.mxu0 0
  %735 = vmatpush1.bf16.msra.mxu0 %v528
  %736 = vmatprep.subr.bf16.mxu0 0
  %737 = vmatpush1.bf16.msra.mxu0 %v529
  %738 = vmatprep.mubr.bf16.mxu0 %v199
  %739 = vmatmul.mubr.bf16.gmra.mrb[0].mxu0 %v198
  %v740 = vpop.f32.mrb[0].mxu0
  %v741 = vadd.f32 %v693, %v740
  %v742 = vpop.f32.mrb[0].mxu0
  %v743 = vpop.f32.mrb[0].mxu0
  %v744 = vadd.f32 %v696, %v743
  %v745 = vpop.f32.mrb[0].mxu0
  %746 = vmatprep.mubr.bf16.mxu0 %v207
  %747 = vmatmul.mubr.bf16.gmra.mrb[0].mxu0 %v206
  %v748 = vpop.f32.mrb[0].mxu0
  %v749 = vadd.f32 %v701, %v748
  %v750 = vpop.f32.mrb[0].mxu0
  %v751 = vpop.f32.mrb[0].mxu0
  %v752 = vpop.f32.mrb[0].mxu0
  %753 = vdwg.mxu0
  %754 = vmatprep.subr.bf16.mxu0 0
  %755 = vmatpush1.bf16.msra.mxu0 %v530
  %756 = vmatprep.subr.bf16.mxu0 0
  %757 = vmatpush1.bf16.msra.mxu0 %v531
  %758 = vmatprep.subr.bf16.mxu0 0
  %759 = vmatpush1.bf16.msra.mxu0 %v532
  %760 = vmatprep.subr.bf16.mxu0 0
  %761 = vmatpush1.bf16.msra.mxu0 %v533
  %762 = vmatprep.subr.bf16.mxu0 0
  %763 = vmatpush1.bf16.msra.mxu0 %v534
  %764 = vmatprep.subr.bf16.mxu0 0
  %765 = vmatpush1.bf16.msra.mxu0 %v535
  %766 = vmatprep.subr.bf16.mxu0 0
  %767 = vmatpush1.bf16.msra.mxu0 %v536
  %768 = vmatprep.subr.bf16.mxu0 0
  %769 = vmatpush1.bf16.msra.mxu0 %v537
  %770 = vmatprep.subr.bf16.mxu0 0
  %771 = vmatpush1.bf16.msra.mxu0 %v538
  %772 = vmatprep.subr.bf16.mxu0 0
  %773 = vmatpush1.bf16.msra.mxu0 %v539
  %774 = vmatprep.subr.bf16.mxu0 0
  %775 = vmatpush1.bf16.msra.mxu0 %v540
  %776 = vmatprep.subr.bf16.mxu0 0
  %777 = vmatpush1.bf16.msra.mxu0 %v541
  %778 = vmatprep.subr.bf16.mxu0 0
  %779 = vmatpush1.bf16.msra.mxu0 %v542
  %780 = vmatprep.subr.bf16.mxu0 0
  %781 = vmatpush1.bf16.msra.mxu0 %v543
  %782 = vmatprep.subr.bf16.mxu0 0
  %783 = vmatpush1.bf16.msra.mxu0 %v544
  %784 = vmatprep.subr.bf16.mxu0 0
  %785 = vmatpush1.bf16.msra.mxu0 %v545
  %786 = vmatprep.mubr.bf16.mxu0 %v201
  %787 = vmatmul.mubr.bf16.gmra.mrb[0].mxu0 %v200
  %v788 = vpop.f32.mrb[0].mxu0
  %v789 = vadd.f32 %v741, %v788
  %v790 = vpop.f32.mrb[0].mxu0
  %v791 = vpop.f32.mrb[0].mxu0
  %v792 = vadd.f32 %v744, %v791
  %v793 = vpop.f32.mrb[0].mxu0
  %794 = vmatprep.mubr.bf16.mxu0 %v209
  %795 = vmatmul.mubr.bf16.gmra.mrb[0].mxu0 %v208
  %v796 = vpop.f32.mrb[0].mxu0
  %v797 = vadd.f32 %v749, %v796
  %v798 = vpop.f32.mrb[0].mxu0
  %v799 = vpop.f32.mrb[0].mxu0
  %v800 = vpop.f32.mrb[0].mxu0
  %801 = vdwg.mxu0
  %v802 = vadd.f32 %v789, %v792
  %v803 = vadd.f32 %v802, %v797
  %v804 = vrot.slane %v803, 4
  %v805 = vadd.f32 %v803, %v804
  %v806 = vrot.slane %v805, 2
  %v807 = vadd.f32 %v805, %v806
  %v808 = vrot.slane %v807, 1
  %v809 = vadd.f32 %v807, %v808
  %v810 = vmul.f32 %v809, 0.055555556
  %v811 = vmul.f32 %v789, %v789
  %v812 = vmul.f32 %v792, %v792
  %v813 = vmul.f32 %v797, %v797
  %v814 = vadd.f32 %v811, %v812
  %v815 = vadd.f32 %v814, %v813
  %v816 = vrot.slane %v815, 4
  %v817 = vadd.f32 %v815, %v816
  %v818 = vrot.slane %v817, 2
  %v819 = vadd.f32 %v817, %v818
  %v820 = vrot.slane %v819, 1
  %v821 = vadd.f32 %v819, %v820
  %v822 = vmul.f32 %v821, 0.055555556
  %v823 = vmul.f32 %v810, %v810
  %v824 = vsub.f32 %v822, %v823
  %v825 = vmax.f32 %v824, 0.0
  %v826 = vadd.f32 %v825, 1e-05
  %v827 = vrsqrt.pop %v826
  %v828 = vld [vmem:[%s2] sm:$0x1]
  %v829 = vmul.f32 %v827, %v828
  %v830 = vsub.f32 %v789, %v810
  %v831 = vsub.f32 %v792, %v810
  %v832 = vsub.f32 %v797, %v810
  %v833 = vlaneseq
  %v834 = vshrl.u32 %v833, 7
  %v835 = vsub.s32 0, %v834
  %v836 = vrot.slane %v829, %v835
  %v837 = vmul.f32 %v830, %v836
  %v838 = vmul.f32 %v831, %v836
  %v839 = vmul.f32 %v832, %v836
  %v840 = vld [vmem:[%s3] sm:$0x1]
  %v842 = vlaneseq
  %v843 = vshrl.u32 %v842, 7
  %v844 = vsub.s32 0, %v843
  %v845 = vrot.slane %v840, %v844
  %v847 = vadd.f32 %v837, %v845
  %v848 = vadd.f32 %v838, %v845
  %v849 = vadd.f32 %v839, %v845
  %v850 = vmul.f32 %v847, 0.2
  %v851 = vmul.f32 %v848, 0.2
  %v852 = vmul.f32 %v849, 0.2
  %v853 = vmax.f32 %v847, %v850
  %v854 = vmax.f32 %v848, %v851
  %v855 = vmax.f32 %v849, %v852
  %v856 = vpack.c.bf16 %v854, %v853
  %v857 = vpack.c.bf16 %v855, %v855
  %v860 = vunpack.c.l.b16 %v856
  %v861 = vunpack.c.h.b16 %v856
  %v862 = vunpack.c.l.b16 %v857
  %v863 = vpack.c.b16 %v860, %v860
  %v864 = vpack.c.b16 %v861, %v861
  %v865 = vpack.c.b16 %v862, %v862
  %869 = vst [vmem:[%s4] sm:$0xf] %v863
  %870 = vst [vmem:[%s4 + $0x4] sm:$0xf] %v864
  %871 = vst [vmem:[%s4 + $0x8] sm:$0xf] %v865
  // Predicated region
  $region18: #{wang2020_discriminator_forward.8} parent=0 // pred_check
    _
  $region19: #{wang2020_discriminator_forward.8} parent=0 // pred_check_branch
    %873 = sbr.rel (0) target = $region21
  $region20: #{wang2020_discriminator_forward.8} parent=0 // pred_region
    _
  $region21: #{wang2020_discriminator_forward.8} parent=0 // pred_fallthru
    _
  // Predicated region
  $region22: #{wang2020_discriminator_forward.8} parent=0 // pred_check
    _
  $region23: #{wang2020_discriminator_forward.8} parent=0 // pred_check_branch
    %875 = sbr.rel (0) target = $region25
  $region24: #{wang2020_discriminator_forward.8} parent=0 // pred_region
    _
  $region25: #{wang2020_discriminator_forward.8} parent=0 // pred_fallthru
    _

// kernel: wang2020_discriminator_forward.9
$region0: #{wang2020_discriminator_forward.9}
  #allocation0 [shape = 'u32[]', space=smem, size = 0x4, offset = 0x4, fixed_abs, tag = 'smem constant byte address 0x4 - core index']
  #allocation1 [shape = 'u32[144,128]{1,0:T(1,128)}', space=vmem, size = 0x12000, scoped, tag = 'internal scratch']
  %s0 = inlined_call_operand.vmem [shape: bf16[8,2048], index: 0, kind: input, shape index: {}]
  %s1 = inlined_call_operand.vmem [shape: bf16[2048,128], index: 1, kind: input, shape index: {}]
  %s2 = inlined_call_operand.vmem [shape: f32[1,128], index: 2, kind: input, shape index: {}]
  %s3 = inlined_call_operand.vmem [shape: f32[8,128], index: 3, kind: output, shape index: {}]
  %s4 = sld [smem:[#allocation0]]
  $region22: #{wang2020_discriminator_forward.9} parent=0
    _
  %s6 = ssub.s32 1, %s4
  %s7 = scalar_select 0, %s6, %s4
  // Predicated region
  $region2: #{wang2020_discriminator_forward.9} parent=0 // pred_check
    _
  $region3: #{wang2020_discriminator_forward.9} parent=0 // pred_check_branch
    %9 = sbr.rel (0) target = $region5
  $region4: #{wang2020_discriminator_forward.9} parent=0 // pred_region
    _
  $region5: #{wang2020_discriminator_forward.9} parent=0 // pred_fallthru
    _
  // Predicated region
  $region6: #{wang2020_discriminator_forward.9} parent=0 // pred_check
    _
  $region7: #{wang2020_discriminator_forward.9} parent=0 // pred_check_branch
    %11 = sbr.rel (0) target = $region9
  $region8: #{wang2020_discriminator_forward.9} parent=0 // pred_region
    _
  $region9: #{wang2020_discriminator_forward.9} parent=0 // pred_fallthru
    _
  // Predicated region
  $region10: #{wang2020_discriminator_forward.9} parent=0 // pred_check
    _
  $region11: #{wang2020_discriminator_forward.9} parent=0 // pred_check_branch
    %13 = sbr.rel (0) target = $region13
  $region12: #{wang2020_discriminator_forward.9} parent=0 // pred_region
    _
  $region13: #{wang2020_discriminator_forward.9} parent=0 // pred_fallthru
    _
  %v15 = vld [vmem:[%s0] sm:$0xff]
  %v16 = vld [vmem:[%s0 + $0x8] sm:$0xff]
  %v17 = vld [vmem:[%s0 + $0x10] sm:$0xff]
  %v18 = vld [vmem:[%s0 + $0x18] sm:$0xff]
  %v19 = vld [vmem:[%s0 + $0x20] sm:$0xff]
  %v20 = vld [vmem:[%s0 + $0x28] sm:$0xff]
  %v21 = vld [vmem:[%s0 + $0x30] sm:$0xff]
  %v22 = vld [vmem:[%s0 + $0x38] sm:$0xff]
  %v23 = vld [vmem:[%s1] sm:$0xf]
  %v24 = vld [vmem:[%s1 + $0x4] sm:$0xf]
  %v25 = vld [vmem:[%s1 + $0x8] sm:$0xf]
  %v26 = vld [vmem:[%s1 + $0xc] sm:$0xf]
  %v27 = vld [vmem:[%s1 + $0x10] sm:$0xf]
  %v28 = vld [vmem:[%s1 + $0x14] sm:$0xf]
  %v29 = vld [vmem:[%s1 + $0x18] sm:$0xf]
  %v30 = vld [vmem:[%s1 + $0x1c] sm:$0xf]
  %v31 = vld [vmem:[%s1 + $0x20] sm:$0xf]
  %v32 = vld [vmem:[%s1 + $0x24] sm:$0xf]
  %v33 = vld [vmem:[%s1 + $0x28] sm:$0xf]
  %v34 = vld [vmem:[%s1 + $0x2c] sm:$0xf]
  %v35 = vld [vmem:[%s1 + $0x30] sm:$0xf]
  %v36 = vld [vmem:[%s1 + $0x34] sm:$0xf]
  %v37 = vld [vmem:[%s1 + $0x38] sm:$0xf]
  %v38 = vld [vmem:[%s1 + $0x3c] sm:$0xf]
  %v39 = vld [vmem:[%s1 + $0x40] sm:$0xf]
  %v40 = vld [vmem:[%s1 + $0x44] sm:$0xf]
  %v41 = vld [vmem:[%s1 + $0x48] sm:$0xf]
  %v42 = vld [vmem:[%s1 + $0x4c] sm:$0xf]
  %v43 = vld [vmem:[%s1 + $0x50] sm:$0xf]
  %v44 = vld [vmem:[%s1 + $0x54] sm:$0xf]
  %v45 = vld [vmem:[%s1 + $0x58] sm:$0xf]
  %v46 = vld [vmem:[%s1 + $0x5c] sm:$0xf]
  %v47 = vld [vmem:[%s1 + $0x60] sm:$0xf]
  %v48 = vld [vmem:[%s1 + $0x64] sm:$0xf]
  %v49 = vld [vmem:[%s1 + $0x68] sm:$0xf]
  %v50 = vld [vmem:[%s1 + $0x6c] sm:$0xf]
  %v51 = vld [vmem:[%s1 + $0x70] sm:$0xf]
  %v52 = vld [vmem:[%s1 + $0x74] sm:$0xf]
  %v53 = vld [vmem:[%s1 + $0x78] sm:$0xf]
  %v54 = vld [vmem:[%s1 + $0x7c] sm:$0xf]
  %v55 = vld [vmem:[%s1 + $0x80] sm:$0xf]
  %v56 = vld [vmem:[%s1 + $0x84] sm:$0xf]
  %v57 = vld [vmem:[%s1 + $0x88] sm:$0xf]
  %v58 = vld [vmem:[%s1 + $0x8c] sm:$0xf]
  %v59 = vld [vmem:[%s1 + $0x90] sm:$0xf]
  %v60 = vld [vmem:[%s1 + $0x94] sm:$0xf]
  %v61 = vld [vmem:[%s1 + $0x98] sm:$0xf]
  %v62 = vld [vmem:[%s1 + $0x9c] sm:$0xf]
  %v63 = vld [vmem:[%s1 + $0xa0] sm:$0xf]
  %v64 = vld [vmem:[%s1 + $0xa4] sm:$0xf]
  %v65 = vld [vmem:[%s1 + $0xa8] sm:$0xf]
  %v66 = vld [vmem:[%s1 + $0xac] sm:$0xf]
  %v67 = vld [vmem:[%s1 + $0xb0] sm:$0xf]
  %v68 = vld [vmem:[%s1 + $0xb4] sm:$0xf]
  %v69 = vld [vmem:[%s1 + $0xb8] sm:$0xf]
  %v70 = vld [vmem:[%s1 + $0xbc] sm:$0xf]
  %v71 = vld [vmem:[%s1 + $0xc0] sm:$0xf]
  %v72 = vld [vmem:[%s1 + $0xc4] sm:$0xf]
  %v73 = vld [vmem:[%s1 + $0xc8] sm:$0xf]
  %v74 = vld [vmem:[%s1 + $0xcc] sm:$0xf]
  %v75 = vld [vmem:[%s1 + $0xd0] sm:$0xf]
  %v76 = vld [vmem:[%s1 + $0xd4] sm:$0xf]
  %v77 = vld [vmem:[%s1 + $0xd8] sm:$0xf]
  %v78 = vld [vmem:[%s1 + $0xdc] sm:$0xf]
  %v79 = vld [vmem:[%s1 + $0xe0] sm:$0xf]
  %v80 = vld [vmem:[%s1 + $0xe4] sm:$0xf]
  %v81 = vld [vmem:[%s1 + $0xe8] sm:$0xf]
  %v82 = vld [vmem:[%s1 + $0xec] sm:$0xf]
  %v83 = vld [vmem:[%s1 + $0xf0] sm:$0xf]
  %v84 = vld [vmem:[%s1 + $0xf4] sm:$0xf]
  %v85 = vld [vmem:[%s1 + $0xf8] sm:$0xf]
  %v86 = vld [vmem:[%s1 + $0xfc] sm:$0xf]
  %v87 = vld [vmem:[%s1 + $0x100] sm:$0xf]
  %v88 = vld [vmem:[%s1 + $0x104] sm:$0xf]
  %v89 = vld [vmem:[%s1 + $0x108] sm:$0xf]
  %v90 = vld [vmem:[%s1 + $0x10c] sm:$0xf]
  %v91 = vld [vmem:[%s1 + $0x110] sm:$0xf]
  %v92 = vld [vmem:[%s1 + $0x114] sm:$0xf]
  %v93 = vld [vmem:[%s1 + $0x118] sm:$0xf]
  %v94 = vld [vmem:[%s1 + $0x11c] sm:$0xf]
  %v95 = vld [vmem:[%s1 + $0x120] sm:$0xf]
  %v96 = vld [vmem:[%s1 + $0x124] sm:$0xf]
  %v97 = vld [vmem:[%s1 + $0x128] sm:$0xf]
  %v98 = vld [vmem:[%s1 + $0x12c] sm:$0xf]
  %v99 = vld [vmem:[%s1 + $0x130] sm:$0xf]
  %v100 = vld [vmem:[%s1 + $0x134] sm:$0xf]
  %v101 = vld [vmem:[%s1 + $0x138] sm:$0xf]
  %v102 = vld [vmem:[%s1 + $0x13c] sm:$0xf]
  %v103 = vld [vmem:[%s1 + $0x140] sm:$0xf]
  %v104 = vld [vmem:[%s1 + $0x144] sm:$0xf]
  %v105 = vld [vmem:[%s1 + $0x148] sm:$0xf]
  %v106 = vld [vmem:[%s1 + $0x14c] sm:$0xf]
  %v107 = vld [vmem:[%s1 + $0x150] sm:$0xf]
  %v108 = vld [vmem:[%s1 + $0x154] sm:$0xf]
  %v109 = vld [vmem:[%s1 + $0x158] sm:$0xf]
  %v110 = vld [vmem:[%s1 + $0x15c] sm:$0xf]
  %v111 = vld [vmem:[%s1 + $0x160] sm:$0xf]
  %v112 = vld [vmem:[%s1 + $0x164] sm:$0xf]
  %v113 = vld [vmem:[%s1 + $0x168] sm:$0xf]
  %v114 = vld [vmem:[%s1 + $0x16c] sm:$0xf]
  %v115 = vld [vmem:[%s1 + $0x170] sm:$0xf]
  %v116 = vld [vmem:[%s1 + $0x174] sm:$0xf]
  %v117 = vld [vmem:[%s1 + $0x178] sm:$0xf]
  %v118 = vld [vmem:[%s1 + $0x17c] sm:$0xf]
  %v119 = vld [vmem:[%s1 + $0x180] sm:$0xf]
  %v120 = vld [vmem:[%s1 + $0x184] sm:$0xf]
  %v121 = vld [vmem:[%s1 + $0x188] sm:$0xf]
  %v122 = vld [vmem:[%s1 + $0x18c] sm:$0xf]
  %v123 = vld [vmem:[%s1 + $0x190] sm:$0xf]
  %v124 = vld [vmem:[%s1 + $0x194] sm:$0xf]
  %v125 = vld [vmem:[%s1 + $0x198] sm:$0xf]
  %v126 = vld [vmem:[%s1 + $0x19c] sm:$0xf]
  %v127 = vld [vmem:[%s1 + $0x1a0] sm:$0xf]
  %v128 = vld [vmem:[%s1 + $0x1a4] sm:$0xf]
  %v129 = vld [vmem:[%s1 + $0x1a8] sm:$0xf]
  %v130 = vld [vmem:[%s1 + $0x1ac] sm:$0xf]
  %v131 = vld [vmem:[%s1 + $0x1b0] sm:$0xf]
  %v132 = vld [vmem:[%s1 + $0x1b4] sm:$0xf]
  %v133 = vld [vmem:[%s1 + $0x1b8] sm:$0xf]
  %v134 = vld [vmem:[%s1 + $0x1bc] sm:$0xf]
  %v135 = vld [vmem:[%s1 + $0x1c0] sm:$0xf]
  %v136 = vld [vmem:[%s1 + $0x1c4] sm:$0xf]
  %v137 = vld [vmem:[%s1 + $0x1c8] sm:$0xf]
  %v138 = vld [vmem:[%s1 + $0x1cc] sm:$0xf]
  %v139 = vld [vmem:[%s1 + $0x1d0] sm:$0xf]
  %v140 = vld [vmem:[%s1 + $0x1d4] sm:$0xf]
  %v141 = vld [vmem:[%s1 + $0x1d8] sm:$0xf]
  %v142 = vld [vmem:[%s1 + $0x1dc] sm:$0xf]
  %v143 = vld [vmem:[%s1 + $0x1e0] sm:$0xf]
  %v144 = vld [vmem:[%s1 + $0x1e4] sm:$0xf]
  %v145 = vld [vmem:[%s1 + $0x1e8] sm:$0xf]
  %v146 = vld [vmem:[%s1 + $0x1ec] sm:$0xf]
  %v147 = vld [vmem:[%s1 + $0x1f0] sm:$0xf]
  %v148 = vld [vmem:[%s1 + $0x1f4] sm:$0xf]
  %v149 = vld [vmem:[%s1 + $0x1f8] sm:$0xf]
  %v150 = vld [vmem:[%s1 + $0x1fc] sm:$0xf]
  %v151 = vld [vmem:[%s1 + $0x200] sm:$0xf]
  %v152 = vld [vmem:[%s1 + $0x204] sm:$0xf]
  %v153 = vld [vmem:[%s1 + $0x208] sm:$0xf]
  %v154 = vld [vmem:[%s1 + $0x20c] sm:$0xf]
  %v155 = vld [vmem:[%s1 + $0x210] sm:$0xf]
  %v156 = vld [vmem:[%s1 + $0x214] sm:$0xf]
  %v157 = vld [vmem:[%s1 + $0x218] sm:$0xf]
  %v158 = vld [vmem:[%s1 + $0x21c] sm:$0xf]
  %v159 = vld [vmem:[%s1 + $0x220] sm:$0xf]
  %v160 = vld [vmem:[%s1 + $0x224] sm:$0xf]
  %v161 = vld [vmem:[%s1 + $0x228] sm:$0xf]
  %v162 = vld [vmem:[%s1 + $0x22c] sm:$0xf]
  %v163 = vld [vmem:[%s1 + $0x230] sm:$0xf]
  %v164 = vld [vmem:[%s1 + $0x234] sm:$0xf]
  %v165 = vld [vmem:[%s1 + $0x238] sm:$0xf]
  %v166 = vld [vmem:[%s1 + $0x23c] sm:$0xf]
  %v167 = vld [vmem:[%s1 + $0x240] sm:$0xf]
  %v168 = vld [vmem:[%s1 + $0x244] sm:$0xf]
  %v169 = vld [vmem:[%s1 + $0x248] sm:$0xf]
  %v170 = vld [vmem:[%s1 + $0x24c] sm:$0xf]
  %v171 = vld [vmem:[%s1 + $0x250] sm:$0xf]
  %v172 = vld [vmem:[%s1 + $0x254] sm:$0xf]
  %v173 = vld [vmem:[%s1 + $0x258] sm:$0xf]
  %v174 = vld [vmem:[%s1 + $0x25c] sm:$0xf]
  %v175 = vld [vmem:[%s1 + $0x260] sm:$0xf]
  %v176 = vld [vmem:[%s1 + $0x264] sm:$0xf]
  %v177 = vld [vmem:[%s1 + $0x268] sm:$0xf]
  %v178 = vld [vmem:[%s1 + $0x26c] sm:$0xf]
  %v179 = vld [vmem:[%s1 + $0x270] sm:$0xf]
  %v180 = vld [vmem:[%s1 + $0x274] sm:$0xf]
  %v181 = vld [vmem:[%s1 + $0x278] sm:$0xf]
  %v182 = vld [vmem:[%s1 + $0x27c] sm:$0xf]
  %v183 = vld [vmem:[%s1 + $0x280] sm:$0xf]
  %v184 = vld [vmem:[%s1 + $0x284] sm:$0xf]
  %v185 = vld [vmem:[%s1 + $0x288] sm:$0xf]
  %v186 = vld [vmem:[%s1 + $0x28c] sm:$0xf]
  %v187 = vld [vmem:[%s1 + $0x290] sm:$0xf]
  %v188 = vld [vmem:[%s1 + $0x294] sm:$0xf]
  %v189 = vld [vmem:[%s1 + $0x298] sm:$0xf]
  %v190 = vld [vmem:[%s1 + $0x29c] sm:$0xf]
  %v191 = vld [vmem:[%s1 + $0x2a0] sm:$0xf]
  %v192 = vld [vmem:[%s1 + $0x2a4] sm:$0xf]
  %v193 = vld [vmem:[%s1 + $0x2a8] sm:$0xf]
  %v194 = vld [vmem:[%s1 + $0x2ac] sm:$0xf]
  %v195 = vld [vmem:[%s1 + $0x2b0] sm:$0xf]
  %v196 = vld [vmem:[%s1 + $0x2b4] sm:$0xf]
  %v197 = vld [vmem:[%s1 + $0x2b8] sm:$0xf]
  %v198 = vld [vmem:[%s1 + $0x2bc] sm:$0xf]
  %v199 = vld [vmem:[%s1 + $0x2c0] sm:$0xf]
  %v200 = vld [vmem:[%s1 + $0x2c4] sm:$0xf]
  %v201 = vld [vmem:[%s1 + $0x2c8] sm:$0xf]
  %v202 = vld [vmem:[%s1 + $0x2cc] sm:$0xf]
  %v203 = vld [vmem:[%s1 + $0x2d0] sm:$0xf]
  %v204 = vld [vmem:[%s1 + $0x2d4] sm:$0xf]
  %v205 = vld [vmem:[%s1 + $0x2d8] sm:$0xf]
  %v206 = vld [vmem:[%s1 + $0x2dc] sm:$0xf]
  %v207 = vld [vmem:[%s1 + $0x2e0] sm:$0xf]
  %v208 = vld [vmem:[%s1 + $0x2e4] sm:$0xf]
  %v209 = vld [vmem:[%s1 + $0x2e8] sm:$0xf]
  %v210 = vld [vmem:[%s1 + $0x2ec] sm:$0xf]
  %v211 = vld [vmem:[%s1 + $0x2f0] sm:$0xf]
  %v212 = vld [vmem:[%s1 + $0x2f4] sm:$0xf]
  %v213 = vld [vmem:[%s1 + $0x2f8] sm:$0xf]
  %v214 = vld [vmem:[%s1 + $0x2fc] sm:$0xf]
  %v215 = vld [vmem:[%s1 + $0x300] sm:$0xf]
  %v216 = vld [vmem:[%s1 + $0x304] sm:$0xf]
  %v217 = vld [vmem:[%s1 + $0x308] sm:$0xf]
  %v218 = vld [vmem:[%s1 + $0x30c] sm:$0xf]
  %v219 = vld [vmem:[%s1 + $0x310] sm:$0xf]
  %v220 = vld [vmem:[%s1 + $0x314] sm:$0xf]
  %v221 = vld [vmem:[%s1 + $0x318] sm:$0xf]
  %v222 = vld [vmem:[%s1 + $0x31c] sm:$0xf]
  %v223 = vld [vmem:[%s1 + $0x320] sm:$0xf]
  %v224 = vld [vmem:[%s1 + $0x324] sm:$0xf]
  %v225 = vld [vmem:[%s1 + $0x328] sm:$0xf]
  %v226 = vld [vmem:[%s1 + $0x32c] sm:$0xf]
  %v227 = vld [vmem:[%s1 + $0x330] sm:$0xf]
  %v228 = vld [vmem:[%s1 + $0x334] sm:$0xf]
  %v229 = vld [vmem:[%s1 + $0x338] sm:$0xf]
  %v230 = vld [vmem:[%s1 + $0x33c] sm:$0xf]
  %v231 = vld [vmem:[%s1 + $0x340] sm:$0xf]
  %v232 = vld [vmem:[%s1 + $0x344] sm:$0xf]
  %v233 = vld [vmem:[%s1 + $0x348] sm:$0xf]
  %v234 = vld [vmem:[%s1 + $0x34c] sm:$0xf]
  %v235 = vld [vmem:[%s1 + $0x350] sm:$0xf]
  %v236 = vld [vmem:[%s1 + $0x354] sm:$0xf]
  %v237 = vld [vmem:[%s1 + $0x358] sm:$0xf]
  %v238 = vld [vmem:[%s1 + $0x35c] sm:$0xf]
  %v239 = vld [vmem:[%s1 + $0x360] sm:$0xf]
  %v240 = vld [vmem:[%s1 + $0x364] sm:$0xf]
  %v241 = vld [vmem:[%s1 + $0x368] sm:$0xf]
  %v242 = vld [vmem:[%s1 + $0x36c] sm:$0xf]
  %v243 = vld [vmem:[%s1 + $0x370] sm:$0xf]
  %v244 = vld [vmem:[%s1 + $0x374] sm:$0xf]
  %v245 = vld [vmem:[%s1 + $0x378] sm:$0xf]
  %v246 = vld [vmem:[%s1 + $0x37c] sm:$0xf]
  %v247 = vld [vmem:[%s1 + $0x380] sm:$0xf]
  %v248 = vld [vmem:[%s1 + $0x384] sm:$0xf]
  %v249 = vld [vmem:[%s1 + $0x388] sm:$0xf]
  %v250 = vld [vmem:[%s1 + $0x38c] sm:$0xf]
  %v251 = vld [vmem:[%s1 + $0x390] sm:$0xf]
  %v252 = vld [vmem:[%s1 + $0x394] sm:$0xf]
  %v253 = vld [vmem:[%s1 + $0x398] sm:$0xf]
  %v254 = vld [vmem:[%s1 + $0x39c] sm:$0xf]
  %v255 = vld [vmem:[%s1 + $0x3a0] sm:$0xf]
  %v256 = vld [vmem:[%s1 + $0x3a4] sm:$0xf]
  %v257 = vld [vmem:[%s1 + $0x3a8] sm:$0xf]
  %v258 = vld [vmem:[%s1 + $0x3ac] sm:$0xf]
  %v259 = vld [vmem:[%s1 + $0x3b0] sm:$0xf]
  %v260 = vld [vmem:[%s1 + $0x3b4] sm:$0xf]
  %v261 = vld [vmem:[%s1 + $0x3b8] sm:$0xf]
  %v262 = vld [vmem:[%s1 + $0x3bc] sm:$0xf]
  %v263 = vld [vmem:[%s1 + $0x3c0] sm:$0xf]
  %v264 = vld [vmem:[%s1 + $0x3c4] sm:$0xf]
  %v265 = vld [vmem:[%s1 + $0x3c8] sm:$0xf]
  %v266 = vld [vmem:[%s1 + $0x3cc] sm:$0xf]
  %v267 = vld [vmem:[%s1 + $0x3d0] sm:$0xf]
  %v268 = vld [vmem:[%s1 + $0x3d4] sm:$0xf]
  %v269 = vld [vmem:[%s1 + $0x3d8] sm:$0xf]
  %v270 = vld [vmem:[%s1 + $0x3dc] sm:$0xf]
  %v271 = vld [vmem:[%s1 + $0x3e0] sm:$0xf]
  %v272 = vld [vmem:[%s1 + $0x3e4] sm:$0xf]
  %v273 = vld [vmem:[%s1 + $0x3e8] sm:$0xf]
  %v274 = vld [vmem:[%s1 + $0x3ec] sm:$0xf]
  %v275 = vld [vmem:[%s1 + $0x3f0] sm:$0xf]
  %v276 = vld [vmem:[%s1 + $0x3f4] sm:$0xf]
  %v277 = vld [vmem:[%s1 + $0x3f8] sm:$0xf]
  %v278 = vld [vmem:[%s1 + $0x3fc] sm:$0xf]
  %v279 = vld [vmem:[%s2] sm:$0x1]
  %v281 = vlaneseq
  %v282 = vshrl.u32 %v281, 7
  %v283 = vsub.s32 0, %v282
  %v284 = vrot.slane %v279, %v283
  %v294 = vunpack.c.l.b16 %v15
  %v295 = vunpack.c.h.b16 %v15
  %v296 = vunpack.c.l.b16 %v16
  %v297 = vunpack.c.h.b16 %v16
  %v298 = vunpack.c.l.b16 %v17
  %v299 = vunpack.c.h.b16 %v17
  %v300 = vunpack.c.l.b16 %v18
  %v301 = vunpack.c.h.b16 %v18
  %v302 = vunpack.c.l.b16 %v19
  %v303 = vunpack.c.h.b16 %v19
  %v304 = vunpack.c.l.b16 %v20
  %v305 = vunpack.c.h.b16 %v20
  %v306 = vunpack.c.l.b16 %v21
  %v307 = vunpack.c.h.b16 %v21
  %v308 = vunpack.c.l.b16 %v22
  %v309 = vunpack.c.h.b16 %v22
  %v310 = vpack.c.b16 %v294, %v294
  %v311 = vpack.c.b16 %v295, %v295
  %v312 = vpack.c.b16 %v296, %v296
  %v313 = vpack.c.b16 %v297, %v297
  %v314 = vpack.c.b16 %v298, %v298
  %v315 = vpack.c.b16 %v299, %v299
  %v316 = vpack.c.b16 %v300, %v300
  %v317 = vpack.c.b16 %v301, %v301
  %v318 = vpack.c.b16 %v302, %v302
  %v319 = vpack.c.b16 %v303, %v303
  %v320 = vpack.c.b16 %v304, %v304
  %v321 = vpack.c.b16 %v305, %v305
  %v322 = vpack.c.b16 %v306, %v306
  %v323 = vpack.c.b16 %v307, %v307
  %v324 = vpack.c.b16 %v308, %v308
  %v325 = vpack.c.b16 %v309, %v309
  %v598 = vunpack.c.l.b16 %v23
  %v599 = vunpack.c.l.b16 %v24
  %v600 = vunpack.c.l.b16 %v25
  %v601 = vunpack.c.l.b16 %v26
  %v602 = vunpack.c.l.b16 %v27
  %v603 = vunpack.c.l.b16 %v28
  %v604 = vunpack.c.l.b16 %v29
  %v605 = vunpack.c.l.b16 %v30
  %v606 = vunpack.c.l.b16 %v31
  %v607 = vunpack.c.l.b16 %v32
  %v608 = vunpack.c.l.b16 %v33
  %v609 = vunpack.c.l.b16 %v34
  %v610 = vunpack.c.l.b16 %v35
  %v611 = vunpack.c.l.b16 %v36
  %v612 = vunpack.c.l.b16 %v37
  %v613 = vunpack.c.l.b16 %v38
  %v614 = vunpack.c.l.b16 %v39
  %v615 = vunpack.c.l.b16 %v40
  %v616 = vunpack.c.l.b16 %v41
  %v617 = vunpack.c.l.b16 %v42
  %v618 = vunpack.c.l.b16 %v43
  %v619 = vunpack.c.l.b16 %v44
  %v620 = vunpack.c.l.b16 %v45
  %v621 = vunpack.c.l.b16 %v46
  %v622 = vunpack.c.l.b16 %v47
  %v623 = vunpack.c.l.b16 %v48
  %v624 = vunpack.c.l.b16 %v49
  %v625 = vunpack.c.l.b16 %v50
  %v626 = vunpack.c.l.b16 %v51
  %v627 = vunpack.c.l.b16 %v52
  %v628 = vunpack.c.l.b16 %v53
  %v629 = vunpack.c.l.b16 %v54
  %v630 = vunpack.c.l.b16 %v55
  %v631 = vunpack.c.l.b16 %v56
  %v632 = vunpack.c.l.b16 %v57
  %v633 = vunpack.c.l.b16 %v58
  %v634 = vunpack.c.l.b16 %v59
  %v635 = vunpack.c.l.b16 %v60
  %v636 = vunpack.c.l.b16 %v61
  %v637 = vunpack.c.l.b16 %v62
  %v638 = vunpack.c.l.b16 %v63
  %v639 = vunpack.c.l.b16 %v64
  %v640 = vunpack.c.l.b16 %v65
  %v641 = vunpack.c.l.b16 %v66
  %v642 = vunpack.c.l.b16 %v67
  %v643 = vunpack.c.l.b16 %v68
  %v644 = vunpack.c.l.b16 %v69
  %v645 = vunpack.c.l.b16 %v70
  %v646 = vunpack.c.l.b16 %v71
  %v647 = vunpack.c.l.b16 %v72
  %v648 = vunpack.c.l.b16 %v73
  %v649 = vunpack.c.l.b16 %v74
  %v650 = vunpack.c.l.b16 %v75
  %v651 = vunpack.c.l.b16 %v76
  %v652 = vunpack.c.l.b16 %v77
  %v653 = vunpack.c.l.b16 %v78
  %v654 = vunpack.c.l.b16 %v79
  %v655 = vunpack.c.l.b16 %v80
  %v656 = vunpack.c.l.b16 %v81
  %v657 = vunpack.c.l.b16 %v82
  %v658 = vunpack.c.l.b16 %v83
  %v659 = vunpack.c.l.b16 %v84
  %v660 = vunpack.c.l.b16 %v85
  %v661 = vunpack.c.l.b16 %v86
  %v662 = vunpack.c.l.b16 %v87
  %v663 = vunpack.c.l.b16 %v88
  %v664 = vunpack.c.l.b16 %v89
  %v665 = vunpack.c.l.b16 %v90
  %v666 = vunpack.c.l.b16 %v91
  %v667 = vunpack.c.l.b16 %v92
  %v668 = vunpack.c.l.b16 %v93
  %v669 = vunpack.c.l.b16 %v94
  %v670 = vunpack.c.l.b16 %v95
  %v671 = vunpack.c.l.b16 %v96
  %v672 = vunpack.c.l.b16 %v97
  %v673 = vunpack.c.l.b16 %v98
  %v674 = vunpack.c.l.b16 %v99
  %v675 = vunpack.c.l.b16 %v100
  %v676 = vunpack.c.l.b16 %v101
  %v677 = vunpack.c.l.b16 %v102
  %v678 = vunpack.c.l.b16 %v103
  %v679 = vunpack.c.l.b16 %v104
  %v680 = vunpack.c.l.b16 %v105
  %v681 = vunpack.c.l.b16 %v106
  %v682 = vunpack.c.l.b16 %v107
  %v683 = vunpack.c.l.b16 %v108
  %v684 = vunpack.c.l.b16 %v109
  %v685 = vunpack.c.l.b16 %v110
  %v686 = vunpack.c.l.b16 %v111
  %v687 = vunpack.c.l.b16 %v112
  %v688 = vunpack.c.l.b16 %v113
  %v689 = vunpack.c.l.b16 %v114
  %v690 = vunpack.c.l.b16 %v115
  %v691 = vunpack.c.l.b16 %v116
  %v692 = vunpack.c.l.b16 %v117
  %v693 = vunpack.c.l.b16 %v118
  %v694 = vunpack.c.l.b16 %v119
  %v695 = vunpack.c.l.b16 %v120
  %v696 = vunpack.c.l.b16 %v121
  %v697 = vunpack.c.l.b16 %v122
  %v698 = vunpack.c.l.b16 %v123
  %v699 = vunpack.c.l.b16 %v124
  %v700 = vunpack.c.l.b16 %v125
  %v701 = vunpack.c.l.b16 %v126
  %v702 = vunpack.c.l.b16 %v127
  %v703 = vunpack.c.l.b16 %v128
  %v704 = vunpack.c.l.b16 %v129
  %v705 = vunpack.c.l.b16 %v130
  %v706 = vunpack.c.l.b16 %v131
  %v707 = vunpack.c.l.b16 %v132
  %v708 = vunpack.c.l.b16 %v133
  %v709 = vunpack.c.l.b16 %v134
  %v710 = vunpack.c.l.b16 %v135
  %v711 = vunpack.c.l.b16 %v136
  %v712 = vunpack.c.l.b16 %v137
  %v713 = vunpack.c.l.b16 %v138
  %v714 = vunpack.c.l.b16 %v139
  %v715 = vunpack.c.l.b16 %v140
  %v716 = vunpack.c.l.b16 %v141
  %v717 = vunpack.c.l.b16 %v142
  %v718 = vunpack.c.l.b16 %v143
  %v719 = vunpack.c.l.b16 %v144
  %v720 = vunpack.c.l.b16 %v145
  %v721 = vunpack.c.l.b16 %v146
  %v722 = vunpack.c.l.b16 %v147
  %v723 = vunpack.c.l.b16 %v148
  %v724 = vunpack.c.l.b16 %v149
  %v725 = vunpack.c.l.b16 %v150
  %v726 = vunpack.c.l.b16 %v151
  %v727 = vunpack.c.l.b16 %v152
  %v728 = vunpack.c.l.b16 %v153
  %v729 = vunpack.c.l.b16 %v154
  %v730 = vunpack.c.l.b16 %v155
  %v731 = vunpack.c.l.b16 %v156
  %v732 = vunpack.c.l.b16 %v157
  %v733 = vunpack.c.l.b16 %v158
  %v734 = vunpack.c.l.b16 %v159
  %v735 = vunpack.c.l.b16 %v160
  %v736 = vunpack.c.l.b16 %v161
  %v737 = vunpack.c.l.b16 %v162
  %v738 = vunpack.c.l.b16 %v163
  %v739 = vunpack.c.l.b16 %v164
  %v740 = vunpack.c.l.b16 %v165
  %v741 = vunpack.c.l.b16 %v166
  %v742 = vunpack.c.l.b16 %v167
  %v743 = vunpack.c.l.b16 %v168
  %v744 = vunpack.c.l.b16 %v169
  %v745 = vunpack.c.l.b16 %v170
  %v746 = vunpack.c.l.b16 %v171
  %v747 = vunpack.c.l.b16 %v172
  %v748 = vunpack.c.l.b16 %v173
  %v749 = vunpack.c.l.b16 %v174
  %v750 = vunpack.c.l.b16 %v175
  %v751 = vunpack.c.l.b16 %v176
  %v752 = vunpack.c.l.b16 %v177
  %v753 = vunpack.c.l.b16 %v178
  %v754 = vunpack.c.l.b16 %v179
  %v755 = vunpack.c.l.b16 %v180
  %v756 = vunpack.c.l.b16 %v181
  %v757 = vunpack.c.l.b16 %v182
  %v758 = vunpack.c.l.b16 %v183
  %v759 = vunpack.c.l.b16 %v184
  %v760 = vunpack.c.l.b16 %v185
  %v761 = vunpack.c.l.b16 %v186
  %v762 = vunpack.c.l.b16 %v187
  %v763 = vunpack.c.l.b16 %v188
  %v764 = vunpack.c.l.b16 %v189
  %v765 = vunpack.c.l.b16 %v190
  %v766 = vunpack.c.l.b16 %v191
  %v767 = vunpack.c.l.b16 %v192
  %v768 = vunpack.c.l.b16 %v193
  %v769 = vunpack.c.l.b16 %v194
  %v770 = vunpack.c.l.b16 %v195
  %v771 = vunpack.c.l.b16 %v196
  %v772 = vunpack.c.l.b16 %v197
  %v773 = vunpack.c.l.b16 %v198
  %v774 = vunpack.c.l.b16 %v199
  %v775 = vunpack.c.l.b16 %v200
  %v776 = vunpack.c.l.b16 %v201
  %v777 = vunpack.c.l.b16 %v202
  %v778 = vunpack.c.l.b16 %v203
  %v779 = vunpack.c.l.b16 %v204
  %v780 = vunpack.c.l.b16 %v205
  %v781 = vunpack.c.l.b16 %v206
  %v782 = vunpack.c.l.b16 %v207
  %v783 = vunpack.c.l.b16 %v208
  %v784 = vunpack.c.l.b16 %v209
  %v785 = vunpack.c.l.b16 %v210
  %v786 = vunpack.c.l.b16 %v211
  %v787 = vunpack.c.l.b16 %v212
  %v788 = vunpack.c.l.b16 %v213
  %v789 = vunpack.c.l.b16 %v214
  %v790 = vunpack.c.l.b16 %v215
  %v791 = vunpack.c.l.b16 %v216
  %v792 = vunpack.c.l.b16 %v217
  %v793 = vunpack.c.l.b16 %v218
  %v794 = vunpack.c.l.b16 %v219
  %v795 = vunpack.c.l.b16 %v220
  %v796 = vunpack.c.l.b16 %v221
  %v797 = vunpack.c.l.b16 %v222
  %v798 = vunpack.c.l.b16 %v223
  %v799 = vunpack.c.l.b16 %v224
  %v800 = vunpack.c.l.b16 %v225
  %v801 = vunpack.c.l.b16 %v226
  %v802 = vunpack.c.l.b16 %v227
  %v803 = vunpack.c.l.b16 %v228
  %v804 = vunpack.c.l.b16 %v229
  %v805 = vunpack.c.l.b16 %v230
  %v806 = vunpack.c.l.b16 %v231
  %v807 = vunpack.c.l.b16 %v232
  %v808 = vunpack.c.l.b16 %v233
  %v809 = vunpack.c.l.b16 %v234
  %v810 = vunpack.c.l.b16 %v235
  %v811 = vunpack.c.l.b16 %v236
  %v812 = vunpack.c.l.b16 %v237
  %v813 = vunpack.c.l.b16 %v238
  %v814 = vunpack.c.l.b16 %v239
  %v815 = vunpack.c.l.b16 %v240
  %v816 = vunpack.c.l.b16 %v241
  %v817 = vunpack.c.l.b16 %v242
  %v818 = vunpack.c.l.b16 %v243
  %v819 = vunpack.c.l.b16 %v244
  %v820 = vunpack.c.l.b16 %v245
  %v821 = vunpack.c.l.b16 %v246
  %v822 = vunpack.c.l.b16 %v247
  %v823 = vunpack.c.l.b16 %v248
  %v824 = vunpack.c.l.b16 %v249
  %v825 = vunpack.c.l.b16 %v250
  %v826 = vunpack.c.l.b16 %v251
  %v827 = vunpack.c.l.b16 %v252
  %v828 = vunpack.c.l.b16 %v253
  %v829 = vunpack.c.l.b16 %v254
  %v830 = vunpack.c.l.b16 %v255
  %v831 = vunpack.c.l.b16 %v256
  %v832 = vunpack.c.l.b16 %v257
  %v833 = vunpack.c.l.b16 %v258
  %v834 = vunpack.c.l.b16 %v259
  %v835 = vunpack.c.l.b16 %v260
  %v836 = vunpack.c.l.b16 %v261
  %v837 = vunpack.c.l.b16 %v262
  %v838 = vunpack.c.l.b16 %v263
  %v839 = vunpack.c.l.b16 %v264
  %v840 = vunpack.c.l.b16 %v265
  %v841 = vunpack.c.l.b16 %v266
  %v842 = vunpack.c.l.b16 %v267
  %v843 = vunpack.c.l.b16 %v268
  %v844 = vunpack.c.l.b16 %v269
  %v845 = vunpack.c.l.b16 %v270
  %v846 = vunpack.c.l.b16 %v271
  %v847 = vunpack.c.l.b16 %v272
  %v848 = vunpack.c.l.b16 %v273
  %v849 = vunpack.c.l.b16 %v274
  %v850 = vunpack.c.l.b16 %v275
  %v851 = vunpack.c.l.b16 %v276
  %v852 = vunpack.c.l.b16 %v277
  %v853 = vunpack.c.l.b16 %v278
  %v854 = vpack.c.b16 %v599, %v598
  %v855 = vpack.c.b16 %v601, %v600
  %v856 = vpack.c.b16 %v603, %v602
  %v857 = vpack.c.b16 %v605, %v604
  %v858 = vpack.c.b16 %v607, %v606
  %v859 = vpack.c.b16 %v609, %v608
  %v860 = vpack.c.b16 %v611, %v610
  %v861 = vpack.c.b16 %v613, %v612
  %v862 = vpack.c.b16 %v615, %v614
  %v863 = vpack.c.b16 %v617, %v616
  %v864 = vpack.c.b16 %v619, %v618
  %v865 = vpack.c.b16 %v621, %v620
  %v866 = vpack.c.b16 %v623, %v622
  %v867 = vpack.c.b16 %v625, %v624
  %v868 = vpack.c.b16 %v627, %v626
  %v869 = vpack.c.b16 %v629, %v628
  %v870 = vpack.c.b16 %v631, %v630
  %v871 = vpack.c.b16 %v633, %v632
  %v872 = vpack.c.b16 %v635, %v634
  %v873 = vpack.c.b16 %v637, %v636
  %v874 = vpack.c.b16 %v639, %v638
  %v875 = vpack.c.b16 %v641, %v640
  %v876 = vpack.c.b16 %v643, %v642
  %v877 = vpack.c.b16 %v645, %v644
  %v878 = vpack.c.b16 %v647, %v646
  %v879 = vpack.c.b16 %v649, %v648
  %v880 = vpack.c.b16 %v651, %v650
  %v881 = vpack.c.b16 %v653, %v652
  %v882 = vpack.c.b16 %v655, %v654
  %v883 = vpack.c.b16 %v657, %v656
  %v884 = vpack.c.b16 %v659, %v658
  %v885 = vpack.c.b16 %v661, %v660
  %v886 = vpack.c.b16 %v663, %v662
  %v887 = vpack.c.b16 %v665, %v664
  %v888 = vpack.c.b16 %v667, %v666
  %v889 = vpack.c.b16 %v669, %v668
  %v890 = vpack.c.b16 %v671, %v670
  %v891 = vpack.c.b16 %v673, %v672
  %v892 = vpack.c.b16 %v675, %v674
  %v893 = vpack.c.b16 %v677, %v676
  %v894 = vpack.c.b16 %v679, %v678
  %v895 = vpack.c.b16 %v681, %v680
  %v896 = vpack.c.b16 %v683, %v682
  %v897 = vpack.c.b16 %v685, %v684
  %v898 = vpack.c.b16 %v687, %v686
  %v899 = vpack.c.b16 %v689, %v688
  %v900 = vpack.c.b16 %v691, %v690
  %v901 = vpack.c.b16 %v693, %v692
  %v902 = vpack.c.b16 %v695, %v694
  %v903 = vpack.c.b16 %v697, %v696
  %v904 = vpack.c.b16 %v699, %v698
  %v905 = vpack.c.b16 %v701, %v700
  %v906 = vpack.c.b16 %v703, %v702
  %v907 = vpack.c.b16 %v705, %v704
  %v908 = vpack.c.b16 %v707, %v706
  %v909 = vpack.c.b16 %v709, %v708
  %v910 = vpack.c.b16 %v711, %v710
  %v911 = vpack.c.b16 %v713, %v712
  %v912 = vpack.c.b16 %v715, %v714
  %v913 = vpack.c.b16 %v717, %v716
  %v914 = vpack.c.b16 %v719, %v718
  %v915 = vpack.c.b16 %v721, %v720
  %v916 = vpack.c.b16 %v723, %v722
  %v917 = vpack.c.b16 %v725, %v724
  %v918 = vpack.c.b16 %v727, %v726
  %v919 = vpack.c.b16 %v729, %v728
  %v920 = vpack.c.b16 %v731, %v730
  %v921 = vpack.c.b16 %v733, %v732
  %v922 = vpack.c.b16 %v735, %v734
  %v923 = vpack.c.b16 %v737, %v736
  %v924 = vpack.c.b16 %v739, %v738
  %v925 = vpack.c.b16 %v741, %v740
  %v926 = vpack.c.b16 %v743, %v742
  %v927 = vpack.c.b16 %v745, %v744
  %v928 = vpack.c.b16 %v747, %v746
  %v929 = vpack.c.b16 %v749, %v748
  %v930 = vpack.c.b16 %v751, %v750
  %v931 = vpack.c.b16 %v753, %v752
  %v932 = vpack.c.b16 %v755, %v754
  %v933 = vpack.c.b16 %v757, %v756
  %v934 = vpack.c.b16 %v759, %v758
  %v935 = vpack.c.b16 %v761, %v760
  %v936 = vpack.c.b16 %v763, %v762
  %v937 = vpack.c.b16 %v765, %v764
  %v938 = vpack.c.b16 %v767, %v766
  %v939 = vpack.c.b16 %v769, %v768
  %v940 = vpack.c.b16 %v771, %v770
  %v941 = vpack.c.b16 %v773, %v772
  %v942 = vpack.c.b16 %v775, %v774
  %v943 = vpack.c.b16 %v777, %v776
  %v944 = vpack.c.b16 %v779, %v778
  %v945 = vpack.c.b16 %v781, %v780
  %v946 = vpack.c.b16 %v783, %v782
  %v947 = vpack.c.b16 %v785, %v784
  %v948 = vpack.c.b16 %v787, %v786
  %v949 = vpack.c.b16 %v789, %v788
  %v950 = vpack.c.b16 %v791, %v790
  %v951 = vpack.c.b16 %v793, %v792
  %v952 = vpack.c.b16 %v795, %v794
  %v953 = vpack.c.b16 %v797, %v796
  %v954 = vpack.c.b16 %v799, %v798
  %v955 = vpack.c.b16 %v801, %v800
  %v956 = vpack.c.b16 %v803, %v802
  %v957 = vpack.c.b16 %v805, %v804
  %v958 = vpack.c.b16 %v807, %v806
  %v959 = vpack.c.b16 %v809, %v808
  %v960 = vpack.c.b16 %v811, %v810
  %v961 = vpack.c.b16 %v813, %v812
  %v962 = vpack.c.b16 %v815, %v814
  %v963 = vpack.c.b16 %v817, %v816
  %v964 = vpack.c.b16 %v819, %v818
  %v965 = vpack.c.b16 %v821, %v820
  %v966 = vpack.c.b16 %v823, %v822
  %v967 = vpack.c.b16 %v825, %v824
  %v968 = vpack.c.b16 %v827, %v826
  %v969 = vpack.c.b16 %v829, %v828
  %v970 = vpack.c.b16 %v831, %v830
  %v971 = vpack.c.b16 %v833, %v832
  %v972 = vpack.c.b16 %v835, %v834
  %v973 = vpack.c.b16 %v837, %v836
  %v974 = vpack.c.b16 %v839, %v838
  %v975 = vpack.c.b16 %v841, %v840
  %v976 = vpack.c.b16 %v843, %v842
  %v977 = vpack.c.b16 %v845, %v844
  %v978 = vpack.c.b16 %v847, %v846
  %v979 = vpack.c.b16 %v849, %v848
  %v980 = vpack.c.b16 %v851, %v850
  %v981 = vpack.c.b16 %v853, %v852
  %1110 = vmatprep.subr.bf16.mxu0 0
  %1111 = vmatpush1.bf16.msra.mxu0 %v854
  %1112 = vmatprep.subr.bf16.mxu0 0
  %1113 = vmatpush1.bf16.msra.mxu0 %v855
  %1114 = vmatprep.subr.bf16.mxu0 0
  %1115 = vmatpush1.bf16.msra.mxu0 %v856
  %1116 = vmatprep.subr.bf16.mxu0 0
  %1117 = vmatpush1.bf16.msra.mxu0 %v857
  %1118 = vmatprep.subr.bf16.mxu0 0
  %1119 = vmatpush1.bf16.msra.mxu0 %v858
  %1120 = vmatprep.subr.bf16.mxu0 0
  %1121 = vmatpush1.bf16.msra.mxu0 %v859
  %1122 = vmatprep.subr.bf16.mxu0 0
  %1123 = vmatpush1.bf16.msra.mxu0 %v860
  %1124 = vmatprep.subr.bf16.mxu0 0
  %1125 = vmatpush1.bf16.msra.mxu0 %v861
  %1126 = vmatprep.subr.bf16.mxu0 0
  %1127 = vmatpush1.bf16.msra.mxu0 %v862
  %1128 = vmatprep.subr.bf16.mxu0 0
  %1129 = vmatpush1.bf16.msra.mxu0 %v863
  %1130 = vmatprep.subr.bf16.mxu0 0
  %1131 = vmatpush1.bf16.msra.mxu0 %v864
  %1132 = vmatprep.subr.bf16.mxu0 0
  %1133 = vmatpush1.bf16.msra.mxu0 %v865
  %1134 = vmatprep.subr.bf16.mxu0 0
  %1135 = vmatpush1.bf16.msra.mxu0 %v866
  %1136 = vmatprep.subr.bf16.mxu0 0
  %1137 = vmatpush1.bf16.msra.mxu0 %v867
  %1138 = vmatprep.subr.bf16.mxu0 0
  %1139 = vmatpush1.bf16.msra.mxu0 %v868
  %1140 = vmatprep.subr.bf16.mxu0 0
  %1141 = vmatpush1.bf16.msra.mxu0 %v869
  %1142 = vmatprep.mubr.bf16.mxu0 %v311
  %1143 = vmatmul.mubr.bf16.gmra.mrb[0].mxu0 %v310
  %v1144 = vpop.f32.mrb[0].mxu0
  %v1145 = vadd.f32 %v284, %v1144
  %v1146 = vpop.f32.mrb[0].mxu0
  %v1147 = vpop.f32.mrb[0].mxu0
  %v1148 = vpop.f32.mrb[0].mxu0
  %1149 = vdwg.mxu0
  %1150 = vmatprep.subr.bf16.mxu0 0
  %1151 = vmatpush1.bf16.msra.mxu0 %v870
  %1152 = vmatprep.subr.bf16.mxu0 0
  %1153 = vmatpush1.bf16.msra.mxu0 %v871
  %1154 = vmatprep.subr.bf16.mxu0 0
  %1155 = vmatpush1.bf16.msra.mxu0 %v872
  %1156 = vmatprep.subr.bf16.mxu0 0
  %1157 = vmatpush1.bf16.msra.mxu0 %v873
  %1158 = vmatprep.subr.bf16.mxu0 0
  %1159 = vmatpush1.bf16.msra.mxu0 %v874
  %1160 = vmatprep.subr.bf16.mxu0 0
  %1161 = vmatpush1.bf16.msra.mxu0 %v875
  %1162 = vmatprep.subr.bf16.mxu0 0
  %1163 = vmatpush1.bf16.msra.mxu0 %v876
  %1164 = vmatprep.subr.bf16.mxu0 0
  %1165 = vmatpush1.bf16.msra.mxu0 %v877
  %1166 = vmatprep.subr.bf16.mxu0 0
  %1167 = vmatpush1.bf16.msra.mxu0 %v878
  %1168 = vmatprep.subr.bf16.mxu0 0
  %1169 = vmatpush1.bf16.msra.mxu0 %v879
  %1170 = vmatprep.subr.bf16.mxu0 0
  %1171 = vmatpush1.bf16.msra.mxu0 %v880
  %1172 = vmatprep.subr.bf16.mxu0 0
  %1173 = vmatpush1.bf16.msra.mxu0 %v881
  %1174 = vmatprep.subr.bf16.mxu0 0
  %1175 = vmatpush1.bf16.msra.mxu0 %v882
  %1176 = vmatprep.subr.bf16.mxu0 0
  %1177 = vmatpush1.bf16.msra.mxu0 %v883
  %1178 = vmatprep.subr.bf16.mxu0 0
  %1179 = vmatpush1.bf16.msra.mxu0 %v884
  %1180 = vmatprep.subr.bf16.mxu0 0
  %1181 = vmatpush1.bf16.msra.mxu0 %v885
  %1182 = vmatprep.mubr.bf16.mxu0 %v313
  %1183 = vmatmul.mubr.bf16.gmra.mrb[0].mxu0 %v312
  %v1184 = vpop.f32.mrb[0].mxu0
  %v1185 = vadd.f32 %v1145, %v1184
  %v1186 = vpop.f32.mrb[0].mxu0
  %v1187 = vpop.f32.mrb[0].mxu0
  %v1188 = vpop.f32.mrb[0].mxu0
  %1189 = vdwg.mxu0
  %1190 = vmatprep.subr.bf16.mxu0 0
  %1191 = vmatpush1.bf16.msra.mxu0 %v886
  %1192 = vmatprep.subr.bf16.mxu0 0
  %1193 = vmatpush1.bf16.msra.mxu0 %v887
  %1194 = vmatprep.subr.bf16.mxu0 0
  %1195 = vmatpush1.bf16.msra.mxu0 %v888
  %1196 = vmatprep.subr.bf16.mxu0 0
  %1197 = vmatpush1.bf16.msra.mxu0 %v889
  %1198 = vmatprep.subr.bf16.mxu0 0
  %1199 = vmatpush1.bf16.msra.mxu0 %v890
  %1200 = vmatprep.subr.bf16.mxu0 0
  %1201 = vmatpush1.bf16.msra.mxu0 %v891
  %1202 = vmatprep.subr.bf16.mxu0 0
  %1203 = vmatpush1.bf16.msra.mxu0 %v892
  %1204 = vmatprep.subr.bf16.mxu0 0
  %1205 = vmatpush1.bf16.msra.mxu0 %v893
  %1206 = vmatprep.subr.bf16.mxu0 0
  %1207 = vmatpush1.bf16.msra.mxu0 %v894
  %1208 = vmatprep.subr.bf16.mxu0 0
  %1209 = vmatpush1.bf16.msra.mxu0 %v895
  %1210 = vmatprep.subr.bf16.mxu0 0
  %1211 = vmatpush1.bf16.msra.mxu0 %v896
  %1212 = vmatprep.subr.bf16.mxu0 0
  %1213 = vmatpush1.bf16.msra.mxu0 %v897
  %1214 = vmatprep.subr.bf16.mxu0 0
  %1215 = vmatpush1.bf16.msra.mxu0 %v898
  %1216 = vmatprep.subr.bf16.mxu0 0
  %1217 = vmatpush1.bf16.msra.mxu0 %v899
  %1218 = vmatprep.subr.bf16.mxu0 0
  %1219 = vmatpush1.bf16.msra.mxu0 %v900
  %1220 = vmatprep.subr.bf16.mxu0 0
  %1221 = vmatpush1.bf16.msra.mxu0 %v901
  %1222 = vmatprep.mubr.bf16.mxu0 %v315
  %1223 = vmatmul.mubr.bf16.gmra.mrb[0].mxu0 %v314
  %v1224 = vpop.f32.mrb[0].mxu0
  %v1225 = vadd.f32 %v1185, %v1224
  %v1226 = vpop.f32.mrb[0].mxu0
  %v1227 = vpop.f32.mrb[0].mxu0
  %v1228 = vpop.f32.mrb[0].mxu0
  %1229 = vdwg.mxu0
  %1230 = vmatprep.subr.bf16.mxu0 0
  %1231 = vmatpush1.bf16.msra.mxu0 %v902
  %1232 = vmatprep.subr.bf16.mxu0 0
  %1233 = vmatpush1.bf16.msra.mxu0 %v903
  %1234 = vmatprep.subr.bf16.mxu0 0
  %1235 = vmatpush1.bf16.msra.mxu0 %v904
  %1236 = vmatprep.subr.bf16.mxu0 0
  %1237 = vmatpush1.bf16.msra.mxu0 %v905
  %1238 = vmatprep.subr.bf16.mxu0 0
  %1239 = vmatpush1.bf16.msra.mxu0 %v906
  %1240 = vmatprep.subr.bf16.mxu0 0
  %1241 = vmatpush1.bf16.msra.mxu0 %v907
  %1242 = vmatprep.subr.bf16.mxu0 0
  %1243 = vmatpush1.bf16.msra.mxu0 %v908
  %1244 = vmatprep.subr.bf16.mxu0 0
  %1245 = vmatpush1.bf16.msra.mxu0 %v909
  %1246 = vmatprep.subr.bf16.mxu0 0
  %1247 = vmatpush1.bf16.msra.mxu0 %v910
  %1248 = vmatprep.subr.bf16.mxu0 0
  %1249 = vmatpush1.bf16.msra.mxu0 %v911
  %1250 = vmatprep.subr.bf16.mxu0 0
  %1251 = vmatpush1.bf16.msra.mxu0 %v912
  %1252 = vmatprep.subr.bf16.mxu0 0
  %1253 = vmatpush1.bf16.msra.mxu0 %v913
  %1254 = vmatprep.subr.bf16.mxu0 0
  %1255 = vmatpush1.bf16.msra.mxu0 %v914
  %1256 = vmatprep.subr.bf16.mxu0 0
  %1257 = vmatpush1.bf16.msra.mxu0 %v915
  %1258 = vmatprep.subr.bf16.mxu0 0
  %1259 = vmatpush1.bf16.msra.mxu0 %v916
  %1260 = vmatprep.subr.bf16.mxu0 0
  %1261 = vmatpush1.bf16.msra.mxu0 %v917
  %1262 = vmatprep.mubr.bf16.mxu0 %v317
  %1263 = vmatmul.mubr.bf16.gmra.mrb[0].mxu0 %v316
  %v1264 = vpop.f32.mrb[0].mxu0
  %v1265 = vadd.f32 %v1225, %v1264
  %v1266 = vpop.f32.mrb[0].mxu0
  %v1267 = vpop.f32.mrb[0].mxu0
  %v1268 = vpop.f32.mrb[0].mxu0
  %1269 = vdwg.mxu0
  %1270 = vmatprep.subr.bf16.mxu0 0
  %1271 = vmatpush1.bf16.msra.mxu0 %v918
  %1272 = vmatprep.subr.bf16.mxu0 0
  %1273 = vmatpush1.bf16.msra.mxu0 %v919
  %1274 = vmatprep.subr.bf16.mxu0 0
  %1275 = vmatpush1.bf16.msra.mxu0 %v920
  %1276 = vmatprep.subr.bf16.mxu0 0
  %1277 = vmatpush1.bf16.msra.mxu0 %v921
  %1278 = vmatprep.subr.bf16.mxu0 0
  %1279 = vmatpush1.bf16.msra.mxu0 %v922
  %1280 = vmatprep.subr.bf16.mxu0 0
  %1281 = vmatpush1.bf16.msra.mxu0 %v923
  %1282 = vmatprep.subr.bf16.mxu0 0
  %1283 = vmatpush1.bf16.msra.mxu0 %v924
  %1284 = vmatprep.subr.bf16.mxu0 0
  %1285 = vmatpush1.bf16.msra.mxu0 %v925
  %1286 = vmatprep.subr.bf16.mxu0 0
  %1287 = vmatpush1.bf16.msra.mxu0 %v926
  %1288 = vmatprep.subr.bf16.mxu0 0
  %1289 = vmatpush1.bf16.msra.mxu0 %v927
  %1290 = vmatprep.subr.bf16.mxu0 0
  %1291 = vmatpush1.bf16.msra.mxu0 %v928
  %1292 = vmatprep.subr.bf16.mxu0 0
  %1293 = vmatpush1.bf16.msra.mxu0 %v929
  %1294 = vmatprep.subr.bf16.mxu0 0
  %1295 = vmatpush1.bf16.msra.mxu0 %v930
  %1296 = vmatprep.subr.bf16.mxu0 0
  %1297 = vmatpush1.bf16.msra.mxu0 %v931
  %1298 = vmatprep.subr.bf16.mxu0 0
  %1299 = vmatpush1.bf16.msra.mxu0 %v932
  %1300 = vmatprep.subr.bf16.mxu0 0
  %1301 = vmatpush1.bf16.msra.mxu0 %v933
  %1302 = vmatprep.mubr.bf16.mxu0 %v319
  %1303 = vmatmul.mubr.bf16.gmra.mrb[0].mxu0 %v318
  %v1304 = vpop.f32.mrb[0].mxu0
  %v1305 = vadd.f32 %v1265, %v1304
  %v1306 = vpop.f32.mrb[0].mxu0
  %v1307 = vpop.f32.mrb[0].mxu0
  %v1308 = vpop.f32.mrb[0].mxu0
  %1309 = vdwg.mxu0
  %1310 = vmatprep.subr.bf16.mxu0 0
  %1311 = vmatpush1.bf16.msra.mxu0 %v934
  %1312 = vmatprep.subr.bf16.mxu0 0
  %1313 = vmatpush1.bf16.msra.mxu0 %v935
  %1314 = vmatprep.subr.bf16.mxu0 0
  %1315 = vmatpush1.bf16.msra.mxu0 %v936
  %1316 = vmatprep.subr.bf16.mxu0 0
  %1317 = vmatpush1.bf16.msra.mxu0 %v937
  %1318 = vmatprep.subr.bf16.mxu0 0
  %1319 = vmatpush1.bf16.msra.mxu0 %v938
  %1320 = vmatprep.subr.bf16.mxu0 0
  %1321 = vmatpush1.bf16.msra.mxu0 %v939
  %1322 = vmatprep.subr.bf16.mxu0 0
  %1323 = vmatpush1.bf16.msra.mxu0 %v940
  %1324 = vmatprep.subr.bf16.mxu0 0
  %1325 = vmatpush1.bf16.msra.mxu0 %v941
  %1326 = vmatprep.subr.bf16.mxu0 0
  %1327 = vmatpush1.bf16.msra.mxu0 %v942
  %1328 = vmatprep.subr.bf16.mxu0 0
  %1329 = vmatpush1.bf16.msra.mxu0 %v943
  %1330 = vmatprep.subr.bf16.mxu0 0
  %1331 = vmatpush1.bf16.msra.mxu0 %v944
  %1332 = vmatprep.subr.bf16.mxu0 0
  %1333 = vmatpush1.bf16.msra.mxu0 %v945
  %1334 = vmatprep.subr.bf16.mxu0 0
  %1335 = vmatpush1.bf16.msra.mxu0 %v946
  %1336 = vmatprep.subr.bf16.mxu0 0
  %1337 = vmatpush1.bf16.msra.mxu0 %v947
  %1338 = vmatprep.subr.bf16.mxu0 0
  %1339 = vmatpush1.bf16.msra.mxu0 %v948
  %1340 = vmatprep.subr.bf16.mxu0 0
  %1341 = vmatpush1.bf16.msra.mxu0 %v949
  %1342 = vmatprep.mubr.bf16.mxu0 %v321
  %1343 = vmatmul.mubr.bf16.gmra.mrb[0].mxu0 %v320
  %v1344 = vpop.f32.mrb[0].mxu0
  %v1345 = vadd.f32 %v1305, %v1344
  %v1346 = vpop.f32.mrb[0].mxu0
  %v1347 = vpop.f32.mrb[0].mxu0
  %v1348 = vpop.f32.mrb[0].mxu0
  %1349 = vdwg.mxu0
  %1350 = vmatprep.subr.bf16.mxu0 0
  %1351 = vmatpush1.bf16.msra.mxu0 %v950
  %1352 = vmatprep.subr.bf16.mxu0 0
  %1353 = vmatpush1.bf16.msra.mxu0 %v951
  %1354 = vmatprep.subr.bf16.mxu0 0
  %1355 = vmatpush1.bf16.msra.mxu0 %v952
  %1356 = vmatprep.subr.bf16.mxu0 0
  %1357 = vmatpush1.bf16.msra.mxu0 %v953
  %1358 = vmatprep.subr.bf16.mxu0 0
  %1359 = vmatpush1.bf16.msra.mxu0 %v954
  %1360 = vmatprep.subr.bf16.mxu0 0
  %1361 = vmatpush1.bf16.msra.mxu0 %v955
  %1362 = vmatprep.subr.bf16.mxu0 0
  %1363 = vmatpush1.bf16.msra.mxu0 %v956
  %1364 = vmatprep.subr.bf16.mxu0 0
  %1365 = vmatpush1.bf16.msra.mxu0 %v957
  %1366 = vmatprep.subr.bf16.mxu0 0
  %1367 = vmatpush1.bf16.msra.mxu0 %v958
  %1368 = vmatprep.subr.bf16.mxu0 0
  %1369 = vmatpush1.bf16.msra.mxu0 %v959
  %1370 = vmatprep.subr.bf16.mxu0 0
  %1371 = vmatpush1.bf16.msra.mxu0 %v960
  %1372 = vmatprep.subr.bf16.mxu0 0
  %1373 = vmatpush1.bf16.msra.mxu0 %v961
  %1374 = vmatprep.subr.bf16.mxu0 0
  %1375 = vmatpush1.bf16.msra.mxu0 %v962
  %1376 = vmatprep.subr.bf16.mxu0 0
  %1377 = vmatpush1.bf16.msra.mxu0 %v963
  %1378 = vmatprep.subr.bf16.mxu0 0
  %1379 = vmatpush1.bf16.msra.mxu0 %v964
  %1380 = vmatprep.subr.bf16.mxu0 0
  %1381 = vmatpush1.bf16.msra.mxu0 %v965
  %1382 = vmatprep.mubr.bf16.mxu0 %v323
  %1383 = vmatmul.mubr.bf16.gmra.mrb[0].mxu0 %v322
  %v1384 = vpop.f32.mrb[0].mxu0
  %v1385 = vadd.f32 %v1345, %v1384
  %v1386 = vpop.f32.mrb[0].mxu0
  %v1387 = vpop.f32.mrb[0].mxu0
  %v1388 = vpop.f32.mrb[0].mxu0
  %1389 = vdwg.mxu0
  %1390 = vmatprep.subr.bf16.mxu0 0
  %1391 = vmatpush1.bf16.msra.mxu0 %v966
  %1392 = vmatprep.subr.bf16.mxu0 0
  %1393 = vmatpush1.bf16.msra.mxu0 %v967
  %1394 = vmatprep.subr.bf16.mxu0 0
  %1395 = vmatpush1.bf16.msra.mxu0 %v968
  %1396 = vmatprep.subr.bf16.mxu0 0
  %1397 = vmatpush1.bf16.msra.mxu0 %v969
  %1398 = vmatprep.subr.bf16.mxu0 0
  %1399 = vmatpush1.bf16.msra.mxu0 %v970
  %1400 = vmatprep.subr.bf16.mxu0 0
  %1401 = vmatpush1.bf16.msra.mxu0 %v971
  %1402 = vmatprep.subr.bf16.mxu0 0
  %1403 = vmatpush1.bf16.msra.mxu0 %v972
  %1404 = vmatprep.subr.bf16.mxu0 0
  %1405 = vmatpush1.bf16.msra.mxu0 %v973
  %1406 = vmatprep.subr.bf16.mxu0 0
  %1407 = vmatpush1.bf16.msra.mxu0 %v974
  %1408 = vmatprep.subr.bf16.mxu0 0
  %1409 = vmatpush1.bf16.msra.mxu0 %v975
  %1410 = vmatprep.subr.bf16.mxu0 0
  %1411 = vmatpush1.bf16.msra.mxu0 %v976
  %1412 = vmatprep.subr.bf16.mxu0 0
  %1413 = vmatpush1.bf16.msra.mxu0 %v977
  %1414 = vmatprep.subr.bf16.mxu0 0
  %1415 = vmatpush1.bf16.msra.mxu0 %v978
  %1416 = vmatprep.subr.bf16.mxu0 0
  %1417 = vmatpush1.bf16.msra.mxu0 %v979
  %1418 = vmatprep.subr.bf16.mxu0 0
  %1419 = vmatpush1.bf16.msra.mxu0 %v980
  %1420 = vmatprep.subr.bf16.mxu0 0
  %1421 = vmatpush1.bf16.msra.mxu0 %v981
  %1422 = vmatprep.mubr.bf16.mxu0 %v325
  %1423 = vmatmul.mubr.bf16.gmra.mrb[0].mxu0 %v324
  %v1424 = vpop.f32.mrb[0].mxu0
  %v1425 = vadd.f32 %v1385, %v1424
  %v1426 = vpop.f32.mrb[0].mxu0
  %v1427 = vpop.f32.mrb[0].mxu0
  %v1428 = vpop.f32.mrb[0].mxu0
  %1429 = vdwg.mxu0
  %1430 = vst [vmem:[%s3] sm:$0xff] %v1425
  // Predicated region
  $region14: #{wang2020_discriminator_forward.9} parent=0 // pred_check
    _
  $region15: #{wang2020_discriminator_forward.9} parent=0 // pred_check_branch
    %1432 = sbr.rel (0) target = $region17
  $region16: #{wang2020_discriminator_forward.9} parent=0 // pred_region
    _
  $region17: #{wang2020_discriminator_forward.9} parent=0 // pred_fallthru
    _
  // Predicated region
  $region18: #{wang2020_discriminator_forward.9} parent=0 // pred_check
    _
  $region19: #{wang2020_discriminator_forward.9} parent=0 // pred_check_branch
    %1434 = sbr.rel (0) target = $region21
  $region20: #{wang2020_discriminator_forward.9} parent=0 // pred_region
    _
  $region21: #{wang2020_discriminator_forward.9} parent=0 // pred_fallthru
    _

</llo_original>
